<compile_context>
chip_gen: v5e
topology: v5e:2x2
jax: 0.10.0
libtpu: 0.0.40
codegen_flags: <defaults>
</compile_context>

<pallas_src>
import numpy as np
import jax
import jax.numpy as jnp
from jax.experimental import pallas as pl
from jax.experimental.pallas import tpu as pltpu

# ----------------------------- configuration -----------------------------
B = 2                 # batch
H = W = 8             # input resolution
C = 32                # dim
NUM_HEADS = 4
HD = C // NUM_HEADS   # head dim = 8
WS = 4                # window size
SHIFT = 2             # shift size (SW-MSA)
MLP_RATIO = 4.0
HIDDEN = int(C * MLP_RATIO)       # 128
N = WS * WS                       # tokens per window = 16
NW_IMG = (H // WS) * (W // WS)    # windows per image = 4
NW_TOTAL = B * NW_IMG             # 8
T = NW_TOTAL * N                  # 128 total tokens
SCALE = HD ** -0.5
EPS = 1e-5
# Cross-window mask value. Table stays f32; if it is ever moved to bf16 use a
# representable value such as -3e4 instead.
NEG_INF = -1e9


# ------------------------------ Pallas kernel -----------------------------
def swin_block_kernel(x_ref, bm_ref,
                      qkvw_ref, qkvb_ref, pw_ref, pb_ref,
                      f1w_ref, f1b_ref, f2w_ref, f2b_ref,
                      o_ref):
    f32, bf16 = jnp.float32, jnp.bfloat16
    x = x_ref[...]                                          # (T, C) f32

    # ---- LayerNorm 1 (gamma/beta folded into qkv weights in the wrapper) ----
    mu = jnp.mean(x, axis=-1, keepdims=True)
    var = jnp.mean(jnp.square(x - mu), axis=-1, keepdims=True)
    z = (x - mu) * jax.lax.rsqrt(var + EPS)

    # ---- qkv projection: one (128,32)@(32,96) bf16 matmul, f32 accum ----
    # (softmax scale already folded into the q columns of weights/bias)
    qkv = jnp.dot(z.astype(bf16), qkvw_ref[...],
                  preferred_element_type=f32) + qkvb_ref[...]   # (T, 3C) f32
    qkv_bf = qkv.astype(bf16)

    # ---- per-head block-diagonal attention over the full 128-token slab ----
    # Cross-window positions are killed by the -1e9 entries of the resident
    # bias+mask table; the per-head output-projection slice is folded into the
    # loop so no head merge / concatenate is needed.
    acc = jnp.zeros((T, C), f32)
    for h in range(NUM_HEADS):                               # static unroll (4)
        q_h = qkv_bf[:, h * HD:(h + 1) * HD]                 # (T, HD) bf16
        k_h = qkv_bf[:, C + h * HD:C + (h + 1) * HD]         # (T, HD) bf16
        v_h = qkv_bf[:, 2 * C + h * HD:2 * C + (h + 1) * HD]  # (T, HD) bf16

        # (128,8) x (8,128) -> (128,128), NT dot_general (no explicit transpose)
        s = jax.lax.dot_general(q_h, k_h, (((1,), (1,)), ((), ())),
                                preferred_element_type=f32)   # (T, T) f32
        s = s + bm_ref[h]                                     # bias + win mask
        s = s - jnp.max(s, axis=-1, keepdims=True)
        e = jnp.exp(s)
        p = e * pl.reciprocal(jnp.sum(e, axis=-1, keepdims=True), approx=True)

        # fold head slice of the output projection: (p@v_h)@W_h == p@(v_h@W_h)
        vw = jnp.dot(v_h, pw_ref[h], preferred_element_type=f32)      # (T, C)
        acc = acc + jnp.dot(p.astype(bf16), vw.astype(bf16),
                            preferred_element_type=f32)               # (T, C)

    x1 = x + acc + pb_ref[...]                               # residual 1

    # ---- LayerNorm 2 (affine folded into fc1) + MLP + residual ----
    mu2 = jnp.mean(x1, axis=-1, keepdims=True)
    var2 = jnp.mean(jnp.square(x1 - mu2), axis=-1, keepdims=True)
    z2 = (x1 - mu2) * jax.lax.rsqrt(var2 + EPS)
    h1 = jnp.dot(z2.astype(bf16), f1w_ref[...],
                 preferred_element_type=f32) + f1b_ref[...]   # (T, HIDDEN)
    h1 = jax.nn.gelu(h1, approximate=True)                    # tanh form -> EUP
    y = jnp.dot(h1.astype(bf16), f2w_ref[...],
                preferred_element_type=f32) + f2b_ref[...]    # (T, C)

    # C=32 < 128 lanes -> masked store; lane-dense repacking would cost an
    # equivalent relayout at this size (see header comment).
    o_ref[...] = x1 + y


def _const_spec(shape):
    zeros = (0,) * len(shape)
    return pl.BlockSpec(shape, lambda i, _z=zeros: _z)


def swin_block_pallas(x_tokens, bias_mask, kp):
    """x_tokens: (T, C) window-partitioned (pre-shifted) tokens.
    bias_mask: (NUM_HEADS, T, T) block-diagonal rel-pos bias + shift mask.
    kp: kernel params (matmul weights bf16, LN affine + softmax scale folded)."""
    in_specs = [
        _const_spec((T, C)),                            # x tokens
        _const_spec((NUM_HEADS, T, T)),                 # bias + mask (lane-dense)
        _const_spec((C, 3 * C)), _const_spec((1, 3 * C)),     # qkv_w, qkv_b
        _const_spec((NUM_HEADS, HD, C)), _const_spec((1, C)),  # proj_w (split), proj_b
        _const_spec((C, HIDDEN)), _const_spec((1, HIDDEN)),    # fc1_w, fc1_b
        _const_spec((HIDDEN, C)), _const_spec((1, C)),         # fc2_w, fc2_b
    ]
    out_spec = _const_spec((T, C))

    # Single grid step: the whole problem (< 1 MiB) fits VMEM on v5e/v6e/v7x.
    # At realistic Swin sizes (or when batching blocks/layers per call), add a
    # leading "parallel" grid axis over window groups so both v7x TensorCores
    # get work, and re-derive the VMEM budget against 64 MiB per TC.
    return pl.pallas_call(
        swin_block_kernel,
        out_shape=jax.ShapeDtypeStruct((T, C), jnp.float32),
        grid=(1,),
        in_specs=in_specs,
        out_specs=out_spec,
        compiler_params=pltpu.CompilerParams(
            dimension_semantics=("arbitrary",)),
    )(x_tokens, bias_mask,
      kp["qkv_w"], kp["qkv_b"], kp["proj_w"], kp["proj_b"],
      kp["fc1_w"], kp["fc1_b"], kp["fc2_w"], kp["fc2_b"])


# ------------------------------ JAX glue -----------------------------------
def window_partition(x):
    # x: (B, H, W, C) -> (B*nW, WS*WS, C), same order as the PyTorch helper
    x = x.reshape(B, H // WS, WS, W // WS, WS, C)
    x = jnp.transpose(x, (0, 1, 3, 2, 4, 5))
    return x.reshape(-1, WS * WS, C)


def window_reverse(windows):
    # (B*nW, WS*WS, C) -> (B, H, W, C)
    x = windows.reshape(B, H // WS, W // WS, WS, WS, C)
    x = jnp.transpose(x, (0, 1, 3, 2, 4, 5))
    return x.reshape(B, H, W, C)


def build_dense_bias_mask(rel_bias, attn_mask):
    """Build the lane-dense (NUM_HEADS, T, T) block-diagonal table:
    rel-pos bias + SW-MSA shift mask on the diagonal window blocks, NEG_INF on
    every cross-window entry (so full-row softmax == per-window softmax)."""
    mask_t = jnp.tile(attn_mask, (B, 1, 1))                  # (NW_TOTAL, N, N)
    comb = rel_bias[:, None] + mask_t[None]                  # (heads, NW, N, N)
    wi = jnp.arange(T) // N                                  # window of token i
    li = jnp.arange(T) % N                                   # in-window index
    table = comb[:, wi[:, None], li[:, None], li[None, :]]   # (heads, T, T)
    same = wi[:, None] == wi[None, :]
    return jnp.where(same[None], table, NEG_INF).astype(jnp.float32)


def prepare_kernel_params(p):
    """Fold LN affines + softmax scale into the matmul weights; cast MXU
    operands to bf16; split proj_w per head for clean first-axis indexing."""
    g1, b1 = p["g1"][0], p["b1"][0]
    g2, b2 = p["g2"][0], p["b2"][0]
    # LN1 affine + softmax scale folded into qkv projection
    col_scale = jnp.concatenate(
        [jnp.full((C,), SCALE, jnp.float32), jnp.ones((2 * C,), jnp.float32)])
    qkv_w = p["qkv_w"] * g1[:, None] * col_scale[None, :]
    qkv_b = (b1 @ p["qkv_w"] + p["qkv_b"][0]) * col_scale
    # LN2 affine folded into fc1
    fc1_w = p["fc1_w"] * g2[:, None]
    fc1_b = b2 @ p["fc1_w"] + p["fc1_b"][0]
    return {
        "qkv_w": qkv_w.astype(jnp.bfloat16),
        "qkv_b": qkv_b.reshape(1, 3 * C),
        "proj_w": p["proj_w"].reshape(NUM_HEADS, HD, C).astype(jnp.bfloat16),
        "proj_b": p["proj_b"],
        "fc1_w": fc1_w.astype(jnp.bfloat16),
        "fc1_b": fc1_b.reshape(1, HIDDEN),
        "fc2_w": p["fc2_w"].astype(jnp.bfloat16),
        "fc2_b": p["fc2_b"],
    }


def swin_block_forward(x, attn_mask, rel_bias, params):
    # x: (B, L, C)
    xr = x.reshape(B, H, W, C)
    shifted = jnp.roll(xr, shift=(-SHIFT, -SHIFT), axis=(1, 2)) \
        if SHIFT > 0 else xr
    xw = window_partition(shifted).reshape(T, C)              # (128, 32)

    bias_mask = build_dense_bias_mask(rel_bias, attn_mask)    # (4, 128, 128)
    kp = prepare_kernel_params(params)

    yw = swin_block_pallas(xw, bias_mask, kp)                 # (T, C)

    shifted_y = window_reverse(yw.reshape(NW_TOTAL, N, C))
    y = jnp.roll(shifted_y, shift=(SHIFT, SHIFT), axis=(1, 2)) \
        if SHIFT > 0 else shifted_y
    return y.reshape(B, H * W, C)


# --------------------- mask / relative-position-bias setup ------------------
def build_attn_mask():
    if SHIFT == 0:
        return np.zeros((NW_IMG, N, N), np.float32)
    img_mask = np.zeros((1, H, W, 1), np.float32)
    h_slices = (slice(0, -WS), slice(-WS, -SHIFT), slice(-SHIFT, None))
    w_slices = (slice(0, -WS), slice(-WS, -SHIFT), slice(-SHIFT, None))
    cnt = 0
    for hs in h_slices:
        for ws_ in w_slices:
            img_mask[:, hs, ws_, :] = cnt
            cnt += 1
    m = img_mask.reshape(1, H // WS, WS, W // WS, WS, 1)
    m = m.transpose(0, 1, 3, 2, 4, 5).reshape(-1, WS * WS)      # (nW, N)
    am = m[:, None, :] - m[:, :, None]                          # (nW, N, N)
    am = np.where(am != 0, -100.0, 0.0).astype(np.float32)
    return am


def build_rel_bias(table):
    # relative position index (standard Swin computation)
    coords = np.stack(np.meshgrid(np.arange(WS), np.arange(WS), indexing="ij"))
    coords_flat = coords.reshape(2, -1)
    rel = coords_flat[:, :, None] - coords_flat[:, None, :]     # (2, N, N)
    rel = rel.transpose(1, 2, 0).astype(np.int64)
    rel[:, :, 0] += WS - 1
    rel[:, :, 1] += WS - 1
    rel[:, :, 0] *= 2 * WS - 1
    idx = rel.sum(-1)                                           # (N, N)
    bias = np.asarray(table)[idx.reshape(-1)].reshape(N, N, NUM_HEADS)
    return jnp.asarray(bias.transpose(2, 0, 1), jnp.float32)    # (heads, N, N)


# ------------------------ pure-JAX reference (for checking) -----------------
def reference_forward(x, attn_mask, rel_bias, params):
    def ln(v, g, b):
        mu = jnp.mean(v, -1, keepdims=True)
        var = jnp.mean((v - mu) ** 2, -1, keepdims=True)
        return (v - mu) * jax.lax.rsqrt(var + EPS) * g + b

    shortcut = x
    xn = ln(x, params["g1"][0], params["b1"][0])
    xs = xn.reshape(B, H, W, C)
    xs = jnp.roll(xs, (-SHIFT, -SHIFT), (1, 2)) if SHIFT > 0 else xs
    xw = window_partition(xs)                                       # (nWt, N, C)
    qkv = xw @ params["qkv_w"] + params["qkv_b"][0]
    qkv = qkv.reshape(NW_TOTAL, N, 3, NUM_HEADS, HD).transpose(2, 0, 3, 1, 4)
    q, k, v = qkv[0] * SCALE, qkv[1], qkv[2]
    attn = jnp.einsum("whnd,whmd->whnm", q, k) + rel_bias[None]
    attn = attn + attn_mask[jnp.arange(NW_TOTAL) % NW_IMG][:, None]
    attn = jax.nn.softmax(attn, axis=-1)
    o = jnp.einsum("whnm,whmd->whnd", attn, v).transpose(0, 2, 1, 3)
    o = o.reshape(NW_TOTAL, N, C)
    o = o @ params["proj_w"] + params["proj_b"][0]
    o = window_reverse(o)
    o = jnp.roll(o, (SHIFT, SHIFT), (1, 2)) if SHIFT > 0 else o
    x1 = shortcut + o.reshape(B, H * W, C)
    xn2 = ln(x1, params["g2"][0], params["b2"][0])
    h1 = jax.nn.gelu(xn2 @ params["fc1_w"] + params["fc1_b"][0],
                     approximate=False)                              # erf (PyTorch)
    return x1 + (h1 @ params["fc2_w"] + params["fc2_b"][0])


# --------------------------------- main --------------------------------------
if __name__ == "__main__":
    key = jax.random.PRNGKey(0)
    keys = jax.random.split(key, 14)

    # Non-trivial LayerNorm gamma/beta so that the weight-folding path is
    # actually exercised by the check.
    params = {
        "g1": 1.0 + 0.1 * jax.random.normal(keys[0], (1, C), jnp.float32),
        "b1": 0.1 * jax.random.normal(keys[1], (1, C), jnp.float32),
        "qkv_w": jax.random.normal(keys[2], (C, 3 * C), jnp.float32) * 0.02,
        "qkv_b": jax.random.normal(keys[3], (1, 3 * C), jnp.float32) * 0.02,
        "proj_w": jax.random.normal(keys[4], (C, C), jnp.float32) * 0.02,
        "proj_b": jax.random.normal(keys[5], (1, C), jnp.float32) * 0.02,
        "g2": 1.0 + 0.1 * jax.random.normal(keys[6], (1, C), jnp.float32),
        "b2": 0.1 * jax.random.normal(keys[7], (1, C), jnp.float32),
        "fc1_w": jax.random.normal(keys[8], (C, HIDDEN), jnp.float32) * 0.02,
        "fc1_b": jax.random.normal(keys[9], (1, HIDDEN), jnp.float32) * 0.02,
        "fc2_w": jax.random.normal(keys[10], (HIDDEN, C), jnp.float32) * 0.02,
        "fc2_b": jax.random.normal(keys[11], (1, C), jnp.float32) * 0.02,
    }
    rel_table = jax.random.normal(keys[12], ((2 * WS - 1) ** 2, NUM_HEADS),
                                  jnp.float32) * 0.02
    rel_bias = build_rel_bias(rel_table)
    attn_mask = jnp.asarray(build_attn_mask())

    x = jax.random.normal(keys[13], (B, H * W, C), jnp.float32)

    out = jax.jit(swin_block_forward)(x, attn_mask, rel_bias, params)
    out = jax.block_until_ready(out)

    ref = reference_forward(x, attn_mask, rel_bias, params)
    assert out.shape == (B, H * W, C)
    # bf16 MXU inputs (f32 accumulation), approx reciprocal and tanh GELU
    # -> loosened tolerance vs. the pure-f32 erf reference.
    np.testing.assert_allclose(np.asarray(out), np.asarray(ref),
                               rtol=1e-2, atol=1e-2)
    print("KERNEL_OK")
</pallas_src>

<mosaic_0001>
module attributes {stable_mosaic.version = 11 : i64} {
  func.func @swin_block_kernel(%arg0: i32, %arg1: memref<128x32xf32, #tpu.memory_space<vmem>>, %arg2: memref<4x128x128xf32, #tpu.memory_space<vmem>>, %arg3: memref<32x96xbf16, #tpu.memory_space<vmem>>, %arg4: memref<1x96xf32, #tpu.memory_space<vmem>>, %arg5: memref<4x8x32xbf16, #tpu.memory_space<vmem>>, %arg6: memref<1x32xf32, #tpu.memory_space<vmem>>, %arg7: memref<32x128xbf16, #tpu.memory_space<vmem>>, %arg8: memref<1x128xf32, #tpu.memory_space<vmem>>, %arg9: memref<128x32xbf16, #tpu.memory_space<vmem>>, %arg10: memref<1x32xf32, #tpu.memory_space<vmem>>, %arg11: memref<128x32xf32, #tpu.memory_space<vmem>>) attributes {dimension_semantics = [#tpu.dimension_semantics<arbitrary>], iteration_bounds = array<i64: 1>, scalar_prefetch = 0 : i64, scratch_operands = 0 : i64, tpu.core_type = #tpu.core_type<tc>, window_params = [{pipeline_mode = #tpu.pipeline_mode<synchronous>, transform_indices = @transform_0, window_bounds = array<i64: 128, 32>}, {pipeline_mode = #tpu.pipeline_mode<synchronous>, transform_indices = @transform_1, window_bounds = array<i64: 4, 128, 128>}, {pipeline_mode = #tpu.pipeline_mode<synchronous>, transform_indices = @transform_2, window_bounds = array<i64: 32, 96>}, {pipeline_mode = #tpu.pipeline_mode<synchronous>, transform_indices = @transform_3, window_bounds = array<i64: 1, 96>}, {pipeline_mode = #tpu.pipeline_mode<synchronous>, transform_indices = @transform_4, window_bounds = array<i64: 4, 8, 32>}, {pipeline_mode = #tpu.pipeline_mode<synchronous>, transform_indices = @transform_5, window_bounds = array<i64: 1, 32>}, {pipeline_mode = #tpu.pipeline_mode<synchronous>, transform_indices = @transform_6, window_bounds = array<i64: 32, 128>}, {pipeline_mode = #tpu.pipeline_mode<synchronous>, transform_indices = @transform_7, window_bounds = array<i64: 1, 128>}, {pipeline_mode = #tpu.pipeline_mode<synchronous>, transform_indices = @transform_8, window_bounds = array<i64: 128, 32>}, {pipeline_mode = #tpu.pipeline_mode<synchronous>, transform_indices = @transform_9, window_bounds = array<i64: 1, 32>}, {pipeline_mode = #tpu.pipeline_mode<synchronous>, transform_indices = @transform_10, window_bounds = array<i64: 128, 32>}]} {
    %c0 = arith.constant 0 : index
    %c0_0 = arith.constant 0 : index
    %0 = vector.load %arg1[%c0, %c0_0] : memref<128x32xf32, #tpu.memory_space<vmem>>, vector<128x32xf32>
    %cst = arith.constant dense<0.000000e+00> : vector<128xf32>
    %1 = vector.multi_reduction <add>, %0, %cst [1] : vector<128x32xf32> to vector<128xf32>
    %2 = vector.shape_cast %1 : vector<128xf32> to vector<128x1xf32>
    %cst_1 = arith.constant 3.200000e+01 : f32
    %3 = vector.broadcast %cst_1 : f32 to vector<128x1xf32>
    %4 = arith.divf %2, %3 : vector<128x1xf32>
    %5 = vector.broadcast %4 : vector<128x1xf32> to vector<128x32xf32>
    %6 = arith.subf %0, %5 : vector<128x32xf32>
    %7 = arith.mulf %6, %6 : vector<128x32xf32>
    %cst_2 = arith.constant dense<0.000000e+00> : vector<128xf32>
    %8 = vector.multi_reduction <add>, %7, %cst_2 [1] : vector<128x32xf32> to vector<128xf32>
    %9 = vector.shape_cast %8 : vector<128xf32> to vector<128x1xf32>
    %cst_3 = arith.constant 3.200000e+01 : f32
    %10 = vector.broadcast %cst_3 : f32 to vector<128x1xf32>
    %11 = arith.divf %9, %10 : vector<128x1xf32>
    %12 = vector.broadcast %4 : vector<128x1xf32> to vector<128x32xf32>
    %13 = arith.subf %0, %12 : vector<128x32xf32>
    %cst_4 = arith.constant 9.99999974E-6 : f32
    %14 = vector.broadcast %cst_4 : f32 to vector<128x1xf32>
    %15 = arith.addf %11, %14 : vector<128x1xf32>
    %16 = math.rsqrt %15 : vector<128x1xf32>
    %17 = vector.broadcast %16 : vector<128x1xf32> to vector<128x32xf32>
    %18 = arith.mulf %13, %17 : vector<128x32xf32>
    %19 = arith.truncf %18 : vector<128x32xf32> to vector<128x32xbf16>
    %c0_5 = arith.constant 0 : index
    %c0_6 = arith.constant 0 : index
    %20 = vector.load %arg3[%c0_5, %c0_6] : memref<32x96xbf16, #tpu.memory_space<vmem>>, vector<32x96xbf16>
    %cst_7 = arith.constant dense<0.000000e+00> : vector<128x96xf32>
    %21 = tpu.matmul %19, %20, %cst_7 {dimension_numbers = #tpu.dot_dimension_numbers<[1], [0], [0], [1], [0, 0, 1, 1], [], []>} : vector<128x32xbf16>, vector<32x96xbf16>, vector<128x96xf32> -> vector<128x96xf32>
    %c0_8 = arith.constant 0 : index
    %c0_9 = arith.constant 0 : index
    %22 = vector.load %arg4[%c0_8, %c0_9] : memref<1x96xf32, #tpu.memory_space<vmem>>, vector<1x96xf32>
    %23 = vector.broadcast %22 : vector<1x96xf32> to vector<128x96xf32>
    %24 = arith.addf %21, %23 : vector<128x96xf32>
    %25 = arith.truncf %24 : vector<128x96xf32> to vector<128x96xbf16>
    %cst_10 = arith.constant 0.000000e+00 : f32
    %26 = vector.broadcast %cst_10 : f32 to vector<128x32xf32>
    %27 = vector.extract_strided_slice %25 {offsets = [0, 0], sizes = [128, 8], strides = [1, 1]} : vector<128x96xbf16> to vector<128x8xbf16>
    %28 = vector.extract_strided_slice %25 {offsets = [0, 32], sizes = [128, 8], strides = [1, 1]} : vector<128x96xbf16> to vector<128x8xbf16>
    %29 = vector.extract_strided_slice %25 {offsets = [0, 64], sizes = [128, 8], strides = [1, 1]} : vector<128x96xbf16> to vector<128x8xbf16>
    %cst_11 = arith.constant dense<0.000000e+00> : vector<128x128xf32>
    %30 = tpu.matmul %27, %28, %cst_11 {dimension_numbers = #tpu.dot_dimension_numbers<[1], [1], [0], [0], [0, 0, 1, 0], [], []>} : vector<128x8xbf16>, vector<128x8xbf16>, vector<128x128xf32> -> vector<128x128xf32>
    %c0_12 = arith.constant 0 : index
    %c0_13 = arith.constant 0 : index
    %c0_14 = arith.constant 0 : index
    %31 = vector.load %arg2[%c0_12, %c0_13, %c0_14] : memref<4x128x128xf32, #tpu.memory_space<vmem>>, vector<1x128x128xf32>
    %32 = vector.shape_cast %31 : vector<1x128x128xf32> to vector<128x128xf32>
    %33 = arith.addf %30, %32 : vector<128x128xf32>
    %cst_15 = arith.constant dense<0xFF800000> : vector<128xf32>
    %34 = vector.multi_reduction <maximumf>, %33, %cst_15 [1] : vector<128x128xf32> to vector<128xf32>
    %35 = vector.shape_cast %34 : vector<128xf32> to vector<128x1xf32>
    %36 = vector.broadcast %35 : vector<128x1xf32> to vector<128x128xf32>
    %37 = arith.subf %33, %36 : vector<128x128xf32>
    %38 = math.exp %37 : vector<128x128xf32>
    %cst_16 = arith.constant dense<0.000000e+00> : vector<128xf32>
    %39 = vector.multi_reduction <add>, %38, %cst_16 [1] : vector<128x128xf32> to vector<128xf32>
    %40 = vector.shape_cast %39 : vector<128xf32> to vector<128x1xf32>
    %41 = tpu.reciprocal %40 {approx = true} : vector<128x1xf32> -> vector<128x1xf32>
    %42 = vector.broadcast %41 : vector<128x1xf32> to vector<128x128xf32>
    %43 = arith.mulf %38, %42 : vector<128x128xf32>
    %c0_17 = arith.constant 0 : index
    %c0_18 = arith.constant 0 : index
    %c0_19 = arith.constant 0 : index
    %44 = vector.load %arg5[%c0_17, %c0_18, %c0_19] : memref<4x8x32xbf16, #tpu.memory_space<vmem>>, vector<1x8x32xbf16>
    %45 = vector.shape_cast %44 : vector<1x8x32xbf16> to vector<8x32xbf16>
    %cst_20 = arith.constant dense<0.000000e+00> : vector<128x32xf32>
    %46 = tpu.matmul %29, %45, %cst_20 {dimension_numbers = #tpu.dot_dimension_numbers<[1], [0], [0], [1], [0, 0, 1, 1], [], []>} : vector<128x8xbf16>, vector<8x32xbf16>, vector<128x32xf32> -> vector<128x32xf32>
    %47 = arith.truncf %43 : vector<128x128xf32> to vector<128x128xbf16>
    %48 = arith.truncf %46 : vector<128x32xf32> to vector<128x32xbf16>
    %cst_21 = arith.constant dense<0.000000e+00> : vector<128x32xf32>
    %49 = tpu.matmul %47, %48, %cst_21 {dimension_numbers = #tpu.dot_dimension_numbers<[1], [0], [0], [1], [0, 0, 1, 1], [], []>} : vector<128x128xbf16>, vector<128x32xbf16>, vector<128x32xf32> -> vector<128x32xf32>
    %50 = arith.addf %26, %49 : vector<128x32xf32>
    %51 = vector.extract_strided_slice %25 {offsets = [0, 8], sizes = [128, 8], strides = [1, 1]} : vector<128x96xbf16> to vector<128x8xbf16>
    %52 = vector.extract_strided_slice %25 {offsets = [0, 40], sizes = [128, 8], strides = [1, 1]} : vector<128x96xbf16> to vector<128x8xbf16>
    %53 = vector.extract_strided_slice %25 {offsets = [0, 72], sizes = [128, 8], strides = [1, 1]} : vector<128x96xbf16> to vector<128x8xbf16>
    %cst_22 = arith.constant dense<0.000000e+00> : vector<128x128xf32>
    %54 = tpu.matmul %51, %52, %cst_22 {dimension_numbers = #tpu.dot_dimension_numbers<[1], [1], [0], [0], [0, 0, 1, 0], [], []>} : vector<128x8xbf16>, vector<128x8xbf16>, vector<128x128xf32> -> vector<128x128xf32>
    %c1 = arith.constant 1 : index
    %c0_23 = arith.constant 0 : index
    %c0_24 = arith.constant 0 : index
    %55 = vector.load %arg2[%c1, %c0_23, %c0_24] : memref<4x128x128xf32, #tpu.memory_space<vmem>>, vector<1x128x128xf32>
    %56 = vector.shape_cast %55 : vector<1x128x128xf32> to vector<128x128xf32>
    %57 = arith.addf %54, %56 : vector<128x128xf32>
    %cst_25 = arith.constant dense<0xFF800000> : vector<128xf32>
    %58 = vector.multi_reduction <maximumf>, %57, %cst_25 [1] : vector<128x128xf32> to vector<128xf32>
    %59 = vector.shape_cast %58 : vector<128xf32> to vector<128x1xf32>
    %60 = vector.broadcast %59 : vector<128x1xf32> to vector<128x128xf32>
    %61 = arith.subf %57, %60 : vector<128x128xf32>
    %62 = math.exp %61 : vector<128x128xf32>
    %cst_26 = arith.constant dense<0.000000e+00> : vector<128xf32>
    %63 = vector.multi_reduction <add>, %62, %cst_26 [1] : vector<128x128xf32> to vector<128xf32>
    %64 = vector.shape_cast %63 : vector<128xf32> to vector<128x1xf32>
    %65 = tpu.reciprocal %64 {approx = true} : vector<128x1xf32> -> vector<128x1xf32>
    %66 = vector.broadcast %65 : vector<128x1xf32> to vector<128x128xf32>
    %67 = arith.mulf %62, %66 : vector<128x128xf32>
    %c1_27 = arith.constant 1 : index
    %c0_28 = arith.constant 0 : index
    %c0_29 = arith.constant 0 : index
    %68 = vector.load %arg5[%c1_27, %c0_28, %c0_29] : memref<4x8x32xbf16, #tpu.memory_space<vmem>>, vector<1x8x32xbf16>
    %69 = vector.shape_cast %68 : vector<1x8x32xbf16> to vector<8x32xbf16>
    %cst_30 = arith.constant dense<0.000000e+00> : vector<128x32xf32>
    %70 = tpu.matmul %53, %69, %cst_30 {dimension_numbers = #tpu.dot_dimension_numbers<[1], [0], [0], [1], [0, 0, 1, 1], [], []>} : vector<128x8xbf16>, vector<8x32xbf16>, vector<128x32xf32> -> vector<128x32xf32>
    %71 = arith.truncf %67 : vector<128x128xf32> to vector<128x128xbf16>
    %72 = arith.truncf %70 : vector<128x32xf32> to vector<128x32xbf16>
    %cst_31 = arith.constant dense<0.000000e+00> : vector<128x32xf32>
    %73 = tpu.matmul %71, %72, %cst_31 {dimension_numbers = #tpu.dot_dimension_numbers<[1], [0], [0], [1], [0, 0, 1, 1], [], []>} : vector<128x128xbf16>, vector<128x32xbf16>, vector<128x32xf32> -> vector<128x32xf32>
    %74 = arith.addf %50, %73 : vector<128x32xf32>
    %75 = vector.extract_strided_slice %25 {offsets = [0, 16], sizes = [128, 8], strides = [1, 1]} : vector<128x96xbf16> to vector<128x8xbf16>
    %76 = vector.extract_strided_slice %25 {offsets = [0, 48], sizes = [128, 8], strides = [1, 1]} : vector<128x96xbf16> to vector<128x8xbf16>
    %77 = vector.extract_strided_slice %25 {offsets = [0, 80], sizes = [128, 8], strides = [1, 1]} : vector<128x96xbf16> to vector<128x8xbf16>
    %cst_32 = arith.constant dense<0.000000e+00> : vector<128x128xf32>
    %78 = tpu.matmul %75, %76, %cst_32 {dimension_numbers = #tpu.dot_dimension_numbers<[1], [1], [0], [0], [0, 0, 1, 0], [], []>} : vector<128x8xbf16>, vector<128x8xbf16>, vector<128x128xf32> -> vector<128x128xf32>
    %c2 = arith.constant 2 : index
    %c0_33 = arith.constant 0 : index
    %c0_34 = arith.constant 0 : index
    %79 = vector.load %arg2[%c2, %c0_33, %c0_34] : memref<4x128x128xf32, #tpu.memory_space<vmem>>, vector<1x128x128xf32>
    %80 = vector.shape_cast %79 : vector<1x128x128xf32> to vector<128x128xf32>
    %81 = arith.addf %78, %80 : vector<128x128xf32>
    %cst_35 = arith.constant dense<0xFF800000> : vector<128xf32>
    %82 = vector.multi_reduction <maximumf>, %81, %cst_35 [1] : vector<128x128xf32> to vector<128xf32>
    %83 = vector.shape_cast %82 : vector<128xf32> to vector<128x1xf32>
    %84 = vector.broadcast %83 : vector<128x1xf32> to vector<128x128xf32>
    %85 = arith.subf %81, %84 : vector<128x128xf32>
    %86 = math.exp %85 : vector<128x128xf32>
    %cst_36 = arith.constant dense<0.000000e+00> : vector<128xf32>
    %87 = vector.multi_reduction <add>, %86, %cst_36 [1] : vector<128x128xf32> to vector<128xf32>
    %88 = vector.shape_cast %87 : vector<128xf32> to vector<128x1xf32>
    %89 = tpu.reciprocal %88 {approx = true} : vector<128x1xf32> -> vector<128x1xf32>
    %90 = vector.broadcast %89 : vector<128x1xf32> to vector<128x128xf32>
    %91 = arith.mulf %86, %90 : vector<128x128xf32>
    %c2_37 = arith.constant 2 : index
    %c0_38 = arith.constant 0 : index
    %c0_39 = arith.constant 0 : index
    %92 = vector.load %arg5[%c2_37, %c0_38, %c0_39] : memref<4x8x32xbf16, #tpu.memory_space<vmem>>, vector<1x8x32xbf16>
    %93 = vector.shape_cast %92 : vector<1x8x32xbf16> to vector<8x32xbf16>
    %cst_40 = arith.constant dense<0.000000e+00> : vector<128x32xf32>
    %94 = tpu.matmul %77, %93, %cst_40 {dimension_numbers = #tpu.dot_dimension_numbers<[1], [0], [0], [1], [0, 0, 1, 1], [], []>} : vector<128x8xbf16>, vector<8x32xbf16>, vector<128x32xf32> -> vector<128x32xf32>
    %95 = arith.truncf %91 : vector<128x128xf32> to vector<128x128xbf16>
    %96 = arith.truncf %94 : vector<128x32xf32> to vector<128x32xbf16>
    %cst_41 = arith.constant dense<0.000000e+00> : vector<128x32xf32>
    %97 = tpu.matmul %95, %96, %cst_41 {dimension_numbers = #tpu.dot_dimension_numbers<[1], [0], [0], [1], [0, 0, 1, 1], [], []>} : vector<128x128xbf16>, vector<128x32xbf16>, vector<128x32xf32> -> vector<128x32xf32>
    %98 = arith.addf %74, %97 : vector<128x32xf32>
    %99 = vector.extract_strided_slice %25 {offsets = [0, 24], sizes = [128, 8], strides = [1, 1]} : vector<128x96xbf16> to vector<128x8xbf16>
    %100 = vector.extract_strided_slice %25 {offsets = [0, 56], sizes = [128, 8], strides = [1, 1]} : vector<128x96xbf16> to vector<128x8xbf16>
    %101 = vector.extract_strided_slice %25 {offsets = [0, 88], sizes = [128, 8], strides = [1, 1]} : vector<128x96xbf16> to vector<128x8xbf16>
    %cst_42 = arith.constant dense<0.000000e+00> : vector<128x128xf32>
    %102 = tpu.matmul %99, %100, %cst_42 {dimension_numbers = #tpu.dot_dimension_numbers<[1], [1], [0], [0], [0, 0, 1, 0], [], []>} : vector<128x8xbf16>, vector<128x8xbf16>, vector<128x128xf32> -> vector<128x128xf32>
    %c3 = arith.constant 3 : index
    %c0_43 = arith.constant 0 : index
    %c0_44 = arith.constant 0 : index
    %103 = vector.load %arg2[%c3, %c0_43, %c0_44] : memref<4x128x128xf32, #tpu.memory_space<vmem>>, vector<1x128x128xf32>
    %104 = vector.shape_cast %103 : vector<1x128x128xf32> to vector<128x128xf32>
    %105 = arith.addf %102, %104 : vector<128x128xf32>
    %cst_45 = arith.constant dense<0xFF800000> : vector<128xf32>
    %106 = vector.multi_reduction <maximumf>, %105, %cst_45 [1] : vector<128x128xf32> to vector<128xf32>
    %107 = vector.shape_cast %106 : vector<128xf32> to vector<128x1xf32>
    %108 = vector.broadcast %107 : vector<128x1xf32> to vector<128x128xf32>
    %109 = arith.subf %105, %108 : vector<128x128xf32>
    %110 = math.exp %109 : vector<128x128xf32>
    %cst_46 = arith.constant dense<0.000000e+00> : vector<128xf32>
    %111 = vector.multi_reduction <add>, %110, %cst_46 [1] : vector<128x128xf32> to vector<128xf32>
    %112 = vector.shape_cast %111 : vector<128xf32> to vector<128x1xf32>
    %113 = tpu.reciprocal %112 {approx = true} : vector<128x1xf32> -> vector<128x1xf32>
    %114 = vector.broadcast %113 : vector<128x1xf32> to vector<128x128xf32>
    %115 = arith.mulf %110, %114 : vector<128x128xf32>
    %c3_47 = arith.constant 3 : index
    %c0_48 = arith.constant 0 : index
    %c0_49 = arith.constant 0 : index
    %116 = vector.load %arg5[%c3_47, %c0_48, %c0_49] : memref<4x8x32xbf16, #tpu.memory_space<vmem>>, vector<1x8x32xbf16>
    %117 = vector.shape_cast %116 : vector<1x8x32xbf16> to vector<8x32xbf16>
    %cst_50 = arith.constant dense<0.000000e+00> : vector<128x32xf32>
    %118 = tpu.matmul %101, %117, %cst_50 {dimension_numbers = #tpu.dot_dimension_numbers<[1], [0], [0], [1], [0, 0, 1, 1], [], []>} : vector<128x8xbf16>, vector<8x32xbf16>, vector<128x32xf32> -> vector<128x32xf32>
    %119 = arith.truncf %115 : vector<128x128xf32> to vector<128x128xbf16>
    %120 = arith.truncf %118 : vector<128x32xf32> to vector<128x32xbf16>
    %cst_51 = arith.constant dense<0.000000e+00> : vector<128x32xf32>
    %121 = tpu.matmul %119, %120, %cst_51 {dimension_numbers = #tpu.dot_dimension_numbers<[1], [0], [0], [1], [0, 0, 1, 1], [], []>} : vector<128x128xbf16>, vector<128x32xbf16>, vector<128x32xf32> -> vector<128x32xf32>
    %122 = arith.addf %98, %121 : vector<128x32xf32>
    %123 = arith.addf %0, %122 : vector<128x32xf32>
    %c0_52 = arith.constant 0 : index
    %c0_53 = arith.constant 0 : index
    %124 = vector.load %arg6[%c0_52, %c0_53] : memref<1x32xf32, #tpu.memory_space<vmem>>, vector<1x32xf32>
    %125 = vector.broadcast %124 : vector<1x32xf32> to vector<128x32xf32>
    %126 = arith.addf %123, %125 : vector<128x32xf32>
    %cst_54 = arith.constant dense<0.000000e+00> : vector<128xf32>
    %127 = vector.multi_reduction <add>, %126, %cst_54 [1] : vector<128x32xf32> to vector<128xf32>
    %128 = vector.shape_cast %127 : vector<128xf32> to vector<128x1xf32>
    %cst_55 = arith.constant 3.200000e+01 : f32
    %129 = vector.broadcast %cst_55 : f32 to vector<128x1xf32>
    %130 = arith.divf %128, %129 : vector<128x1xf32>
    %131 = vector.broadcast %130 : vector<128x1xf32> to vector<128x32xf32>
    %132 = arith.subf %126, %131 : vector<128x32xf32>
    %133 = arith.mulf %132, %132 : vector<128x32xf32>
    %cst_56 = arith.constant dense<0.000000e+00> : vector<128xf32>
    %134 = vector.multi_reduction <add>, %133, %cst_56 [1] : vector<128x32xf32> to vector<128xf32>
    %135 = vector.shape_cast %134 : vector<128xf32> to vector<128x1xf32>
    %cst_57 = arith.constant 3.200000e+01 : f32
    %136 = vector.broadcast %cst_57 : f32 to vector<128x1xf32>
    %137 = arith.divf %135, %136 : vector<128x1xf32>
    %138 = vector.broadcast %130 : vector<128x1xf32> to vector<128x32xf32>
    %139 = arith.subf %126, %138 : vector<128x32xf32>
    %cst_58 = arith.constant 9.99999974E-6 : f32
    %140 = vector.broadcast %cst_58 : f32 to vector<128x1xf32>
    %141 = arith.addf %137, %140 : vector<128x1xf32>
    %142 = math.rsqrt %141 : vector<128x1xf32>
    %143 = vector.broadcast %142 : vector<128x1xf32> to vector<128x32xf32>
    %144 = arith.mulf %139, %143 : vector<128x32xf32>
    %145 = arith.truncf %144 : vector<128x32xf32> to vector<128x32xbf16>
    %c0_59 = arith.constant 0 : index
    %c0_60 = arith.constant 0 : index
    %146 = vector.load %arg7[%c0_59, %c0_60] : memref<32x128xbf16, #tpu.memory_space<vmem>>, vector<32x128xbf16>
    %cst_61 = arith.constant dense<0.000000e+00> : vector<128x128xf32>
    %147 = tpu.matmul %145, %146, %cst_61 {dimension_numbers = #tpu.dot_dimension_numbers<[1], [0], [0], [1], [0, 0, 1, 1], [], []>} : vector<128x32xbf16>, vector<32x128xbf16>, vector<128x128xf32> -> vector<128x128xf32>
    %c0_62 = arith.constant 0 : index
    %c0_63 = arith.constant 0 : index
    %148 = vector.load %arg8[%c0_62, %c0_63] : memref<1x128xf32, #tpu.memory_space<vmem>>, vector<1x128xf32>
    %149 = vector.broadcast %148 : vector<1x128xf32> to vector<128x128xf32>
    %150 = arith.addf %147, %149 : vector<128x128xf32>
    %151 = arith.mulf %150, %150 : vector<128x128xf32>
    %152 = arith.mulf %150, %151 : vector<128x128xf32>
    %cst_64 = arith.constant 4.471500e-02 : f32
    %153 = vector.broadcast %cst_64 : f32 to vector<128x128xf32>
    %154 = arith.mulf %153, %152 : vector<128x128xf32>
    %155 = arith.addf %150, %154 : vector<128x128xf32>
    %cst_65 = arith.constant 0.797884583 : f32
    %156 = vector.broadcast %cst_65 : f32 to vector<128x128xf32>
    %157 = arith.mulf %156, %155 : vector<128x128xf32>
    %158 = math.tanh %157 : vector<128x128xf32>
    %cst_66 = arith.constant 1.000000e+00 : f32
    %159 = vector.broadcast %cst_66 : f32 to vector<128x128xf32>
    %160 = arith.addf %159, %158 : vector<128x128xf32>
    %cst_67 = arith.constant 5.000000e-01 : f32
    %161 = vector.broadcast %cst_67 : f32 to vector<128x128xf32>
    %162 = arith.mulf %161, %160 : vector<128x128xf32>
    %163 = arith.mulf %150, %162 : vector<128x128xf32>
    %164 = arith.truncf %163 : vector<128x128xf32> to vector<128x128xbf16>
    %c0_68 = arith.constant 0 : index
    %c0_69 = arith.constant 0 : index
    %165 = vector.load %arg9[%c0_68, %c0_69] : memref<128x32xbf16, #tpu.memory_space<vmem>>, vector<128x32xbf16>
    %cst_70 = arith.constant dense<0.000000e+00> : vector<128x32xf32>
    %166 = tpu.matmul %164, %165, %cst_70 {dimension_numbers = #tpu.dot_dimension_numbers<[1], [0], [0], [1], [0, 0, 1, 1], [], []>} : vector<128x128xbf16>, vector<128x32xbf16>, vector<128x32xf32> -> vector<128x32xf32>
    %c0_71 = arith.constant 0 : index
    %c0_72 = arith.constant 0 : index
    %167 = vector.load %arg10[%c0_71, %c0_72] : memref<1x32xf32, #tpu.memory_space<vmem>>, vector<1x32xf32>
    %168 = vector.broadcast %167 : vector<1x32xf32> to vector<128x32xf32>
    %169 = arith.addf %166, %168 : vector<128x32xf32>
    %170 = arith.addf %126, %169 : vector<128x32xf32>
    %c0_73 = arith.constant 0 : index
    %c0_74 = arith.constant 0 : index
    %171 = vector.load %arg11[%c0_73, %c0_74] : memref<128x32xf32, #tpu.memory_space<vmem>>, vector<128x32xf32>
    tpu.vector_store %arg11[%c0_73, %c0_74], %170 {strides = array<i32>} : memref<128x32xf32, #tpu.memory_space<vmem>>, vector<128x32xf32>,
    return
  }
  func.func @transform_0(%arg0: i32) -> (i32, i32) {
    %c0_i32 = arith.constant 0 : i32
    %c0_i32_0 = arith.constant 0 : i32
    %c0_i32_1 = arith.constant 0 : i32
    return %c0_i32, %c0_i32_0 : i32, i32
  }
  func.func @transform_1(%arg0: i32) -> (i32, i32, i32) {
    %c0_i32 = arith.constant 0 : i32
    %c0_i32_0 = arith.constant 0 : i32
    %c0_i32_1 = arith.constant 0 : i32
    %c0_i32_2 = arith.constant 0 : i32
    return %c0_i32, %c0_i32_0, %c0_i32_1 : i32, i32, i32
  }
  func.func @transform_2(%arg0: i32) -> (i32, i32) {
    %c0_i32 = arith.constant 0 : i32
    %c0_i32_0 = arith.constant 0 : i32
    %c0_i32_1 = arith.constant 0 : i32
    return %c0_i32, %c0_i32_0 : i32, i32
  }
  func.func @transform_3(%arg0: i32) -> (i32, i32) {
    %c0_i32 = arith.constant 0 : i32
    %c0_i32_0 = arith.constant 0 : i32
    %c0_i32_1 = arith.constant 0 : i32
    return %c0_i32, %c0_i32_0 : i32, i32
  }
  func.func @transform_4(%arg0: i32) -> (i32, i32, i32) {
    %c0_i32 = arith.constant 0 : i32
    %c0_i32_0 = arith.constant 0 : i32
    %c0_i32_1 = arith.constant 0 : i32
    %c0_i32_2 = arith.constant 0 : i32
    return %c0_i32, %c0_i32_0, %c0_i32_1 : i32, i32, i32
  }
  func.func @transform_5(%arg0: i32) -> (i32, i32) {
    %c0_i32 = arith.constant 0 : i32
    %c0_i32_0 = arith.constant 0 : i32
    %c0_i32_1 = arith.constant 0 : i32
    return %c0_i32, %c0_i32_0 : i32, i32
  }
  func.func @transform_6(%arg0: i32) -> (i32, i32) {
    %c0_i32 = arith.constant 0 : i32
    %c0_i32_0 = arith.constant 0 : i32
    %c0_i32_1 = arith.constant 0 : i32
    return %c0_i32, %c0_i32_0 : i32, i32
  }
  func.func @transform_7(%arg0: i32) -> (i32, i32) {
    %c0_i32 = arith.constant 0 : i32
    %c0_i32_0 = arith.constant 0 : i32
    %c0_i32_1 = arith.constant 0 : i32
    return %c0_i32, %c0_i32_0 : i32, i32
  }
  func.func @transform_8(%arg0: i32) -> (i32, i32) {
    %c0_i32 = arith.constant 0 : i32
    %c0_i32_0 = arith.constant 0 : i32
    %c0_i32_1 = arith.constant 0 : i32
    return %c0_i32, %c0_i32_0 : i32, i32
  }
  func.func @transform_9(%arg0: i32) -> (i32, i32) {
    %c0_i32 = arith.constant 0 : i32
    %c0_i32_0 = arith.constant 0 : i32
    %c0_i32_1 = arith.constant 0 : i32
    return %c0_i32, %c0_i32_0 : i32, i32
  }
  func.func @transform_10(%arg0: i32) -> (i32, i32) {
    %c0_i32 = arith.constant 0 : i32
    %c0_i32_0 = arith.constant 0 : i32
    %c0_i32_1 = arith.constant 0 : i32
    return %c0_i32, %c0_i32_0 : i32, i32
  }
}

</mosaic_0001>

<llo_original>
// kernel: swin_block_forward.1
$region0: #{swin_block_forward.1}
  #allocation0 [shape = 'u32[]', space=smem, size = 0x4, offset = 0x4, fixed_abs, tag = 'smem constant byte address 0x4 - core index']
  #allocation1 [shape = 'u32[72,128]{1,0:T(1,128)}', space=vmem, size = 0x9000, scoped, tag = 'internal scratch']
  %s0 = inlined_call_operand.vmem [shape: f32[128,32], index: 0, kind: input, shape index: {}]
  %s1 = inlined_call_operand.vmem [shape: f32[4,128,128], index: 1, kind: input, shape index: {}]
  %s2 = inlined_call_operand.vmem [shape: bf16[32,96], index: 2, kind: input, shape index: {}]
  %s3 = inlined_call_operand.vmem [shape: f32[1,96], index: 3, kind: input, shape index: {}]
  %s4 = inlined_call_operand.vmem [shape: bf16[4,8,32], index: 4, kind: input, shape index: {}]
  %s5 = inlined_call_operand.vmem [shape: f32[1,32], index: 5, kind: input, shape index: {}]
  %s6 = inlined_call_operand.vmem [shape: bf16[32,128], index: 6, kind: input, shape index: {}]
  %s7 = inlined_call_operand.vmem [shape: f32[1,128], index: 7, kind: input, shape index: {}]
  %s8 = inlined_call_operand.vmem [shape: bf16[128,32], index: 8, kind: input, shape index: {}]
  %s9 = inlined_call_operand.vmem [shape: f32[1,32], index: 9, kind: input, shape index: {}]
  %s10 = inlined_call_operand.vmem [shape: f32[128,32], index: 10, kind: output, shape index: {}]
  %s11 = sld [smem:[#allocation0]]
  $region50: #{swin_block_forward.1} parent=0
    _
  %s13 = ssub.s32 1, %s11
  %s14 = scalar_select 0, %s13, %s11
  // Predicated region
  $region2: #{swin_block_forward.1} parent=0 // pred_check
    _
  $region3: #{swin_block_forward.1} parent=0 // pred_check_branch
    %16 = sbr.rel (0) target = $region5
  $region4: #{swin_block_forward.1} parent=0 // pred_region
    _
  $region5: #{swin_block_forward.1} parent=0 // pred_fallthru
    _
  // Predicated region
  $region6: #{swin_block_forward.1} parent=0 // pred_check
    _
  $region7: #{swin_block_forward.1} parent=0 // pred_check_branch
    %18 = sbr.rel (0) target = $region9
  $region8: #{swin_block_forward.1} parent=0 // pred_region
    _
  $region9: #{swin_block_forward.1} parent=0 // pred_fallthru
    _
  // Predicated region
  $region10: #{swin_block_forward.1} parent=0 // pred_check
    _
  $region11: #{swin_block_forward.1} parent=0 // pred_check_branch
    %20 = sbr.rel (0) target = $region13
  $region12: #{swin_block_forward.1} parent=0 // pred_region
    _
  $region13: #{swin_block_forward.1} parent=0 // pred_fallthru
    _
  // Predicated region
  $region14: #{swin_block_forward.1} parent=0 // pred_check
    _
  $region15: #{swin_block_forward.1} parent=0 // pred_check_branch
    %22 = sbr.rel (0) target = $region17
  $region16: #{swin_block_forward.1} parent=0 // pred_region
    _
  $region17: #{swin_block_forward.1} parent=0 // pred_fallthru
    _
  // Predicated region
  $region18: #{swin_block_forward.1} parent=0 // pred_check
    _
  $region19: #{swin_block_forward.1} parent=0 // pred_check_branch
    %24 = sbr.rel (0) target = $region21
  $region20: #{swin_block_forward.1} parent=0 // pred_region
    _
  $region21: #{swin_block_forward.1} parent=0 // pred_fallthru
    _
  // Predicated region
  $region22: #{swin_block_forward.1} parent=0 // pred_check
    _
  $region23: #{swin_block_forward.1} parent=0 // pred_check_branch
    %26 = sbr.rel (0) target = $region25
  $region24: #{swin_block_forward.1} parent=0 // pred_region
    _
  $region25: #{swin_block_forward.1} parent=0 // pred_fallthru
    _
  // Predicated region
  $region26: #{swin_block_forward.1} parent=0 // pred_check
    _
  $region27: #{swin_block_forward.1} parent=0 // pred_check_branch
    %28 = sbr.rel (0) target = $region29
  $region28: #{swin_block_forward.1} parent=0 // pred_region
    _
  $region29: #{swin_block_forward.1} parent=0 // pred_fallthru
    _
  // Predicated region
  $region30: #{swin_block_forward.1} parent=0 // pred_check
    _
  $region31: #{swin_block_forward.1} parent=0 // pred_check_branch
    %30 = sbr.rel (0) target = $region33
  $region32: #{swin_block_forward.1} parent=0 // pred_region
    _
  $region33: #{swin_block_forward.1} parent=0 // pred_fallthru
    _
  // Predicated region
  $region34: #{swin_block_forward.1} parent=0 // pred_check
    _
  $region35: #{swin_block_forward.1} parent=0 // pred_check_branch
    %32 = sbr.rel (0) target = $region37
  $region36: #{swin_block_forward.1} parent=0 // pred_region
    _
  $region37: #{swin_block_forward.1} parent=0 // pred_fallthru
    _
  // Predicated region
  $region38: #{swin_block_forward.1} parent=0 // pred_check
    _
  $region39: #{swin_block_forward.1} parent=0 // pred_check_branch
    %34 = sbr.rel (0) target = $region41
  $region40: #{swin_block_forward.1} parent=0 // pred_region
    _
  $region41: #{swin_block_forward.1} parent=0 // pred_fallthru
    _
  %v36 = vld [vmem:[%s0] sm:$0xff]
  %v37 = vld [vmem:[%s0 + $0x8] sm:$0xff]
  %v38 = vld [vmem:[%s0 + $0x10] sm:$0xff]
  %v39 = vld [vmem:[%s0 + $0x18] sm:$0xff]
  %v40 = vld [vmem:[%s0 + $0x20] sm:$0xff]
  %v41 = vld [vmem:[%s0 + $0x28] sm:$0xff]
  %v42 = vld [vmem:[%s0 + $0x30] sm:$0xff]
  %v43 = vld [vmem:[%s0 + $0x38] sm:$0xff]
  %v44 = vld [vmem:[%s0 + $0x40] sm:$0xff]
  %v45 = vld [vmem:[%s0 + $0x48] sm:$0xff]
  %v46 = vld [vmem:[%s0 + $0x50] sm:$0xff]
  %v47 = vld [vmem:[%s0 + $0x58] sm:$0xff]
  %v48 = vld [vmem:[%s0 + $0x60] sm:$0xff]
  %v49 = vld [vmem:[%s0 + $0x68] sm:$0xff]
  %v50 = vld [vmem:[%s0 + $0x70] sm:$0xff]
  %v51 = vld [vmem:[%s0 + $0x78] sm:$0xff]
  %vm52 = vcmask 261120
  %v53 = vsel %vm52, %v36, 0.0
  %54 = vadd.xlane.f32.xlu0 %v53
  %v55 = vpop.xlane.xlu0 %54
  %v56 = vsel %vm52, %v37, 0.0
  %57 = vadd.xlane.f32.xlu0 %v56
  %v58 = vpop.xlane.xlu0 %57
  %v59 = vsel %vm52, %v38, 0.0
  %60 = vadd.xlane.f32.xlu0 %v59
  %v61 = vpop.xlane.xlu0 %60
  %v62 = vsel %vm52, %v39, 0.0
  %63 = vadd.xlane.f32.xlu0 %v62
  %v64 = vpop.xlane.xlu0 %63
  %v65 = vsel %vm52, %v40, 0.0
  %66 = vadd.xlane.f32.xlu0 %v65
  %v67 = vpop.xlane.xlu0 %66
  %v68 = vsel %vm52, %v41, 0.0
  %69 = vadd.xlane.f32.xlu0 %v68
  %v70 = vpop.xlane.xlu0 %69
  %v71 = vsel %vm52, %v42, 0.0
  %72 = vadd.xlane.f32.xlu0 %v71
  %v73 = vpop.xlane.xlu0 %72
  %v74 = vsel %vm52, %v43, 0.0
  %75 = vadd.xlane.f32.xlu0 %v74
  %v76 = vpop.xlane.xlu0 %75
  %v77 = vsel %vm52, %v44, 0.0
  %78 = vadd.xlane.f32.xlu0 %v77
  %v79 = vpop.xlane.xlu0 %78
  %v80 = vsel %vm52, %v45, 0.0
  %81 = vadd.xlane.f32.xlu0 %v80
  %v82 = vpop.xlane.xlu0 %81
  %v83 = vsel %vm52, %v46, 0.0
  %84 = vadd.xlane.f32.xlu0 %v83
  %v85 = vpop.xlane.xlu0 %84
  %v86 = vsel %vm52, %v47, 0.0
  %87 = vadd.xlane.f32.xlu0 %v86
  %v88 = vpop.xlane.xlu0 %87
  %v89 = vsel %vm52, %v48, 0.0
  %90 = vadd.xlane.f32.xlu0 %v89
  %v91 = vpop.xlane.xlu0 %90
  %v92 = vsel %vm52, %v49, 0.0
  %93 = vadd.xlane.f32.xlu0 %v92
  %v94 = vpop.xlane.xlu0 %93
  %v95 = vsel %vm52, %v50, 0.0
  %96 = vadd.xlane.f32.xlu0 %v95
  %v97 = vpop.xlane.xlu0 %96
  %v98 = vsel %vm52, %v51, 0.0
  %99 = vadd.xlane.f32.xlu0 %v98
  %v100 = vpop.xlane.xlu0 %99
  %v101 = vrcp.pop 32.0
  %v102 = vmul.f32 32.0, %v101
  %v103 = vsub.f32 1.0, %v102
  %v104 = vmul.f32 %v101, %v103
  %v105 = vadd.f32 %v101, %v104
  %vm106 = vweird.f32 %v101
  %v107 = vsel %vm106, %v101, %v105
  %v108 = vmul.f32 %v55, %v107
  %v109 = vmul.f32 %v58, %v107
  %v110 = vmul.f32 %v61, %v107
  %v111 = vmul.f32 %v64, %v107
  %v112 = vmul.f32 %v67, %v107
  %v113 = vmul.f32 %v70, %v107
  %v114 = vmul.f32 %v73, %v107
  %v115 = vmul.f32 %v76, %v107
  %v116 = vmul.f32 %v79, %v107
  %v117 = vmul.f32 %v82, %v107
  %v118 = vmul.f32 %v85, %v107
  %v119 = vmul.f32 %v88, %v107
  %v120 = vmul.f32 %v91, %v107
  %v121 = vmul.f32 %v94, %v107
  %v122 = vmul.f32 %v97, %v107
  %v123 = vmul.f32 %v100, %v107
  %v124 = vsub.f32 %v36, %v108
  %v125 = vsub.f32 %v37, %v109
  %v126 = vsub.f32 %v38, %v110
  %v127 = vsub.f32 %v39, %v111
  %v128 = vsub.f32 %v40, %v112
  %v129 = vsub.f32 %v41, %v113
  %v130 = vsub.f32 %v42, %v114
  %v131 = vsub.f32 %v43, %v115
  %v132 = vsub.f32 %v44, %v116
  %v133 = vsub.f32 %v45, %v117
  %v134 = vsub.f32 %v46, %v118
  %v135 = vsub.f32 %v47, %v119
  %v136 = vsub.f32 %v48, %v120
  %v137 = vsub.f32 %v49, %v121
  %v138 = vsub.f32 %v50, %v122
  %v139 = vsub.f32 %v51, %v123
  %v140 = vmul.f32 %v124, %v124
  %v141 = vmul.f32 %v125, %v125
  %v142 = vmul.f32 %v126, %v126
  %v143 = vmul.f32 %v127, %v127
  %v144 = vmul.f32 %v128, %v128
  %v145 = vmul.f32 %v129, %v129
  %v146 = vmul.f32 %v130, %v130
  %v147 = vmul.f32 %v131, %v131
  %v148 = vmul.f32 %v132, %v132
  %v149 = vmul.f32 %v133, %v133
  %v150 = vmul.f32 %v134, %v134
  %v151 = vmul.f32 %v135, %v135
  %v152 = vmul.f32 %v136, %v136
  %v153 = vmul.f32 %v137, %v137
  %v154 = vmul.f32 %v138, %v138
  %v155 = vmul.f32 %v139, %v139
  %v156 = vsel %vm52, %v140, 0.0
  %157 = vadd.xlane.f32.xlu0 %v156
  %v158 = vpop.xlane.xlu0 %157
  %v159 = vsel %vm52, %v141, 0.0
  %160 = vadd.xlane.f32.xlu0 %v159
  %v161 = vpop.xlane.xlu0 %160
  %v162 = vsel %vm52, %v142, 0.0
  %163 = vadd.xlane.f32.xlu0 %v162
  %v164 = vpop.xlane.xlu0 %163
  %v165 = vsel %vm52, %v143, 0.0
  %166 = vadd.xlane.f32.xlu0 %v165
  %v167 = vpop.xlane.xlu0 %166
  %v168 = vsel %vm52, %v144, 0.0
  %169 = vadd.xlane.f32.xlu0 %v168
  %v170 = vpop.xlane.xlu0 %169
  %v171 = vsel %vm52, %v145, 0.0
  %172 = vadd.xlane.f32.xlu0 %v171
  %v173 = vpop.xlane.xlu0 %172
  %v174 = vsel %vm52, %v146, 0.0
  %175 = vadd.xlane.f32.xlu0 %v174
  %v176 = vpop.xlane.xlu0 %175
  %v177 = vsel %vm52, %v147, 0.0
  %178 = vadd.xlane.f32.xlu0 %v177
  %v179 = vpop.xlane.xlu0 %178
  %v180 = vsel %vm52, %v148, 0.0
  %181 = vadd.xlane.f32.xlu0 %v180
  %v182 = vpop.xlane.xlu0 %181
  %v183 = vsel %vm52, %v149, 0.0
  %184 = vadd.xlane.f32.xlu0 %v183
  %v185 = vpop.xlane.xlu0 %184
  %v186 = vsel %vm52, %v150, 0.0
  %187 = vadd.xlane.f32.xlu0 %v186
  %v188 = vpop.xlane.xlu0 %187
  %v189 = vsel %vm52, %v151, 0.0
  %190 = vadd.xlane.f32.xlu0 %v189
  %v191 = vpop.xlane.xlu0 %190
  %v192 = vsel %vm52, %v152, 0.0
  %193 = vadd.xlane.f32.xlu0 %v192
  %v194 = vpop.xlane.xlu0 %193
  %v195 = vsel %vm52, %v153, 0.0
  %196 = vadd.xlane.f32.xlu0 %v195
  %v197 = vpop.xlane.xlu0 %196
  %v198 = vsel %vm52, %v154, 0.0
  %199 = vadd.xlane.f32.xlu0 %v198
  %v200 = vpop.xlane.xlu0 %199
  %v201 = vsel %vm52, %v155, 0.0
  %202 = vadd.xlane.f32.xlu0 %v201
  %v203 = vpop.xlane.xlu0 %202
  %v204 = vmul.f32 %v158, %v107
  %v205 = vmul.f32 %v161, %v107
  %v206 = vmul.f32 %v164, %v107
  %v207 = vmul.f32 %v167, %v107
  %v208 = vmul.f32 %v170, %v107
  %v209 = vmul.f32 %v173, %v107
  %v210 = vmul.f32 %v176, %v107
  %v211 = vmul.f32 %v179, %v107
  %v212 = vmul.f32 %v182, %v107
  %v213 = vmul.f32 %v185, %v107
  %v214 = vmul.f32 %v188, %v107
  %v215 = vmul.f32 %v191, %v107
  %v216 = vmul.f32 %v194, %v107
  %v217 = vmul.f32 %v197, %v107
  %v218 = vmul.f32 %v200, %v107
  %v219 = vmul.f32 %v203, %v107
  %v220 = vadd.f32 %v204, 1e-05
  %v221 = vadd.f32 %v205, 1e-05
  %v222 = vadd.f32 %v206, 1e-05
  %v223 = vadd.f32 %v207, 1e-05
  %v224 = vadd.f32 %v208, 1e-05
  %v225 = vadd.f32 %v209, 1e-05
  %v226 = vadd.f32 %v210, 1e-05
  %v227 = vadd.f32 %v211, 1e-05
  %v228 = vadd.f32 %v212, 1e-05
  %v229 = vadd.f32 %v213, 1e-05
  %v230 = vadd.f32 %v214, 1e-05
  %v231 = vadd.f32 %v215, 1e-05
  %v232 = vadd.f32 %v216, 1e-05
  %v233 = vadd.f32 %v217, 1e-05
  %v234 = vadd.f32 %v218, 1e-05
  %v235 = vadd.f32 %v219, 1e-05
  %v236 = vrsqrt.pop %v220
  %v237 = vmul.f32 %v236, %v220
  %v238 = vmul.f32 %v237, %v236
  %v239 = vmul.f32 0.5, %v238
  %v240 = vsub.f32 1.5, %v239
  %v241 = vmul.f32 %v236, %v240
  %vm242 = vweird.f32 %v220
  %vm243 = vweird.f32 %v236
  %vm244 = vmor %vm242, %vm243
  %v245 = vsel %vm244, %v236, %v241
  %v246 = vrsqrt.pop %v221
  %v247 = vmul.f32 %v246, %v221
  %v248 = vmul.f32 %v247, %v246
  %v249 = vmul.f32 0.5, %v248
  %v250 = vsub.f32 1.5, %v249
  %v251 = vmul.f32 %v246, %v250
  %vm252 = vweird.f32 %v221
  %vm253 = vweird.f32 %v246
  %vm254 = vmor %vm252, %vm253
  %v255 = vsel %vm254, %v246, %v251
  %v256 = vrsqrt.pop %v222
  %v257 = vmul.f32 %v256, %v222
  %v258 = vmul.f32 %v257, %v256
  %v259 = vmul.f32 0.5, %v258
  %v260 = vsub.f32 1.5, %v259
  %v261 = vmul.f32 %v256, %v260
  %vm262 = vweird.f32 %v222
  %vm263 = vweird.f32 %v256
  %vm264 = vmor %vm262, %vm263
  %v265 = vsel %vm264, %v256, %v261
  %v266 = vrsqrt.pop %v223
  %v267 = vmul.f32 %v266, %v223
  %v268 = vmul.f32 %v267, %v266
  %v269 = vmul.f32 0.5, %v268
  %v270 = vsub.f32 1.5, %v269
  %v271 = vmul.f32 %v266, %v270
  %vm272 = vweird.f32 %v223
  %vm273 = vweird.f32 %v266
  %vm274 = vmor %vm272, %vm273
  %v275 = vsel %vm274, %v266, %v271
  %v276 = vrsqrt.pop %v224
  %v277 = vmul.f32 %v276, %v224
  %v278 = vmul.f32 %v277, %v276
  %v279 = vmul.f32 0.5, %v278
  %v280 = vsub.f32 1.5, %v279
  %v281 = vmul.f32 %v276, %v280
  %vm282 = vweird.f32 %v224
  %vm283 = vweird.f32 %v276
  %vm284 = vmor %vm282, %vm283
  %v285 = vsel %vm284, %v276, %v281
  %v286 = vrsqrt.pop %v225
  %v287 = vmul.f32 %v286, %v225
  %v288 = vmul.f32 %v287, %v286
  %v289 = vmul.f32 0.5, %v288
  %v290 = vsub.f32 1.5, %v289
  %v291 = vmul.f32 %v286, %v290
  %vm292 = vweird.f32 %v225
  %vm293 = vweird.f32 %v286
  %vm294 = vmor %vm292, %vm293
  %v295 = vsel %vm294, %v286, %v291
  %v296 = vrsqrt.pop %v226
  %v297 = vmul.f32 %v296, %v226
  %v298 = vmul.f32 %v297, %v296
  %v299 = vmul.f32 0.5, %v298
  %v300 = vsub.f32 1.5, %v299
  %v301 = vmul.f32 %v296, %v300
  %vm302 = vweird.f32 %v226
  %vm303 = vweird.f32 %v296
  %vm304 = vmor %vm302, %vm303
  %v305 = vsel %vm304, %v296, %v301
  %v306 = vrsqrt.pop %v227
  %v307 = vmul.f32 %v306, %v227
  %v308 = vmul.f32 %v307, %v306
  %v309 = vmul.f32 0.5, %v308
  %v310 = vsub.f32 1.5, %v309
  %v311 = vmul.f32 %v306, %v310
  %vm312 = vweird.f32 %v227
  %vm313 = vweird.f32 %v306
  %vm314 = vmor %vm312, %vm313
  %v315 = vsel %vm314, %v306, %v311
  %v316 = vrsqrt.pop %v228
  %v317 = vmul.f32 %v316, %v228
  %v318 = vmul.f32 %v317, %v316
  %v319 = vmul.f32 0.5, %v318
  %v320 = vsub.f32 1.5, %v319
  %v321 = vmul.f32 %v316, %v320
  %vm322 = vweird.f32 %v228
  %vm323 = vweird.f32 %v316
  %vm324 = vmor %vm322, %vm323
  %v325 = vsel %vm324, %v316, %v321
  %v326 = vrsqrt.pop %v229
  %v327 = vmul.f32 %v326, %v229
  %v328 = vmul.f32 %v327, %v326
  %v329 = vmul.f32 0.5, %v328
  %v330 = vsub.f32 1.5, %v329
  %v331 = vmul.f32 %v326, %v330
  %vm332 = vweird.f32 %v229
  %vm333 = vweird.f32 %v326
  %vm334 = vmor %vm332, %vm333
  %v335 = vsel %vm334, %v326, %v331
  %v336 = vrsqrt.pop %v230
  %v337 = vmul.f32 %v336, %v230
  %v338 = vmul.f32 %v337, %v336
  %v339 = vmul.f32 0.5, %v338
  %v340 = vsub.f32 1.5, %v339
  %v341 = vmul.f32 %v336, %v340
  %vm342 = vweird.f32 %v230
  %vm343 = vweird.f32 %v336
  %vm344 = vmor %vm342, %vm343
  %v345 = vsel %vm344, %v336, %v341
  %v346 = vrsqrt.pop %v231
  %v347 = vmul.f32 %v346, %v231
  %v348 = vmul.f32 %v347, %v346
  %v349 = vmul.f32 0.5, %v348
  %v350 = vsub.f32 1.5, %v349
  %v351 = vmul.f32 %v346, %v350
  %vm352 = vweird.f32 %v231
  %vm353 = vweird.f32 %v346
  %vm354 = vmor %vm352, %vm353
  %v355 = vsel %vm354, %v346, %v351
  %v356 = vrsqrt.pop %v232
  %v357 = vmul.f32 %v356, %v232
  %v358 = vmul.f32 %v357, %v356
  %v359 = vmul.f32 0.5, %v358
  %v360 = vsub.f32 1.5, %v359
  %v361 = vmul.f32 %v356, %v360
  %vm362 = vweird.f32 %v232
  %vm363 = vweird.f32 %v356
  %vm364 = vmor %vm362, %vm363
  %v365 = vsel %vm364, %v356, %v361
  %v366 = vrsqrt.pop %v233
  %v367 = vmul.f32 %v366, %v233
  %v368 = vmul.f32 %v367, %v366
  %v369 = vmul.f32 0.5, %v368
  %v370 = vsub.f32 1.5, %v369
  %v371 = vmul.f32 %v366, %v370
  %vm372 = vweird.f32 %v233
  %vm373 = vweird.f32 %v366
  %vm374 = vmor %vm372, %vm373
  %v375 = vsel %vm374, %v366, %v371
  %v376 = vrsqrt.pop %v234
  %v377 = vmul.f32 %v376, %v234
  %v378 = vmul.f32 %v377, %v376
  %v379 = vmul.f32 0.5, %v378
  %v380 = vsub.f32 1.5, %v379
  %v381 = vmul.f32 %v376, %v380
  %vm382 = vweird.f32 %v234
  %vm383 = vweird.f32 %v376
  %vm384 = vmor %vm382, %vm383
  %v385 = vsel %vm384, %v376, %v381
  %v386 = vrsqrt.pop %v235
  %v387 = vmul.f32 %v386, %v235
  %v388 = vmul.f32 %v387, %v386
  %v389 = vmul.f32 0.5, %v388
  %v390 = vsub.f32 1.5, %v389
  %v391 = vmul.f32 %v386, %v390
  %vm392 = vweird.f32 %v235
  %vm393 = vweird.f32 %v386
  %vm394 = vmor %vm392, %vm393
  %v395 = vsel %vm394, %v386, %v391
  %v396 = vmul.f32 %v124, %v245
  %v397 = vmul.f32 %v125, %v255
  %v398 = vmul.f32 %v126, %v265
  %v399 = vmul.f32 %v127, %v275
  %v400 = vmul.f32 %v128, %v285
  %v401 = vmul.f32 %v129, %v295
  %v402 = vmul.f32 %v130, %v305
  %v403 = vmul.f32 %v131, %v315
  %v404 = vmul.f32 %v132, %v325
  %v405 = vmul.f32 %v133, %v335
  %v406 = vmul.f32 %v134, %v345
  %v407 = vmul.f32 %v135, %v355
  %v408 = vmul.f32 %v136, %v365
  %v409 = vmul.f32 %v137, %v375
  %v410 = vmul.f32 %v138, %v385
  %v411 = vmul.f32 %v139, %v395
  %v412 = vpack.c.bf16 %v397, %v396
  %v413 = vpack.c.bf16 %v399, %v398
  %v414 = vpack.c.bf16 %v401, %v400
  %v415 = vpack.c.bf16 %v403, %v402
  %v416 = vpack.c.bf16 %v405, %v404
  %v417 = vpack.c.bf16 %v407, %v406
  %v418 = vpack.c.bf16 %v409, %v408
  %v419 = vpack.c.bf16 %v411, %v410
  %v420 = vld [vmem:[%s2] sm:$0xf]
  %v421 = vld [vmem:[%s2 + $0x4] sm:$0xf]
  %v422 = vld [vmem:[%s2 + $0x8] sm:$0xf]
  %v423 = vld [vmem:[%s2 + $0xc] sm:$0xf]
  %v424 = vld [vmem:[%s3] sm:$0x1]
  %v426 = vperm.slane %v424, 0
  %v432 = vunpack.c.l.b16 %v420
  %v433 = vunpack.c.l.b16 %v421
  %v434 = vunpack.c.l.b16 %v422
  %v435 = vunpack.c.l.b16 %v423
  %v436 = vpack.c.b16 %v433, %v432
  %v437 = vpack.c.b16 %v435, %v434
  %v441 = vsel %vm52, %v412, 0
  %v444 = vsel %vm52, %v413, 0
  %v447 = vsel %vm52, %v414, 0
  %v450 = vsel %vm52, %v415, 0
  %v453 = vsel %vm52, %v416, 0
  %v456 = vsel %vm52, %v417, 0
  %v459 = vsel %vm52, %v418, 0
  %v462 = vsel %vm52, %v419, 0
  %464 = vmatpush.bf16.msra.mxu0 0
  %465 = vmatpush.bf16.msra.mxu0 0
  %466 = vmatpush.bf16.msra.mxu0 0
  %467 = vmatpush.bf16.msra.mxu0 0
  %468 = vmatpush.bf16.msra.mxu0 0
  %469 = vmatpush.bf16.msra.mxu0 0
  %470 = vmatpush.bf16.msra.mxu0 %v437
  %471 = vmatpush.bf16.msra.mxu0 %v436
  %472 = vmatmul.bf16.gmra.mxu0 %v441
  %v473 = vpop.f32.mrf.mxu0
  %v474 = vadd.f32 %v426, %v473
  %v475 = vpop.f32.mrf.mxu0
  %v476 = vadd.f32 %v426, %v475
  %477 = vmatmul.bf16.gmra.mxu0 %v444
  %v478 = vpop.f32.mrf.mxu0
  %v479 = vadd.f32 %v426, %v478
  %v480 = vpop.f32.mrf.mxu0
  %v481 = vadd.f32 %v426, %v480
  %482 = vmatmul.bf16.gmra.mxu0 %v447
  %v483 = vpop.f32.mrf.mxu0
  %v484 = vadd.f32 %v426, %v483
  %v485 = vpop.f32.mrf.mxu0
  %v486 = vadd.f32 %v426, %v485
  %487 = vmatmul.bf16.gmra.mxu0 %v450
  %v488 = vpop.f32.mrf.mxu0
  %v489 = vadd.f32 %v426, %v488
  %v490 = vpop.f32.mrf.mxu0
  %v491 = vadd.f32 %v426, %v490
  %492 = vmatmul.bf16.gmra.mxu0 %v453
  %v493 = vpop.f32.mrf.mxu0
  %v494 = vadd.f32 %v426, %v493
  %v495 = vpop.f32.mrf.mxu0
  %v496 = vadd.f32 %v426, %v495
  %497 = vmatmul.bf16.gmra.mxu0 %v456
  %v498 = vpop.f32.mrf.mxu0
  %v499 = vadd.f32 %v426, %v498
  %v500 = vpop.f32.mrf.mxu0
  %v501 = vadd.f32 %v426, %v500
  %502 = vmatmul.bf16.gmra.mxu0 %v459
  %v503 = vpop.f32.mrf.mxu0
  %v504 = vadd.f32 %v426, %v503
  %v505 = vpop.f32.mrf.mxu0
  %v506 = vadd.f32 %v426, %v505
  %507 = vmatmul.bf16.gmra.mxu0 %v462
  %v508 = vpop.f32.mrf.mxu0
  %v509 = vadd.f32 %v426, %v508
  %v510 = vpop.f32.mrf.mxu0
  %v511 = vadd.f32 %v426, %v510
  %512 = vdwg.mxu0
  %v513 = vpack.c.bf16 %v474, %v474
  %v514 = vpack.c.bf16 %v476, %v476
  %v515 = vpack.c.bf16 %v479, %v479
  %v516 = vpack.c.bf16 %v481, %v481
  %v517 = vpack.c.bf16 %v484, %v484
  %v518 = vpack.c.bf16 %v486, %v486
  %v519 = vpack.c.bf16 %v489, %v489
  %v520 = vpack.c.bf16 %v491, %v491
  %v521 = vpack.c.bf16 %v494, %v494
  %v522 = vpack.c.bf16 %v496, %v496
  %v523 = vpack.c.bf16 %v499, %v499
  %v524 = vpack.c.bf16 %v501, %v501
  %v525 = vpack.c.bf16 %v504, %v504
  %v526 = vpack.c.bf16 %v506, %v506
  %v527 = vpack.c.bf16 %v509, %v509
  %v528 = vpack.c.bf16 %v511, %v511
  %v529 = vld [vmem:[%s1] sm:$0xff]
  %v530 = vld [vmem:[%s1 + $0x8] sm:$0xff]
  %v531 = vld [vmem:[%s1 + $0x10] sm:$0xff]
  %v532 = vld [vmem:[%s1 + $0x18] sm:$0xff]
  %v533 = vld [vmem:[%s1 + $0x20] sm:$0xff]
  %v534 = vld [vmem:[%s1 + $0x28] sm:$0xff]
  %v535 = vld [vmem:[%s1 + $0x30] sm:$0xff]
  %v536 = vld [vmem:[%s1 + $0x38] sm:$0xff]
  %v537 = vld [vmem:[%s1 + $0x40] sm:$0xff]
  %v538 = vld [vmem:[%s1 + $0x48] sm:$0xff]
  %v539 = vld [vmem:[%s1 + $0x50] sm:$0xff]
  %v540 = vld [vmem:[%s1 + $0x58] sm:$0xff]
  %v541 = vld [vmem:[%s1 + $0x60] sm:$0xff]
  %v542 = vld [vmem:[%s1 + $0x68] sm:$0xff]
  %v543 = vld [vmem:[%s1 + $0x70] sm:$0xff]
  %v544 = vld [vmem:[%s1 + $0x78] sm:$0xff]
  %v561 = vunpack.c.l.b16 %v513
  %v562 = vunpack.c.l.b16 %v514
  %v563 = vunpack.c.l.b16 %v515
  %v564 = vunpack.c.l.b16 %v516
  %v565 = vunpack.c.l.b16 %v517
  %v566 = vunpack.c.l.b16 %v518
  %v567 = vunpack.c.l.b16 %v519
  %v568 = vunpack.c.l.b16 %v520
  %v569 = vunpack.c.l.b16 %v521
  %v570 = vunpack.c.l.b16 %v522
  %v571 = vunpack.c.l.b16 %v523
  %v572 = vunpack.c.l.b16 %v524
  %v573 = vunpack.c.l.b16 %v525
  %v574 = vunpack.c.l.b16 %v526
  %v575 = vunpack.c.l.b16 %v527
  %v576 = vunpack.c.l.b16 %v528
  %v577 = vpack.c.b16 %v562, %v561
  %v578 = vpack.c.b16 %v564, %v563
  %v579 = vpack.c.b16 %v566, %v565
  %v580 = vpack.c.b16 %v568, %v567
  %v581 = vpack.c.b16 %v570, %v569
  %v582 = vpack.c.b16 %v572, %v571
  %v583 = vpack.c.b16 %v574, %v573
  %v584 = vpack.c.b16 %v576, %v575
  %585 = vrot.lane.b32.xlu0 %v577, 96
  %v586 = vpop.permute.xlu0 %585
  %587 = vrot.lane.b32.xlu0 %v578, 96
  %v588 = vpop.permute.xlu0 %587
  %589 = vrot.lane.b32.xlu0 %v579, 96
  %v590 = vpop.permute.xlu0 %589
  %591 = vrot.lane.b32.xlu0 %v580, 96
  %v592 = vpop.permute.xlu0 %591
  %593 = vrot.lane.b32.xlu0 %v581, 96
  %v594 = vpop.permute.xlu0 %593
  %595 = vrot.lane.b32.xlu0 %v582, 96
  %v596 = vpop.permute.xlu0 %595
  %597 = vrot.lane.b32.xlu0 %v583, 96
  %v598 = vpop.permute.xlu0 %597
  %599 = vrot.lane.b32.xlu0 %v584, 96
  %v600 = vpop.permute.xlu0 %599
  %vm601 = vcmask 64512
  %v603 = vsel %vm601, %v577, 0
  %v606 = vsel %vm601, %v578, 0
  %v609 = vsel %vm601, %v579, 0
  %v612 = vsel %vm601, %v580, 0
  %v615 = vsel %vm601, %v581, 0
  %v618 = vsel %vm601, %v582, 0
  %v621 = vsel %vm601, %v583, 0
  %v624 = vsel %vm601, %v584, 0
  %v627 = vsel %vm601, %v586, 0
  %v630 = vsel %vm601, %v588, 0
  %v633 = vsel %vm601, %v590, 0
  %v636 = vsel %vm601, %v592, 0
  %v639 = vsel %vm601, %v594, 0
  %v642 = vsel %vm601, %v596, 0
  %v645 = vsel %vm601, %v598, 0
  %v648 = vsel %vm601, %v600, 0
  %650 = vmatpush.bf16.xpose.msra.mxu0 %v648
  %651 = vmatpush.bf16.xpose.msra.mxu0 %v645
  %652 = vmatpush.bf16.xpose.msra.mxu0 %v642
  %653 = vmatpush.bf16.xpose.msra.mxu0 %v639
  %654 = vmatpush.bf16.xpose.msra.mxu0 %v636
  %655 = vmatpush.bf16.xpose.msra.mxu0 %v633
  %656 = vmatpush.bf16.xpose.msra.mxu0 %v630
  %657 = vmatpush.bf16.xpose.msra.mxu0 %v627
  %658 = vmatmul.bf16.gmra.mxu0 %v603
  %v659 = vpop.f32.mrf.mxu0
  %v660 = vadd.f32 %v529, %v659
  %v661 = vpop.f32.mrf.mxu0
  %v662 = vadd.f32 %v530, %v661
  %663 = vmatmul.bf16.gmra.mxu0 %v606
  %v664 = vpop.f32.mrf.mxu0
  %v665 = vadd.f32 %v531, %v664
  %v666 = vpop.f32.mrf.mxu0
  %v667 = vadd.f32 %v532, %v666
  %668 = vmatmul.bf16.gmra.mxu0 %v609
  %v669 = vpop.f32.mrf.mxu0
  %v670 = vadd.f32 %v533, %v669
  %v671 = vpop.f32.mrf.mxu0
  %v672 = vadd.f32 %v534, %v671
  %673 = vmatmul.bf16.gmra.mxu0 %v612
  %v674 = vpop.f32.mrf.mxu0
  %v675 = vadd.f32 %v535, %v674
  %v676 = vpop.f32.mrf.mxu0
  %v677 = vadd.f32 %v536, %v676
  %678 = vmatmul.bf16.gmra.mxu0 %v615
  %v679 = vpop.f32.mrf.mxu0
  %v680 = vadd.f32 %v537, %v679
  %v681 = vpop.f32.mrf.mxu0
  %v682 = vadd.f32 %v538, %v681
  %683 = vmatmul.bf16.gmra.mxu0 %v618
  %v684 = vpop.f32.mrf.mxu0
  %v685 = vadd.f32 %v539, %v684
  %v686 = vpop.f32.mrf.mxu0
  %v687 = vadd.f32 %v540, %v686
  %688 = vmatmul.bf16.gmra.mxu0 %v621
  %v689 = vpop.f32.mrf.mxu0
  %v690 = vadd.f32 %v541, %v689
  %v691 = vpop.f32.mrf.mxu0
  %v692 = vadd.f32 %v542, %v691
  %693 = vmatmul.bf16.gmra.mxu0 %v624
  %v694 = vpop.f32.mrf.mxu0
  %v695 = vadd.f32 %v543, %v694
  %v696 = vpop.f32.mrf.mxu0
  %v697 = vadd.f32 %v544, %v696
  %698 = vdwg.mxu0
  %699 = vmax.xlane.f32.xlu0 %v660
  %v700 = vpop.xlane.xlu0 %699
  %701 = vmax.xlane.f32.xlu0 %v662
  %v702 = vpop.xlane.xlu0 %701
  %703 = vmax.xlane.f32.xlu0 %v665
  %v704 = vpop.xlane.xlu0 %703
  %705 = vmax.xlane.f32.xlu0 %v667
  %v706 = vpop.xlane.xlu0 %705
  %707 = vmax.xlane.f32.xlu0 %v670
  %v708 = vpop.xlane.xlu0 %707
  %709 = vmax.xlane.f32.xlu0 %v672
  %v710 = vpop.xlane.xlu0 %709
  %711 = vmax.xlane.f32.xlu0 %v675
  %v712 = vpop.xlane.xlu0 %711
  %713 = vmax.xlane.f32.xlu0 %v677
  %v714 = vpop.xlane.xlu0 %713
  %715 = vmax.xlane.f32.xlu0 %v680
  %v716 = vpop.xlane.xlu0 %715
  %717 = vmax.xlane.f32.xlu0 %v682
  %v718 = vpop.xlane.xlu0 %717
  %719 = vmax.xlane.f32.xlu0 %v685
  %v720 = vpop.xlane.xlu0 %719
  %721 = vmax.xlane.f32.xlu0 %v687
  %v722 = vpop.xlane.xlu0 %721
  %723 = vmax.xlane.f32.xlu0 %v690
  %v724 = vpop.xlane.xlu0 %723
  %725 = vmax.xlane.f32.xlu0 %v692
  %v726 = vpop.xlane.xlu0 %725
  %727 = vmax.xlane.f32.xlu0 %v695
  %v728 = vpop.xlane.xlu0 %727
  %729 = vmax.xlane.f32.xlu0 %v697
  %v730 = vpop.xlane.xlu0 %729
  %v731 = vsub.f32 %v660, %v700
  %v732 = vsub.f32 %v662, %v702
  %v733 = vsub.f32 %v665, %v704
  %v734 = vsub.f32 %v667, %v706
  %v735 = vsub.f32 %v670, %v708
  %v736 = vsub.f32 %v672, %v710
  %v737 = vsub.f32 %v675, %v712
  %v738 = vsub.f32 %v677, %v714
  %v739 = vsub.f32 %v680, %v716
  %v740 = vsub.f32 %v682, %v718
  %v741 = vsub.f32 %v685, %v720
  %v742 = vsub.f32 %v687, %v722
  %v743 = vsub.f32 %v690, %v724
  %v744 = vsub.f32 %v692, %v726
  %v745 = vsub.f32 %v695, %v728
  %v746 = vsub.f32 %v697, %v730
  %v747 = vmul.f32 %v731, 1.442695
  %v748 = vpow.pop %v747
  %v749 = vmul.f32 %v732, 1.442695
  %v750 = vpow.pop %v749
  %v751 = vmul.f32 %v733, 1.442695
  %v752 = vpow.pop %v751
  %v753 = vmul.f32 %v734, 1.442695
  %v754 = vpow.pop %v753
  %v755 = vmul.f32 %v735, 1.442695
  %v756 = vpow.pop %v755
  %v757 = vmul.f32 %v736, 1.442695
  %v758 = vpow.pop %v757
  %v759 = vmul.f32 %v737, 1.442695
  %v760 = vpow.pop %v759
  %v761 = vmul.f32 %v738, 1.442695
  %v762 = vpow.pop %v761
  %v763 = vmul.f32 %v739, 1.442695
  %v764 = vpow.pop %v763
  %v765 = vmul.f32 %v740, 1.442695
  %v766 = vpow.pop %v765
  %v767 = vmul.f32 %v741, 1.442695
  %v768 = vpow.pop %v767
  %v769 = vmul.f32 %v742, 1.442695
  %v770 = vpow.pop %v769
  %v771 = vmul.f32 %v743, 1.442695
  %v772 = vpow.pop %v771
  %v773 = vmul.f32 %v744, 1.442695
  %v774 = vpow.pop %v773
  %v775 = vmul.f32 %v745, 1.442695
  %v776 = vpow.pop %v775
  %v777 = vmul.f32 %v746, 1.442695
  %v778 = vpow.pop %v777
  %779 = vadd.xlane.f32.xlu0 %v748
  %v780 = vpop.xlane.xlu0 %779
  %781 = vadd.xlane.f32.xlu0 %v750
  %v782 = vpop.xlane.xlu0 %781
  %783 = vadd.xlane.f32.xlu0 %v752
  %v784 = vpop.xlane.xlu0 %783
  %785 = vadd.xlane.f32.xlu0 %v754
  %v786 = vpop.xlane.xlu0 %785
  %787 = vadd.xlane.f32.xlu0 %v756
  %v788 = vpop.xlane.xlu0 %787
  %789 = vadd.xlane.f32.xlu0 %v758
  %v790 = vpop.xlane.xlu0 %789
  %791 = vadd.xlane.f32.xlu0 %v760
  %v792 = vpop.xlane.xlu0 %791
  %793 = vadd.xlane.f32.xlu0 %v762
  %v794 = vpop.xlane.xlu0 %793
  %795 = vadd.xlane.f32.xlu0 %v764
  %v796 = vpop.xlane.xlu0 %795
  %797 = vadd.xlane.f32.xlu0 %v766
  %v798 = vpop.xlane.xlu0 %797
  %799 = vadd.xlane.f32.xlu0 %v768
  %v800 = vpop.xlane.xlu0 %799
  %801 = vadd.xlane.f32.xlu0 %v770
  %v802 = vpop.xlane.xlu0 %801
  %803 = vadd.xlane.f32.xlu0 %v772
  %v804 = vpop.xlane.xlu0 %803
  %805 = vadd.xlane.f32.xlu0 %v774
  %v806 = vpop.xlane.xlu0 %805
  %807 = vadd.xlane.f32.xlu0 %v776
  %v808 = vpop.xlane.xlu0 %807
  %809 = vadd.xlane.f32.xlu0 %v778
  %v810 = vpop.xlane.xlu0 %809
  %v811 = vrcp.pop %v780
  %v812 = vrcp.pop %v782
  %v813 = vrcp.pop %v784
  %v814 = vrcp.pop %v786
  %v815 = vrcp.pop %v788
  %v816 = vrcp.pop %v790
  %v817 = vrcp.pop %v792
  %v818 = vrcp.pop %v794
  %v819 = vrcp.pop %v796
  %v820 = vrcp.pop %v798
  %v821 = vrcp.pop %v800
  %v822 = vrcp.pop %v802
  %v823 = vrcp.pop %v804
  %v824 = vrcp.pop %v806
  %v825 = vrcp.pop %v808
  %v826 = vrcp.pop %v810
  %v827 = vmul.f32 %v748, %v811
  %v828 = vmul.f32 %v750, %v812
  %v829 = vmul.f32 %v752, %v813
  %v830 = vmul.f32 %v754, %v814
  %v831 = vmul.f32 %v756, %v815
  %v832 = vmul.f32 %v758, %v816
  %v833 = vmul.f32 %v760, %v817
  %v834 = vmul.f32 %v762, %v818
  %v835 = vmul.f32 %v764, %v819
  %v836 = vmul.f32 %v766, %v820
  %v837 = vmul.f32 %v768, %v821
  %v838 = vmul.f32 %v770, %v822
  %v839 = vmul.f32 %v772, %v823
  %v840 = vmul.f32 %v774, %v824
  %v841 = vmul.f32 %v776, %v825
  %v842 = vmul.f32 %v778, %v826
  %v843 = vld [vmem:[%s4] sm:$0xf]
  %844 = vrot.lane.b32.xlu0 %v577, 64
  %v845 = vpop.permute.xlu0 %844
  %846 = vrot.lane.b32.xlu0 %v578, 64
  %v847 = vpop.permute.xlu0 %846
  %848 = vrot.lane.b32.xlu0 %v579, 64
  %v849 = vpop.permute.xlu0 %848
  %850 = vrot.lane.b32.xlu0 %v580, 64
  %v851 = vpop.permute.xlu0 %850
  %852 = vrot.lane.b32.xlu0 %v581, 64
  %v853 = vpop.permute.xlu0 %852
  %854 = vrot.lane.b32.xlu0 %v582, 64
  %v855 = vpop.permute.xlu0 %854
  %856 = vrot.lane.b32.xlu0 %v583, 64
  %v857 = vpop.permute.xlu0 %856
  %858 = vrot.lane.b32.xlu0 %v584, 64
  %v859 = vpop.permute.xlu0 %858
  %v861 = vsel %vm601, %v845, 0
  %v864 = vsel %vm601, %v847, 0
  %v867 = vsel %vm601, %v849, 0
  %v870 = vsel %vm601, %v851, 0
  %v873 = vsel %vm601, %v853, 0
  %v876 = vsel %vm601, %v855, 0
  %v879 = vsel %vm601, %v857, 0
  %v882 = vsel %vm601, %v859, 0
  %vm884 = vcmask 1043456
  %v886 = vsel %vm884, %v843, 0
  %888 = vmatpush.bf16.msra.mxu0 0
  %889 = vmatpush.bf16.msra.mxu0 0
  %890 = vmatpush.bf16.msra.mxu0 0
  %891 = vmatpush.bf16.msra.mxu0 0
  %892 = vmatpush.bf16.msra.mxu0 0
  %893 = vmatpush.bf16.msra.mxu0 0
  %894 = vmatpush.bf16.msra.mxu0 0
  %895 = vmatpush.bf16.msra.mxu0 %v886
  %896 = vmatmul.bf16.gmra.mxu0 %v861
  %v897 = vpop.f32.mrf.mxu0
  %v898 = vadd.f32 0.0, %v897
  %v899 = vpop.f32.mrf.mxu0
  %v900 = vadd.f32 0.0, %v899
  %901 = vmatmul.bf16.gmra.mxu0 %v864
  %v902 = vpop.f32.mrf.mxu0
  %v903 = vadd.f32 0.0, %v902
  %v904 = vpop.f32.mrf.mxu0
  %v905 = vadd.f32 0.0, %v904
  %906 = vmatmul.bf16.gmra.mxu0 %v867
  %v907 = vpop.f32.mrf.mxu0
  %v908 = vadd.f32 0.0, %v907
  %v909 = vpop.f32.mrf.mxu0
  %v910 = vadd.f32 0.0, %v909
  %911 = vmatmul.bf16.gmra.mxu0 %v870
  %v912 = vpop.f32.mrf.mxu0
  %v913 = vadd.f32 0.0, %v912
  %v914 = vpop.f32.mrf.mxu0
  %v915 = vadd.f32 0.0, %v914
  %916 = vmatmul.bf16.gmra.mxu0 %v873
  %v917 = vpop.f32.mrf.mxu0
  %v918 = vadd.f32 0.0, %v917
  %v919 = vpop.f32.mrf.mxu0
  %v920 = vadd.f32 0.0, %v919
  %921 = vmatmul.bf16.gmra.mxu0 %v876
  %v922 = vpop.f32.mrf.mxu0
  %v923 = vadd.f32 0.0, %v922
  %v924 = vpop.f32.mrf.mxu0
  %v925 = vadd.f32 0.0, %v924
  %926 = vmatmul.bf16.gmra.mxu0 %v879
  %v927 = vpop.f32.mrf.mxu0
  %v928 = vadd.f32 0.0, %v927
  %v929 = vpop.f32.mrf.mxu0
  %v930 = vadd.f32 0.0, %v929
  %931 = vmatmul.bf16.gmra.mxu0 %v882
  %v932 = vpop.f32.mrf.mxu0
  %v933 = vadd.f32 0.0, %v932
  %v934 = vpop.f32.mrf.mxu0
  %v935 = vadd.f32 0.0, %v934
  %936 = vdwg.mxu0
  %v937 = vpack.c.bf16 %v828, %v827
  %v938 = vpack.c.bf16 %v830, %v829
  %v939 = vpack.c.bf16 %v832, %v831
  %v940 = vpack.c.bf16 %v834, %v833
  %v941 = vpack.c.bf16 %v836, %v835
  %v942 = vpack.c.bf16 %v838, %v837
  %v943 = vpack.c.bf16 %v840, %v839
  %v944 = vpack.c.bf16 %v842, %v841
  %v945 = vpack.c.bf16 %v900, %v898
  %v946 = vpack.c.bf16 %v905, %v903
  %v947 = vpack.c.bf16 %v910, %v908
  %v948 = vpack.c.bf16 %v915, %v913
  %v949 = vpack.c.bf16 %v920, %v918
  %v950 = vpack.c.bf16 %v925, %v923
  %v951 = vpack.c.bf16 %v930, %v928
  %v952 = vpack.c.bf16 %v935, %v933
  %s953 = scalar_lea.vmem %s1, 128
  %v954 = vld [vmem:[%s953] sm:$0xff]
  %v955 = vld [vmem:[%s953 + $0x8] sm:$0xff]
  %v956 = vld [vmem:[%s953 + $0x10] sm:$0xff]
  %v957 = vld [vmem:[%s953 + $0x18] sm:$0xff]
  %v958 = vld [vmem:[%s953 + $0x20] sm:$0xff]
  %v959 = vld [vmem:[%s953 + $0x28] sm:$0xff]
  %v960 = vld [vmem:[%s953 + $0x30] sm:$0xff]
  %v961 = vld [vmem:[%s953 + $0x38] sm:$0xff]
  %v962 = vld [vmem:[%s953 + $0x40] sm:$0xff]
  %v963 = vld [vmem:[%s953 + $0x48] sm:$0xff]
  %v964 = vld [vmem:[%s953 + $0x50] sm:$0xff]
  %v965 = vld [vmem:[%s953 + $0x58] sm:$0xff]
  %v966 = vld [vmem:[%s953 + $0x60] sm:$0xff]
  %v967 = vld [vmem:[%s953 + $0x68] sm:$0xff]
  %v968 = vld [vmem:[%s953 + $0x70] sm:$0xff]
  %v969 = vld [vmem:[%s953 + $0x78] sm:$0xff]
  %970 = vrot.lane.b32.xlu0 %v577, 120
  %v971 = vpop.permute.xlu0 %970
  %972 = vrot.lane.b32.xlu0 %v578, 120
  %v973 = vpop.permute.xlu0 %972
  %974 = vrot.lane.b32.xlu0 %v579, 120
  %v975 = vpop.permute.xlu0 %974
  %976 = vrot.lane.b32.xlu0 %v580, 120
  %v977 = vpop.permute.xlu0 %976
  %978 = vrot.lane.b32.xlu0 %v581, 120
  %v979 = vpop.permute.xlu0 %978
  %980 = vrot.lane.b32.xlu0 %v582, 120
  %v981 = vpop.permute.xlu0 %980
  %982 = vrot.lane.b32.xlu0 %v583, 120
  %v983 = vpop.permute.xlu0 %982
  %984 = vrot.lane.b32.xlu0 %v584, 120
  %v985 = vpop.permute.xlu0 %984
  %986 = vrot.lane.b32.xlu0 %v577, 88
  %v987 = vpop.permute.xlu0 %986
  %988 = vrot.lane.b32.xlu0 %v578, 88
  %v989 = vpop.permute.xlu0 %988
  %990 = vrot.lane.b32.xlu0 %v579, 88
  %v991 = vpop.permute.xlu0 %990
  %992 = vrot.lane.b32.xlu0 %v580, 88
  %v993 = vpop.permute.xlu0 %992
  %994 = vrot.lane.b32.xlu0 %v581, 88
  %v995 = vpop.permute.xlu0 %994
  %996 = vrot.lane.b32.xlu0 %v582, 88
  %v997 = vpop.permute.xlu0 %996
  %998 = vrot.lane.b32.xlu0 %v583, 88
  %v999 = vpop.permute.xlu0 %998
  %1000 = vrot.lane.b32.xlu0 %v584, 88
  %v1001 = vpop.permute.xlu0 %1000
  %v1003 = vsel %vm601, %v971, 0
  %v1006 = vsel %vm601, %v973, 0
  %v1009 = vsel %vm601, %v975, 0
  %v1012 = vsel %vm601, %v977, 0
  %v1015 = vsel %vm601, %v979, 0
  %v1018 = vsel %vm601, %v981, 0
  %v1021 = vsel %vm601, %v983, 0
  %v1024 = vsel %vm601, %v985, 0
  %v1027 = vsel %vm601, %v987, 0
  %v1030 = vsel %vm601, %v989, 0
  %v1033 = vsel %vm601, %v991, 0
  %v1036 = vsel %vm601, %v993, 0
  %v1039 = vsel %vm601, %v995, 0
  %v1042 = vsel %vm601, %v997, 0
  %v1045 = vsel %vm601, %v999, 0
  %v1048 = vsel %vm601, %v1001, 0
  %1050 = vmatpush.bf16.xpose.msra.mxu0 %v1048
  %1051 = vmatpush.bf16.xpose.msra.mxu0 %v1045
  %1052 = vmatpush.bf16.xpose.msra.mxu0 %v1042
  %1053 = vmatpush.bf16.xpose.msra.mxu0 %v1039
  %1054 = vmatpush.bf16.xpose.msra.mxu0 %v1036
  %1055 = vmatpush.bf16.xpose.msra.mxu0 %v1033
  %1056 = vmatpush.bf16.xpose.msra.mxu0 %v1030
  %1057 = vmatpush.bf16.xpose.msra.mxu0 %v1027
  %1058 = vmatmul.bf16.gmra.mxu0 %v1003
  %v1059 = vpop.f32.mrf.mxu0
  %v1060 = vadd.f32 %v954, %v1059
  %v1061 = vpop.f32.mrf.mxu0
  %v1062 = vadd.f32 %v955, %v1061
  %1063 = vmatmul.bf16.gmra.mxu0 %v1006
  %v1064 = vpop.f32.mrf.mxu0
  %v1065 = vadd.f32 %v956, %v1064
  %v1066 = vpop.f32.mrf.mxu0
  %v1067 = vadd.f32 %v957, %v1066
  %1068 = vmatmul.bf16.gmra.mxu0 %v1009
  %v1069 = vpop.f32.mrf.mxu0
  %v1070 = vadd.f32 %v958, %v1069
  %v1071 = vpop.f32.mrf.mxu0
  %v1072 = vadd.f32 %v959, %v1071
  %1073 = vmatmul.bf16.gmra.mxu0 %v1012
  %v1074 = vpop.f32.mrf.mxu0
  %v1075 = vadd.f32 %v960, %v1074
  %v1076 = vpop.f32.mrf.mxu0
  %v1077 = vadd.f32 %v961, %v1076
  %1078 = vmatmul.bf16.gmra.mxu0 %v1015
  %v1079 = vpop.f32.mrf.mxu0
  %v1080 = vadd.f32 %v962, %v1079
  %v1081 = vpop.f32.mrf.mxu0
  %v1082 = vadd.f32 %v963, %v1081
  %1083 = vmatmul.bf16.gmra.mxu0 %v1018
  %v1084 = vpop.f32.mrf.mxu0
  %v1085 = vadd.f32 %v964, %v1084
  %v1086 = vpop.f32.mrf.mxu0
  %v1087 = vadd.f32 %v965, %v1086
  %1088 = vmatmul.bf16.gmra.mxu0 %v1021
  %v1089 = vpop.f32.mrf.mxu0
  %v1090 = vadd.f32 %v966, %v1089
  %v1091 = vpop.f32.mrf.mxu0
  %v1092 = vadd.f32 %v967, %v1091
  %1093 = vmatmul.bf16.gmra.mxu0 %v1024
  %v1094 = vpop.f32.mrf.mxu0
  %v1095 = vadd.f32 %v968, %v1094
  %v1096 = vpop.f32.mrf.mxu0
  %v1097 = vadd.f32 %v969, %v1096
  %1098 = vdwg.mxu0
  %1099 = vmax.xlane.f32.xlu0 %v1060
  %v1100 = vpop.xlane.xlu0 %1099
  %1101 = vmax.xlane.f32.xlu0 %v1062
  %v1102 = vpop.xlane.xlu0 %1101
  %1103 = vmax.xlane.f32.xlu0 %v1065
  %v1104 = vpop.xlane.xlu0 %1103
  %1105 = vmax.xlane.f32.xlu0 %v1067
  %v1106 = vpop.xlane.xlu0 %1105
  %1107 = vmax.xlane.f32.xlu0 %v1070
  %v1108 = vpop.xlane.xlu0 %1107
  %1109 = vmax.xlane.f32.xlu0 %v1072
  %v1110 = vpop.xlane.xlu0 %1109
  %1111 = vmax.xlane.f32.xlu0 %v1075
  %v1112 = vpop.xlane.xlu0 %1111
  %1113 = vmax.xlane.f32.xlu0 %v1077
  %v1114 = vpop.xlane.xlu0 %1113
  %1115 = vmax.xlane.f32.xlu0 %v1080
  %v1116 = vpop.xlane.xlu0 %1115
  %1117 = vmax.xlane.f32.xlu0 %v1082
  %v1118 = vpop.xlane.xlu0 %1117
  %1119 = vmax.xlane.f32.xlu0 %v1085
  %v1120 = vpop.xlane.xlu0 %1119
  %1121 = vmax.xlane.f32.xlu0 %v1087
  %v1122 = vpop.xlane.xlu0 %1121
  %1123 = vmax.xlane.f32.xlu0 %v1090
  %v1124 = vpop.xlane.xlu0 %1123
  %1125 = vmax.xlane.f32.xlu0 %v1092
  %v1126 = vpop.xlane.xlu0 %1125
  %1127 = vmax.xlane.f32.xlu0 %v1095
  %v1128 = vpop.xlane.xlu0 %1127
  %1129 = vmax.xlane.f32.xlu0 %v1097
  %v1130 = vpop.xlane.xlu0 %1129
  %v1131 = vsub.f32 %v1060, %v1100
  %v1132 = vsub.f32 %v1062, %v1102
  %v1133 = vsub.f32 %v1065, %v1104
  %v1134 = vsub.f32 %v1067, %v1106
  %v1135 = vsub.f32 %v1070, %v1108
  %v1136 = vsub.f32 %v1072, %v1110
  %v1137 = vsub.f32 %v1075, %v1112
  %v1138 = vsub.f32 %v1077, %v1114
  %v1139 = vsub.f32 %v1080, %v1116
  %v1140 = vsub.f32 %v1082, %v1118
  %v1141 = vsub.f32 %v1085, %v1120
  %v1142 = vsub.f32 %v1087, %v1122
  %v1143 = vsub.f32 %v1090, %v1124
  %v1144 = vsub.f32 %v1092, %v1126
  %v1145 = vsub.f32 %v1095, %v1128
  %v1146 = vsub.f32 %v1097, %v1130
  %v1147 = vmul.f32 %v1131, 1.442695
  %v1148 = vpow.pop %v1147
  %v1149 = vmul.f32 %v1132, 1.442695
  %v1150 = vpow.pop %v1149
  %v1151 = vmul.f32 %v1133, 1.442695
  %v1152 = vpow.pop %v1151
  %v1153 = vmul.f32 %v1134, 1.442695
  %v1154 = vpow.pop %v1153
  %v1155 = vmul.f32 %v1135, 1.442695
  %v1156 = vpow.pop %v1155
  %v1157 = vmul.f32 %v1136, 1.442695
  %v1158 = vpow.pop %v1157
  %v1159 = vmul.f32 %v1137, 1.442695
  %v1160 = vpow.pop %v1159
  %v1161 = vmul.f32 %v1138, 1.442695
  %v1162 = vpow.pop %v1161
  %v1163 = vmul.f32 %v1139, 1.442695
  %v1164 = vpow.pop %v1163
  %v1165 = vmul.f32 %v1140, 1.442695
  %v1166 = vpow.pop %v1165
  %v1167 = vmul.f32 %v1141, 1.442695
  %v1168 = vpow.pop %v1167
  %v1169 = vmul.f32 %v1142, 1.442695
  %v1170 = vpow.pop %v1169
  %v1171 = vmul.f32 %v1143, 1.442695
  %v1172 = vpow.pop %v1171
  %v1173 = vmul.f32 %v1144, 1.442695
  %v1174 = vpow.pop %v1173
  %v1175 = vmul.f32 %v1145, 1.442695
  %v1176 = vpow.pop %v1175
  %v1177 = vmul.f32 %v1146, 1.442695
  %v1178 = vpow.pop %v1177
  %1179 = vadd.xlane.f32.xlu0 %v1148
  %v1180 = vpop.xlane.xlu0 %1179
  %1181 = vadd.xlane.f32.xlu0 %v1150
  %v1182 = vpop.xlane.xlu0 %1181
  %1183 = vadd.xlane.f32.xlu0 %v1152
  %v1184 = vpop.xlane.xlu0 %1183
  %1185 = vadd.xlane.f32.xlu0 %v1154
  %v1186 = vpop.xlane.xlu0 %1185
  %1187 = vadd.xlane.f32.xlu0 %v1156
  %v1188 = vpop.xlane.xlu0 %1187
  %1189 = vadd.xlane.f32.xlu0 %v1158
  %v1190 = vpop.xlane.xlu0 %1189
  %1191 = vadd.xlane.f32.xlu0 %v1160
  %v1192 = vpop.xlane.xlu0 %1191
  %1193 = vadd.xlane.f32.xlu0 %v1162
  %v1194 = vpop.xlane.xlu0 %1193
  %1195 = vadd.xlane.f32.xlu0 %v1164
  %v1196 = vpop.xlane.xlu0 %1195
  %1197 = vadd.xlane.f32.xlu0 %v1166
  %v1198 = vpop.xlane.xlu0 %1197
  %1199 = vadd.xlane.f32.xlu0 %v1168
  %v1200 = vpop.xlane.xlu0 %1199
  %1201 = vadd.xlane.f32.xlu0 %v1170
  %v1202 = vpop.xlane.xlu0 %1201
  %1203 = vadd.xlane.f32.xlu0 %v1172
  %v1204 = vpop.xlane.xlu0 %1203
  %1205 = vadd.xlane.f32.xlu0 %v1174
  %v1206 = vpop.xlane.xlu0 %1205
  %1207 = vadd.xlane.f32.xlu0 %v1176
  %v1208 = vpop.xlane.xlu0 %1207
  %1209 = vadd.xlane.f32.xlu0 %v1178
  %v1210 = vpop.xlane.xlu0 %1209
  %v1211 = vrcp.pop %v1180
  %v1212 = vrcp.pop %v1182
  %v1213 = vrcp.pop %v1184
  %v1214 = vrcp.pop %v1186
  %v1215 = vrcp.pop %v1188
  %v1216 = vrcp.pop %v1190
  %v1217 = vrcp.pop %v1192
  %v1218 = vrcp.pop %v1194
  %v1219 = vrcp.pop %v1196
  %v1220 = vrcp.pop %v1198
  %v1221 = vrcp.pop %v1200
  %v1222 = vrcp.pop %v1202
  %v1223 = vrcp.pop %v1204
  %v1224 = vrcp.pop %v1206
  %v1225 = vrcp.pop %v1208
  %v1226 = vrcp.pop %v1210
  %v1227 = vmul.f32 %v1148, %v1211
  %v1228 = vmul.f32 %v1150, %v1212
  %v1229 = vmul.f32 %v1152, %v1213
  %v1230 = vmul.f32 %v1154, %v1214
  %v1231 = vmul.f32 %v1156, %v1215
  %v1232 = vmul.f32 %v1158, %v1216
  %v1233 = vmul.f32 %v1160, %v1217
  %v1234 = vmul.f32 %v1162, %v1218
  %v1235 = vmul.f32 %v1164, %v1219
  %v1236 = vmul.f32 %v1166, %v1220
  %v1237 = vmul.f32 %v1168, %v1221
  %v1238 = vmul.f32 %v1170, %v1222
  %v1239 = vmul.f32 %v1172, %v1223
  %v1240 = vmul.f32 %v1174, %v1224
  %v1241 = vmul.f32 %v1176, %v1225
  %v1242 = vmul.f32 %v1178, %v1226
  %s1243 = scalar_lea.vmem %s4, 4
  %v1244 = vld [vmem:[%s1243] sm:$0xf]
  %1245 = vrot.lane.b32.xlu0 %v577, 56
  %v1246 = vpop.permute.xlu0 %1245
  %1247 = vrot.lane.b32.xlu0 %v578, 56
  %v1248 = vpop.permute.xlu0 %1247
  %1249 = vrot.lane.b32.xlu0 %v579, 56
  %v1250 = vpop.permute.xlu0 %1249
  %1251 = vrot.lane.b32.xlu0 %v580, 56
  %v1252 = vpop.permute.xlu0 %1251
  %1253 = vrot.lane.b32.xlu0 %v581, 56
  %v1254 = vpop.permute.xlu0 %1253
  %1255 = vrot.lane.b32.xlu0 %v582, 56
  %v1256 = vpop.permute.xlu0 %1255
  %1257 = vrot.lane.b32.xlu0 %v583, 56
  %v1258 = vpop.permute.xlu0 %1257
  %1259 = vrot.lane.b32.xlu0 %v584, 56
  %v1260 = vpop.permute.xlu0 %1259
  %v1262 = vsel %vm601, %v1246, 0
  %v1265 = vsel %vm601, %v1248, 0
  %v1268 = vsel %vm601, %v1250, 0
  %v1271 = vsel %vm601, %v1252, 0
  %v1274 = vsel %vm601, %v1254, 0
  %v1277 = vsel %vm601, %v1256, 0
  %v1280 = vsel %vm601, %v1258, 0
  %v1283 = vsel %vm601, %v1260, 0
  %v1286 = vsel %vm884, %v1244, 0
  %1288 = vmatpush.bf16.msra.mxu0 0
  %1289 = vmatpush.bf16.msra.mxu0 0
  %1290 = vmatpush.bf16.msra.mxu0 0
  %1291 = vmatpush.bf16.msra.mxu0 0
  %1292 = vmatpush.bf16.msra.mxu0 0
  %1293 = vmatpush.bf16.msra.mxu0 0
  %1294 = vmatpush.bf16.msra.mxu0 0
  %1295 = vmatpush.bf16.msra.mxu0 %v1286
  %1296 = vmatmul.bf16.gmra.mxu0 %v1262
  %v1297 = vpop.f32.mrf.mxu0
  %v1298 = vadd.f32 0.0, %v1297
  %v1299 = vpop.f32.mrf.mxu0
  %v1300 = vadd.f32 0.0, %v1299
  %1301 = vmatmul.bf16.gmra.mxu0 %v1265
  %v1302 = vpop.f32.mrf.mxu0
  %v1303 = vadd.f32 0.0, %v1302
  %v1304 = vpop.f32.mrf.mxu0
  %v1305 = vadd.f32 0.0, %v1304
  %1306 = vmatmul.bf16.gmra.mxu0 %v1268
  %v1307 = vpop.f32.mrf.mxu0
  %v1308 = vadd.f32 0.0, %v1307
  %v1309 = vpop.f32.mrf.mxu0
  %v1310 = vadd.f32 0.0, %v1309
  %1311 = vmatmul.bf16.gmra.mxu0 %v1271
  %v1312 = vpop.f32.mrf.mxu0
  %v1313 = vadd.f32 0.0, %v1312
  %v1314 = vpop.f32.mrf.mxu0
  %v1315 = vadd.f32 0.0, %v1314
  %1316 = vmatmul.bf16.gmra.mxu0 %v1274
  %v1317 = vpop.f32.mrf.mxu0
  %v1318 = vadd.f32 0.0, %v1317
  %v1319 = vpop.f32.mrf.mxu0
  %v1320 = vadd.f32 0.0, %v1319
  %1321 = vmatmul.bf16.gmra.mxu0 %v1277
  %v1322 = vpop.f32.mrf.mxu0
  %v1323 = vadd.f32 0.0, %v1322
  %v1324 = vpop.f32.mrf.mxu0
  %v1325 = vadd.f32 0.0, %v1324
  %1326 = vmatmul.bf16.gmra.mxu0 %v1280
  %v1327 = vpop.f32.mrf.mxu0
  %v1328 = vadd.f32 0.0, %v1327
  %v1329 = vpop.f32.mrf.mxu0
  %v1330 = vadd.f32 0.0, %v1329
  %1331 = vmatmul.bf16.gmra.mxu0 %v1283
  %v1332 = vpop.f32.mrf.mxu0
  %v1333 = vadd.f32 0.0, %v1332
  %v1334 = vpop.f32.mrf.mxu0
  %v1335 = vadd.f32 0.0, %v1334
  %1336 = vdwg.mxu0
  %v1337 = vpack.c.bf16 %v1228, %v1227
  %v1338 = vpack.c.bf16 %v1230, %v1229
  %v1339 = vpack.c.bf16 %v1232, %v1231
  %v1340 = vpack.c.bf16 %v1234, %v1233
  %v1341 = vpack.c.bf16 %v1236, %v1235
  %v1342 = vpack.c.bf16 %v1238, %v1237
  %v1343 = vpack.c.bf16 %v1240, %v1239
  %v1344 = vpack.c.bf16 %v1242, %v1241
  %v1345 = vpack.c.bf16 %v1300, %v1298
  %v1346 = vpack.c.bf16 %v1305, %v1303
  %v1347 = vpack.c.bf16 %v1310, %v1308
  %v1348 = vpack.c.bf16 %v1315, %v1313
  %v1349 = vpack.c.bf16 %v1320, %v1318
  %v1350 = vpack.c.bf16 %v1325, %v1323
  %v1351 = vpack.c.bf16 %v1330, %v1328
  %v1352 = vpack.c.bf16 %v1335, %v1333
  %1353 = vmatpush.bf16.msra.mxu0 %v1352
  %1354 = vmatpush.bf16.msra.mxu0 %v1351
  %1355 = vmatpush.bf16.msra.mxu0 %v1350
  %1356 = vmatpush.bf16.msra.mxu0 %v1349
  %1357 = vmatpush.bf16.msra.mxu0 %v1348
  %1358 = vmatpush.bf16.msra.mxu0 %v1347
  %1359 = vmatpush.bf16.msra.mxu0 %v1346
  %1360 = vmatpush.bf16.msra.mxu0 %v1345
  %1361 = vmatmul.bf16.gmra.mxu0 %v1337
  %v1362 = vpop.f32.mrf.mxu0
  %v1363 = vadd.f32 0.0, %v1362
  %v1364 = vpop.f32.mrf.mxu0
  %v1365 = vadd.f32 0.0, %v1364
  %1366 = vmatmul.bf16.gmra.mxu0 %v1338
  %v1367 = vpop.f32.mrf.mxu0
  %v1368 = vadd.f32 0.0, %v1367
  %v1369 = vpop.f32.mrf.mxu0
  %v1370 = vadd.f32 0.0, %v1369
  %1371 = vmatmul.bf16.gmra.mxu0 %v1339
  %v1372 = vpop.f32.mrf.mxu0
  %v1373 = vadd.f32 0.0, %v1372
  %v1374 = vpop.f32.mrf.mxu0
  %v1375 = vadd.f32 0.0, %v1374
  %1376 = vmatmul.bf16.gmra.mxu0 %v1340
  %v1377 = vpop.f32.mrf.mxu0
  %v1378 = vadd.f32 0.0, %v1377
  %v1379 = vpop.f32.mrf.mxu0
  %v1380 = vadd.f32 0.0, %v1379
  %1381 = vmatmul.bf16.gmra.mxu0 %v1341
  %v1382 = vpop.f32.mrf.mxu0
  %v1383 = vadd.f32 0.0, %v1382
  %v1384 = vpop.f32.mrf.mxu0
  %v1385 = vadd.f32 0.0, %v1384
  %1386 = vmatmul.bf16.gmra.mxu0 %v1342
  %v1387 = vpop.f32.mrf.mxu0
  %v1388 = vadd.f32 0.0, %v1387
  %v1389 = vpop.f32.mrf.mxu0
  %v1390 = vadd.f32 0.0, %v1389
  %1391 = vmatmul.bf16.gmra.mxu0 %v1343
  %v1392 = vpop.f32.mrf.mxu0
  %v1393 = vadd.f32 0.0, %v1392
  %v1394 = vpop.f32.mrf.mxu0
  %v1395 = vadd.f32 0.0, %v1394
  %1396 = vmatmul.bf16.gmra.mxu0 %v1344
  %v1397 = vpop.f32.mrf.mxu0
  %v1398 = vadd.f32 0.0, %v1397
  %v1399 = vpop.f32.mrf.mxu0
  %v1400 = vadd.f32 0.0, %v1399
  %1401 = vdwg.mxu0
  %1402 = vmatpush.bf16.msra.mxu0 %v952
  %1403 = vmatpush.bf16.msra.mxu0 %v951
  %1404 = vmatpush.bf16.msra.mxu0 %v950
  %1405 = vmatpush.bf16.msra.mxu0 %v949
  %1406 = vmatpush.bf16.msra.mxu0 %v948
  %1407 = vmatpush.bf16.msra.mxu0 %v947
  %1408 = vmatpush.bf16.msra.mxu0 %v946
  %1409 = vmatpush.bf16.msra.mxu0 %v945
  %1410 = vmatmul.bf16.gmra.mxu0 %v937
  %v1411 = vpop.f32.mrf.mxu0
  %v1412 = vadd.f32 %v1363, %v1411
  %v1413 = vpop.f32.mrf.mxu0
  %v1414 = vadd.f32 %v1365, %v1413
  %1415 = vmatmul.bf16.gmra.mxu0 %v938
  %v1416 = vpop.f32.mrf.mxu0
  %v1417 = vadd.f32 %v1368, %v1416
  %v1418 = vpop.f32.mrf.mxu0
  %v1419 = vadd.f32 %v1370, %v1418
  %1420 = vmatmul.bf16.gmra.mxu0 %v939
  %v1421 = vpop.f32.mrf.mxu0
  %v1422 = vadd.f32 %v1373, %v1421
  %v1423 = vpop.f32.mrf.mxu0
  %v1424 = vadd.f32 %v1375, %v1423
  %1425 = vmatmul.bf16.gmra.mxu0 %v940
  %v1426 = vpop.f32.mrf.mxu0
  %v1427 = vadd.f32 %v1378, %v1426
  %v1428 = vpop.f32.mrf.mxu0
  %v1429 = vadd.f32 %v1380, %v1428
  %1430 = vmatmul.bf16.gmra.mxu0 %v941
  %v1431 = vpop.f32.mrf.mxu0
  %v1432 = vadd.f32 %v1383, %v1431
  %v1433 = vpop.f32.mrf.mxu0
  %v1434 = vadd.f32 %v1385, %v1433
  %1435 = vmatmul.bf16.gmra.mxu0 %v942
  %v1436 = vpop.f32.mrf.mxu0
  %v1437 = vadd.f32 %v1388, %v1436
  %v1438 = vpop.f32.mrf.mxu0
  %v1439 = vadd.f32 %v1390, %v1438
  %1440 = vmatmul.bf16.gmra.mxu0 %v943
  %v1441 = vpop.f32.mrf.mxu0
  %v1442 = vadd.f32 %v1393, %v1441
  %v1443 = vpop.f32.mrf.mxu0
  %v1444 = vadd.f32 %v1395, %v1443
  %1445 = vmatmul.bf16.gmra.mxu0 %v944
  %v1446 = vpop.f32.mrf.mxu0
  %v1447 = vadd.f32 %v1398, %v1446
  %v1448 = vpop.f32.mrf.mxu0
  %v1449 = vadd.f32 %v1400, %v1448
  %1450 = vdwg.mxu0
  %s1451 = scalar_lea.vmem %s1, 256
  %v1452 = vld [vmem:[%s1451] sm:$0xff]
  %v1453 = vld [vmem:[%s1451 + $0x8] sm:$0xff]
  %v1454 = vld [vmem:[%s1451 + $0x10] sm:$0xff]
  %v1455 = vld [vmem:[%s1451 + $0x18] sm:$0xff]
  %v1456 = vld [vmem:[%s1451 + $0x20] sm:$0xff]
  %v1457 = vld [vmem:[%s1451 + $0x28] sm:$0xff]
  %v1458 = vld [vmem:[%s1451 + $0x30] sm:$0xff]
  %v1459 = vld [vmem:[%s1451 + $0x38] sm:$0xff]
  %v1460 = vld [vmem:[%s1451 + $0x40] sm:$0xff]
  %v1461 = vld [vmem:[%s1451 + $0x48] sm:$0xff]
  %v1462 = vld [vmem:[%s1451 + $0x50] sm:$0xff]
  %v1463 = vld [vmem:[%s1451 + $0x58] sm:$0xff]
  %v1464 = vld [vmem:[%s1451 + $0x60] sm:$0xff]
  %v1465 = vld [vmem:[%s1451 + $0x68] sm:$0xff]
  %v1466 = vld [vmem:[%s1451 + $0x70] sm:$0xff]
  %v1467 = vld [vmem:[%s1451 + $0x78] sm:$0xff]
  %1468 = vrot.lane.b32.xlu0 %v577, 112
  %v1469 = vpop.permute.xlu0 %1468
  %1470 = vrot.lane.b32.xlu0 %v578, 112
  %v1471 = vpop.permute.xlu0 %1470
  %1472 = vrot.lane.b32.xlu0 %v579, 112
  %v1473 = vpop.permute.xlu0 %1472
  %1474 = vrot.lane.b32.xlu0 %v580, 112
  %v1475 = vpop.permute.xlu0 %1474
  %1476 = vrot.lane.b32.xlu0 %v581, 112
  %v1477 = vpop.permute.xlu0 %1476
  %1478 = vrot.lane.b32.xlu0 %v582, 112
  %v1479 = vpop.permute.xlu0 %1478
  %1480 = vrot.lane.b32.xlu0 %v583, 112
  %v1481 = vpop.permute.xlu0 %1480
  %1482 = vrot.lane.b32.xlu0 %v584, 112
  %v1483 = vpop.permute.xlu0 %1482
  %1484 = vrot.lane.b32.xlu0 %v577, 80
  %v1485 = vpop.permute.xlu0 %1484
  %1486 = vrot.lane.b32.xlu0 %v578, 80
  %v1487 = vpop.permute.xlu0 %1486
  %1488 = vrot.lane.b32.xlu0 %v579, 80
  %v1489 = vpop.permute.xlu0 %1488
  %1490 = vrot.lane.b32.xlu0 %v580, 80
  %v1491 = vpop.permute.xlu0 %1490
  %1492 = vrot.lane.b32.xlu0 %v581, 80
  %v1493 = vpop.permute.xlu0 %1492
  %1494 = vrot.lane.b32.xlu0 %v582, 80
  %v1495 = vpop.permute.xlu0 %1494
  %1496 = vrot.lane.b32.xlu0 %v583, 80
  %v1497 = vpop.permute.xlu0 %1496
  %1498 = vrot.lane.b32.xlu0 %v584, 80
  %v1499 = vpop.permute.xlu0 %1498
  %v1501 = vsel %vm601, %v1469, 0
  %v1504 = vsel %vm601, %v1471, 0
  %v1507 = vsel %vm601, %v1473, 0
  %v1510 = vsel %vm601, %v1475, 0
  %v1513 = vsel %vm601, %v1477, 0
  %v1516 = vsel %vm601, %v1479, 0
  %v1519 = vsel %vm601, %v1481, 0
  %v1522 = vsel %vm601, %v1483, 0
  %v1525 = vsel %vm601, %v1485, 0
  %v1528 = vsel %vm601, %v1487, 0
  %v1531 = vsel %vm601, %v1489, 0
  %v1534 = vsel %vm601, %v1491, 0
  %v1537 = vsel %vm601, %v1493, 0
  %v1540 = vsel %vm601, %v1495, 0
  %v1543 = vsel %vm601, %v1497, 0
  %v1546 = vsel %vm601, %v1499, 0
  %1548 = vmatpush.bf16.xpose.msra.mxu0 %v1546
  %1549 = vmatpush.bf16.xpose.msra.mxu0 %v1543
  %1550 = vmatpush.bf16.xpose.msra.mxu0 %v1540
  %1551 = vmatpush.bf16.xpose.msra.mxu0 %v1537
  %1552 = vmatpush.bf16.xpose.msra.mxu0 %v1534
  %1553 = vmatpush.bf16.xpose.msra.mxu0 %v1531
  %1554 = vmatpush.bf16.xpose.msra.mxu0 %v1528
  %1555 = vmatpush.bf16.xpose.msra.mxu0 %v1525
  %1556 = vmatmul.bf16.gmra.mxu0 %v1501
  %v1557 = vpop.f32.mrf.mxu0
  %v1558 = vadd.f32 %v1452, %v1557
  %v1559 = vpop.f32.mrf.mxu0
  %v1560 = vadd.f32 %v1453, %v1559
  %1561 = vmatmul.bf16.gmra.mxu0 %v1504
  %v1562 = vpop.f32.mrf.mxu0
  %v1563 = vadd.f32 %v1454, %v1562
  %v1564 = vpop.f32.mrf.mxu0
  %v1565 = vadd.f32 %v1455, %v1564
  %1566 = vmatmul.bf16.gmra.mxu0 %v1507
  %v1567 = vpop.f32.mrf.mxu0
  %v1568 = vadd.f32 %v1456, %v1567
  %v1569 = vpop.f32.mrf.mxu0
  %v1570 = vadd.f32 %v1457, %v1569
  %1571 = vmatmul.bf16.gmra.mxu0 %v1510
  %v1572 = vpop.f32.mrf.mxu0
  %v1573 = vadd.f32 %v1458, %v1572
  %v1574 = vpop.f32.mrf.mxu0
  %v1575 = vadd.f32 %v1459, %v1574
  %1576 = vmatmul.bf16.gmra.mxu0 %v1513
  %v1577 = vpop.f32.mrf.mxu0
  %v1578 = vadd.f32 %v1460, %v1577
  %v1579 = vpop.f32.mrf.mxu0
  %v1580 = vadd.f32 %v1461, %v1579
  %1581 = vmatmul.bf16.gmra.mxu0 %v1516
  %v1582 = vpop.f32.mrf.mxu0
  %v1583 = vadd.f32 %v1462, %v1582
  %v1584 = vpop.f32.mrf.mxu0
  %v1585 = vadd.f32 %v1463, %v1584
  %1586 = vmatmul.bf16.gmra.mxu0 %v1519
  %v1587 = vpop.f32.mrf.mxu0
  %v1588 = vadd.f32 %v1464, %v1587
  %v1589 = vpop.f32.mrf.mxu0
  %v1590 = vadd.f32 %v1465, %v1589
  %1591 = vmatmul.bf16.gmra.mxu0 %v1522
  %v1592 = vpop.f32.mrf.mxu0
  %v1593 = vadd.f32 %v1466, %v1592
  %v1594 = vpop.f32.mrf.mxu0
  %v1595 = vadd.f32 %v1467, %v1594
  %1596 = vdwg.mxu0
  %1597 = vmax.xlane.f32.xlu0 %v1558
  %v1598 = vpop.xlane.xlu0 %1597
  %1599 = vmax.xlane.f32.xlu0 %v1560
  %v1600 = vpop.xlane.xlu0 %1599
  %1601 = vmax.xlane.f32.xlu0 %v1563
  %v1602 = vpop.xlane.xlu0 %1601
  %1603 = vmax.xlane.f32.xlu0 %v1565
  %v1604 = vpop.xlane.xlu0 %1603
  %1605 = vmax.xlane.f32.xlu0 %v1568
  %v1606 = vpop.xlane.xlu0 %1605
  %1607 = vmax.xlane.f32.xlu0 %v1570
  %v1608 = vpop.xlane.xlu0 %1607
  %1609 = vmax.xlane.f32.xlu0 %v1573
  %v1610 = vpop.xlane.xlu0 %1609
  %1611 = vmax.xlane.f32.xlu0 %v1575
  %v1612 = vpop.xlane.xlu0 %1611
  %1613 = vmax.xlane.f32.xlu0 %v1578
  %v1614 = vpop.xlane.xlu0 %1613
  %1615 = vmax.xlane.f32.xlu0 %v1580
  %v1616 = vpop.xlane.xlu0 %1615
  %1617 = vmax.xlane.f32.xlu0 %v1583
  %v1618 = vpop.xlane.xlu0 %1617
  %1619 = vmax.xlane.f32.xlu0 %v1585
  %v1620 = vpop.xlane.xlu0 %1619
  %1621 = vmax.xlane.f32.xlu0 %v1588
  %v1622 = vpop.xlane.xlu0 %1621
  %1623 = vmax.xlane.f32.xlu0 %v1590
  %v1624 = vpop.xlane.xlu0 %1623
  %1625 = vmax.xlane.f32.xlu0 %v1593
  %v1626 = vpop.xlane.xlu0 %1625
  %1627 = vmax.xlane.f32.xlu0 %v1595
  %v1628 = vpop.xlane.xlu0 %1627
  %v1629 = vsub.f32 %v1558, %v1598
  %v1630 = vsub.f32 %v1560, %v1600
  %v1631 = vsub.f32 %v1563, %v1602
  %v1632 = vsub.f32 %v1565, %v1604
  %v1633 = vsub.f32 %v1568, %v1606
  %v1634 = vsub.f32 %v1570, %v1608
  %v1635 = vsub.f32 %v1573, %v1610
  %v1636 = vsub.f32 %v1575, %v1612
  %v1637 = vsub.f32 %v1578, %v1614
  %v1638 = vsub.f32 %v1580, %v1616
  %v1639 = vsub.f32 %v1583, %v1618
  %v1640 = vsub.f32 %v1585, %v1620
  %v1641 = vsub.f32 %v1588, %v1622
  %v1642 = vsub.f32 %v1590, %v1624
  %v1643 = vsub.f32 %v1593, %v1626
  %v1644 = vsub.f32 %v1595, %v1628
  %v1645 = vmul.f32 %v1629, 1.442695
  %v1646 = vpow.pop %v1645
  %v1647 = vmul.f32 %v1630, 1.442695
  %v1648 = vpow.pop %v1647
  %v1649 = vmul.f32 %v1631, 1.442695
  %v1650 = vpow.pop %v1649
  %v1651 = vmul.f32 %v1632, 1.442695
  %v1652 = vpow.pop %v1651
  %v1653 = vmul.f32 %v1633, 1.442695
  %v1654 = vpow.pop %v1653
  %v1655 = vmul.f32 %v1634, 1.442695
  %v1656 = vpow.pop %v1655
  %v1657 = vmul.f32 %v1635, 1.442695
  %v1658 = vpow.pop %v1657
  %v1659 = vmul.f32 %v1636, 1.442695
  %v1660 = vpow.pop %v1659
  %v1661 = vmul.f32 %v1637, 1.442695
  %v1662 = vpow.pop %v1661
  %v1663 = vmul.f32 %v1638, 1.442695
  %v1664 = vpow.pop %v1663
  %v1665 = vmul.f32 %v1639, 1.442695
  %v1666 = vpow.pop %v1665
  %v1667 = vmul.f32 %v1640, 1.442695
  %v1668 = vpow.pop %v1667
  %v1669 = vmul.f32 %v1641, 1.442695
  %v1670 = vpow.pop %v1669
  %v1671 = vmul.f32 %v1642, 1.442695
  %v1672 = vpow.pop %v1671
  %v1673 = vmul.f32 %v1643, 1.442695
  %v1674 = vpow.pop %v1673
  %v1675 = vmul.f32 %v1644, 1.442695
  %v1676 = vpow.pop %v1675
  %1677 = vadd.xlane.f32.xlu0 %v1646
  %v1678 = vpop.xlane.xlu0 %1677
  %1679 = vadd.xlane.f32.xlu0 %v1648
  %v1680 = vpop.xlane.xlu0 %1679
  %1681 = vadd.xlane.f32.xlu0 %v1650
  %v1682 = vpop.xlane.xlu0 %1681
  %1683 = vadd.xlane.f32.xlu0 %v1652
  %v1684 = vpop.xlane.xlu0 %1683
  %1685 = vadd.xlane.f32.xlu0 %v1654
  %v1686 = vpop.xlane.xlu0 %1685
  %1687 = vadd.xlane.f32.xlu0 %v1656
  %v1688 = vpop.xlane.xlu0 %1687
  %1689 = vadd.xlane.f32.xlu0 %v1658
  %v1690 = vpop.xlane.xlu0 %1689
  %1691 = vadd.xlane.f32.xlu0 %v1660
  %v1692 = vpop.xlane.xlu0 %1691
  %1693 = vadd.xlane.f32.xlu0 %v1662
  %v1694 = vpop.xlane.xlu0 %1693
  %1695 = vadd.xlane.f32.xlu0 %v1664
  %v1696 = vpop.xlane.xlu0 %1695
  %1697 = vadd.xlane.f32.xlu0 %v1666
  %v1698 = vpop.xlane.xlu0 %1697
  %1699 = vadd.xlane.f32.xlu0 %v1668
  %v1700 = vpop.xlane.xlu0 %1699
  %1701 = vadd.xlane.f32.xlu0 %v1670
  %v1702 = vpop.xlane.xlu0 %1701
  %1703 = vadd.xlane.f32.xlu0 %v1672
  %v1704 = vpop.xlane.xlu0 %1703
  %1705 = vadd.xlane.f32.xlu0 %v1674
  %v1706 = vpop.xlane.xlu0 %1705
  %1707 = vadd.xlane.f32.xlu0 %v1676
  %v1708 = vpop.xlane.xlu0 %1707
  %v1709 = vrcp.pop %v1678
  %v1710 = vrcp.pop %v1680
  %v1711 = vrcp.pop %v1682
  %v1712 = vrcp.pop %v1684
  %v1713 = vrcp.pop %v1686
  %v1714 = vrcp.pop %v1688
  %v1715 = vrcp.pop %v1690
  %v1716 = vrcp.pop %v1692
  %v1717 = vrcp.pop %v1694
  %v1718 = vrcp.pop %v1696
  %v1719 = vrcp.pop %v1698
  %v1720 = vrcp.pop %v1700
  %v1721 = vrcp.pop %v1702
  %v1722 = vrcp.pop %v1704
  %v1723 = vrcp.pop %v1706
  %v1724 = vrcp.pop %v1708
  %v1725 = vmul.f32 %v1646, %v1709
  %v1726 = vmul.f32 %v1648, %v1710
  %v1727 = vmul.f32 %v1650, %v1711
  %v1728 = vmul.f32 %v1652, %v1712
  %v1729 = vmul.f32 %v1654, %v1713
  %v1730 = vmul.f32 %v1656, %v1714
  %v1731 = vmul.f32 %v1658, %v1715
  %v1732 = vmul.f32 %v1660, %v1716
  %v1733 = vmul.f32 %v1662, %v1717
  %v1734 = vmul.f32 %v1664, %v1718
  %v1735 = vmul.f32 %v1666, %v1719
  %v1736 = vmul.f32 %v1668, %v1720
  %v1737 = vmul.f32 %v1670, %v1721
  %v1738 = vmul.f32 %v1672, %v1722
  %v1739 = vmul.f32 %v1674, %v1723
  %v1740 = vmul.f32 %v1676, %v1724
  %s1741 = scalar_lea.vmem %s4, 8
  %v1742 = vld [vmem:[%s1741] sm:$0xf]
  %1743 = vrot.lane.b32.xlu0 %v577, 48
  %v1744 = vpop.permute.xlu0 %1743
  %1745 = vrot.lane.b32.xlu0 %v578, 48
  %v1746 = vpop.permute.xlu0 %1745
  %1747 = vrot.lane.b32.xlu0 %v579, 48
  %v1748 = vpop.permute.xlu0 %1747
  %1749 = vrot.lane.b32.xlu0 %v580, 48
  %v1750 = vpop.permute.xlu0 %1749
  %1751 = vrot.lane.b32.xlu0 %v581, 48
  %v1752 = vpop.permute.xlu0 %1751
  %1753 = vrot.lane.b32.xlu0 %v582, 48
  %v1754 = vpop.permute.xlu0 %1753
  %1755 = vrot.lane.b32.xlu0 %v583, 48
  %v1756 = vpop.permute.xlu0 %1755
  %1757 = vrot.lane.b32.xlu0 %v584, 48
  %v1758 = vpop.permute.xlu0 %1757
  %v1760 = vsel %vm601, %v1744, 0
  %v1763 = vsel %vm601, %v1746, 0
  %v1766 = vsel %vm601, %v1748, 0
  %v1769 = vsel %vm601, %v1750, 0
  %v1772 = vsel %vm601, %v1752, 0
  %v1775 = vsel %vm601, %v1754, 0
  %v1778 = vsel %vm601, %v1756, 0
  %v1781 = vsel %vm601, %v1758, 0
  %v1784 = vsel %vm884, %v1742, 0
  %1786 = vmatpush.bf16.msra.mxu0 0
  %1787 = vmatpush.bf16.msra.mxu0 0
  %1788 = vmatpush.bf16.msra.mxu0 0
  %1789 = vmatpush.bf16.msra.mxu0 0
  %1790 = vmatpush.bf16.msra.mxu0 0
  %1791 = vmatpush.bf16.msra.mxu0 0
  %1792 = vmatpush.bf16.msra.mxu0 0
  %1793 = vmatpush.bf16.msra.mxu0 %v1784
  %1794 = vmatmul.bf16.gmra.mxu0 %v1760
  %v1795 = vpop.f32.mrf.mxu0
  %v1796 = vadd.f32 0.0, %v1795
  %v1797 = vpop.f32.mrf.mxu0
  %v1798 = vadd.f32 0.0, %v1797
  %1799 = vmatmul.bf16.gmra.mxu0 %v1763
  %v1800 = vpop.f32.mrf.mxu0
  %v1801 = vadd.f32 0.0, %v1800
  %v1802 = vpop.f32.mrf.mxu0
  %v1803 = vadd.f32 0.0, %v1802
  %1804 = vmatmul.bf16.gmra.mxu0 %v1766
  %v1805 = vpop.f32.mrf.mxu0
  %v1806 = vadd.f32 0.0, %v1805
  %v1807 = vpop.f32.mrf.mxu0
  %v1808 = vadd.f32 0.0, %v1807
  %1809 = vmatmul.bf16.gmra.mxu0 %v1769
  %v1810 = vpop.f32.mrf.mxu0
  %v1811 = vadd.f32 0.0, %v1810
  %v1812 = vpop.f32.mrf.mxu0
  %v1813 = vadd.f32 0.0, %v1812
  %1814 = vmatmul.bf16.gmra.mxu0 %v1772
  %v1815 = vpop.f32.mrf.mxu0
  %v1816 = vadd.f32 0.0, %v1815
  %v1817 = vpop.f32.mrf.mxu0
  %v1818 = vadd.f32 0.0, %v1817
  %1819 = vmatmul.bf16.gmra.mxu0 %v1775
  %v1820 = vpop.f32.mrf.mxu0
  %v1821 = vadd.f32 0.0, %v1820
  %v1822 = vpop.f32.mrf.mxu0
  %v1823 = vadd.f32 0.0, %v1822
  %1824 = vmatmul.bf16.gmra.mxu0 %v1778
  %v1825 = vpop.f32.mrf.mxu0
  %v1826 = vadd.f32 0.0, %v1825
  %v1827 = vpop.f32.mrf.mxu0
  %v1828 = vadd.f32 0.0, %v1827
  %1829 = vmatmul.bf16.gmra.mxu0 %v1781
  %v1830 = vpop.f32.mrf.mxu0
  %v1831 = vadd.f32 0.0, %v1830
  %v1832 = vpop.f32.mrf.mxu0
  %v1833 = vadd.f32 0.0, %v1832
  %1834 = vdwg.mxu0
  %v1835 = vpack.c.bf16 %v1726, %v1725
  %v1836 = vpack.c.bf16 %v1728, %v1727
  %v1837 = vpack.c.bf16 %v1730, %v1729
  %v1838 = vpack.c.bf16 %v1732, %v1731
  %v1839 = vpack.c.bf16 %v1734, %v1733
  %v1840 = vpack.c.bf16 %v1736, %v1735
  %v1841 = vpack.c.bf16 %v1738, %v1737
  %v1842 = vpack.c.bf16 %v1740, %v1739
  %v1843 = vpack.c.bf16 %v1798, %v1796
  %v1844 = vpack.c.bf16 %v1803, %v1801
  %v1845 = vpack.c.bf16 %v1808, %v1806
  %v1846 = vpack.c.bf16 %v1813, %v1811
  %v1847 = vpack.c.bf16 %v1818, %v1816
  %v1848 = vpack.c.bf16 %v1823, %v1821
  %v1849 = vpack.c.bf16 %v1828, %v1826
  %v1850 = vpack.c.bf16 %v1833, %v1831
  %1851 = vmatpush.bf16.msra.mxu0 %v1850
  %1852 = vmatpush.bf16.msra.mxu0 %v1849
  %1853 = vmatpush.bf16.msra.mxu0 %v1848
  %1854 = vmatpush.bf16.msra.mxu0 %v1847
  %1855 = vmatpush.bf16.msra.mxu0 %v1846
  %1856 = vmatpush.bf16.msra.mxu0 %v1845
  %1857 = vmatpush.bf16.msra.mxu0 %v1844
  %1858 = vmatpush.bf16.msra.mxu0 %v1843
  %1859 = vmatmul.bf16.gmra.mxu0 %v1835
  %v1860 = vpop.f32.mrf.mxu0
  %v1861 = vadd.f32 0.0, %v1860
  %v1862 = vpop.f32.mrf.mxu0
  %v1863 = vadd.f32 0.0, %v1862
  %1864 = vmatmul.bf16.gmra.mxu0 %v1836
  %v1865 = vpop.f32.mrf.mxu0
  %v1866 = vadd.f32 0.0, %v1865
  %v1867 = vpop.f32.mrf.mxu0
  %v1868 = vadd.f32 0.0, %v1867
  %1869 = vmatmul.bf16.gmra.mxu0 %v1837
  %v1870 = vpop.f32.mrf.mxu0
  %v1871 = vadd.f32 0.0, %v1870
  %v1872 = vpop.f32.mrf.mxu0
  %v1873 = vadd.f32 0.0, %v1872
  %1874 = vmatmul.bf16.gmra.mxu0 %v1838
  %v1875 = vpop.f32.mrf.mxu0
  %v1876 = vadd.f32 0.0, %v1875
  %v1877 = vpop.f32.mrf.mxu0
  %v1878 = vadd.f32 0.0, %v1877
  %1879 = vmatmul.bf16.gmra.mxu0 %v1839
  %v1880 = vpop.f32.mrf.mxu0
  %v1881 = vadd.f32 0.0, %v1880
  %v1882 = vpop.f32.mrf.mxu0
  %v1883 = vadd.f32 0.0, %v1882
  %1884 = vmatmul.bf16.gmra.mxu0 %v1840
  %v1885 = vpop.f32.mrf.mxu0
  %v1886 = vadd.f32 0.0, %v1885
  %v1887 = vpop.f32.mrf.mxu0
  %v1888 = vadd.f32 0.0, %v1887
  %1889 = vmatmul.bf16.gmra.mxu0 %v1841
  %v1890 = vpop.f32.mrf.mxu0
  %v1891 = vadd.f32 0.0, %v1890
  %v1892 = vpop.f32.mrf.mxu0
  %v1893 = vadd.f32 0.0, %v1892
  %1894 = vmatmul.bf16.gmra.mxu0 %v1842
  %v1895 = vpop.f32.mrf.mxu0
  %v1896 = vadd.f32 0.0, %v1895
  %v1897 = vpop.f32.mrf.mxu0
  %v1898 = vadd.f32 0.0, %v1897
  %1899 = vdwg.mxu0
  %v1900 = vadd.f32 %v1412, %v1861
  %v1901 = vadd.f32 %v1414, %v1863
  %v1902 = vadd.f32 %v1417, %v1866
  %v1903 = vadd.f32 %v1419, %v1868
  %v1904 = vadd.f32 %v1422, %v1871
  %v1905 = vadd.f32 %v1424, %v1873
  %v1906 = vadd.f32 %v1427, %v1876
  %v1907 = vadd.f32 %v1429, %v1878
  %v1908 = vadd.f32 %v1432, %v1881
  %v1909 = vadd.f32 %v1434, %v1883
  %v1910 = vadd.f32 %v1437, %v1886
  %v1911 = vadd.f32 %v1439, %v1888
  %v1912 = vadd.f32 %v1442, %v1891
  %v1913 = vadd.f32 %v1444, %v1893
  %v1914 = vadd.f32 %v1447, %v1896
  %v1915 = vadd.f32 %v1449, %v1898
  %s1916 = scalar_lea.vmem %s1, 384
  %v1917 = vld [vmem:[%s1916] sm:$0xff]
  %v1918 = vld [vmem:[%s1916 + $0x8] sm:$0xff]
  %v1919 = vld [vmem:[%s1916 + $0x10] sm:$0xff]
  %v1920 = vld [vmem:[%s1916 + $0x18] sm:$0xff]
  %v1921 = vld [vmem:[%s1916 + $0x20] sm:$0xff]
  %v1922 = vld [vmem:[%s1916 + $0x28] sm:$0xff]
  %v1923 = vld [vmem:[%s1916 + $0x30] sm:$0xff]
  %v1924 = vld [vmem:[%s1916 + $0x38] sm:$0xff]
  %v1925 = vld [vmem:[%s1916 + $0x40] sm:$0xff]
  %v1926 = vld [vmem:[%s1916 + $0x48] sm:$0xff]
  %v1927 = vld [vmem:[%s1916 + $0x50] sm:$0xff]
  %v1928 = vld [vmem:[%s1916 + $0x58] sm:$0xff]
  %v1929 = vld [vmem:[%s1916 + $0x60] sm:$0xff]
  %v1930 = vld [vmem:[%s1916 + $0x68] sm:$0xff]
  %v1931 = vld [vmem:[%s1916 + $0x70] sm:$0xff]
  %v1932 = vld [vmem:[%s1916 + $0x78] sm:$0xff]
  %1933 = vrot.lane.b32.xlu0 %v577, 104
  %v1934 = vpop.permute.xlu0 %1933
  %1935 = vrot.lane.b32.xlu0 %v578, 104
  %v1936 = vpop.permute.xlu0 %1935
  %1937 = vrot.lane.b32.xlu0 %v579, 104
  %v1938 = vpop.permute.xlu0 %1937
  %1939 = vrot.lane.b32.xlu0 %v580, 104
  %v1940 = vpop.permute.xlu0 %1939
  %1941 = vrot.lane.b32.xlu0 %v581, 104
  %v1942 = vpop.permute.xlu0 %1941
  %1943 = vrot.lane.b32.xlu0 %v582, 104
  %v1944 = vpop.permute.xlu0 %1943
  %1945 = vrot.lane.b32.xlu0 %v583, 104
  %v1946 = vpop.permute.xlu0 %1945
  %1947 = vrot.lane.b32.xlu0 %v584, 104
  %v1948 = vpop.permute.xlu0 %1947
  %1949 = vrot.lane.b32.xlu0 %v577, 72
  %v1950 = vpop.permute.xlu0 %1949
  %1951 = vrot.lane.b32.xlu0 %v578, 72
  %v1952 = vpop.permute.xlu0 %1951
  %1953 = vrot.lane.b32.xlu0 %v579, 72
  %v1954 = vpop.permute.xlu0 %1953
  %1955 = vrot.lane.b32.xlu0 %v580, 72
  %v1956 = vpop.permute.xlu0 %1955
  %1957 = vrot.lane.b32.xlu0 %v581, 72
  %v1958 = vpop.permute.xlu0 %1957
  %1959 = vrot.lane.b32.xlu0 %v582, 72
  %v1960 = vpop.permute.xlu0 %1959
  %1961 = vrot.lane.b32.xlu0 %v583, 72
  %v1962 = vpop.permute.xlu0 %1961
  %1963 = vrot.lane.b32.xlu0 %v584, 72
  %v1964 = vpop.permute.xlu0 %1963
  %v1966 = vsel %vm601, %v1934, 0
  %v1969 = vsel %vm601, %v1936, 0
  %v1972 = vsel %vm601, %v1938, 0
  %v1975 = vsel %vm601, %v1940, 0
  %v1978 = vsel %vm601, %v1942, 0
  %v1981 = vsel %vm601, %v1944, 0
  %v1984 = vsel %vm601, %v1946, 0
  %v1987 = vsel %vm601, %v1948, 0
  %v1990 = vsel %vm601, %v1950, 0
  %v1993 = vsel %vm601, %v1952, 0
  %v1996 = vsel %vm601, %v1954, 0
  %v1999 = vsel %vm601, %v1956, 0
  %v2002 = vsel %vm601, %v1958, 0
  %v2005 = vsel %vm601, %v1960, 0
  %v2008 = vsel %vm601, %v1962, 0
  %v2011 = vsel %vm601, %v1964, 0
  %2013 = vmatpush.bf16.xpose.msra.mxu0 %v2011
  %2014 = vmatpush.bf16.xpose.msra.mxu0 %v2008
  %2015 = vmatpush.bf16.xpose.msra.mxu0 %v2005
  %2016 = vmatpush.bf16.xpose.msra.mxu0 %v2002
  %2017 = vmatpush.bf16.xpose.msra.mxu0 %v1999
  %2018 = vmatpush.bf16.xpose.msra.mxu0 %v1996
  %2019 = vmatpush.bf16.xpose.msra.mxu0 %v1993
  %2020 = vmatpush.bf16.xpose.msra.mxu0 %v1990
  %2021 = vmatmul.bf16.gmra.mxu0 %v1966
  %v2022 = vpop.f32.mrf.mxu0
  %v2023 = vadd.f32 %v1917, %v2022
  %v2024 = vpop.f32.mrf.mxu0
  %v2025 = vadd.f32 %v1918, %v2024
  %2026 = vmatmul.bf16.gmra.mxu0 %v1969
  %v2027 = vpop.f32.mrf.mxu0
  %v2028 = vadd.f32 %v1919, %v2027
  %v2029 = vpop.f32.mrf.mxu0
  %v2030 = vadd.f32 %v1920, %v2029
  %2031 = vmatmul.bf16.gmra.mxu0 %v1972
  %v2032 = vpop.f32.mrf.mxu0
  %v2033 = vadd.f32 %v1921, %v2032
  %v2034 = vpop.f32.mrf.mxu0
  %v2035 = vadd.f32 %v1922, %v2034
  %2036 = vmatmul.bf16.gmra.mxu0 %v1975
  %v2037 = vpop.f32.mrf.mxu0
  %v2038 = vadd.f32 %v1923, %v2037
  %v2039 = vpop.f32.mrf.mxu0
  %v2040 = vadd.f32 %v1924, %v2039
  %2041 = vmatmul.bf16.gmra.mxu0 %v1978
  %v2042 = vpop.f32.mrf.mxu0
  %v2043 = vadd.f32 %v1925, %v2042
  %v2044 = vpop.f32.mrf.mxu0
  %v2045 = vadd.f32 %v1926, %v2044
  %2046 = vmatmul.bf16.gmra.mxu0 %v1981
  %v2047 = vpop.f32.mrf.mxu0
  %v2048 = vadd.f32 %v1927, %v2047
  %v2049 = vpop.f32.mrf.mxu0
  %v2050 = vadd.f32 %v1928, %v2049
  %2051 = vmatmul.bf16.gmra.mxu0 %v1984
  %v2052 = vpop.f32.mrf.mxu0
  %v2053 = vadd.f32 %v1929, %v2052
  %v2054 = vpop.f32.mrf.mxu0
  %v2055 = vadd.f32 %v1930, %v2054
  %2056 = vmatmul.bf16.gmra.mxu0 %v1987
  %v2057 = vpop.f32.mrf.mxu0
  %v2058 = vadd.f32 %v1931, %v2057
  %v2059 = vpop.f32.mrf.mxu0
  %v2060 = vadd.f32 %v1932, %v2059
  %2061 = vdwg.mxu0
  %2062 = vmax.xlane.f32.xlu0 %v2023
  %v2063 = vpop.xlane.xlu0 %2062
  %2064 = vmax.xlane.f32.xlu0 %v2025
  %v2065 = vpop.xlane.xlu0 %2064
  %2066 = vmax.xlane.f32.xlu0 %v2028
  %v2067 = vpop.xlane.xlu0 %2066
  %2068 = vmax.xlane.f32.xlu0 %v2030
  %v2069 = vpop.xlane.xlu0 %2068
  %2070 = vmax.xlane.f32.xlu0 %v2033
  %v2071 = vpop.xlane.xlu0 %2070
  %2072 = vmax.xlane.f32.xlu0 %v2035
  %v2073 = vpop.xlane.xlu0 %2072
  %2074 = vmax.xlane.f32.xlu0 %v2038
  %v2075 = vpop.xlane.xlu0 %2074
  %2076 = vmax.xlane.f32.xlu0 %v2040
  %v2077 = vpop.xlane.xlu0 %2076
  %2078 = vmax.xlane.f32.xlu0 %v2043
  %v2079 = vpop.xlane.xlu0 %2078
  %2080 = vmax.xlane.f32.xlu0 %v2045
  %v2081 = vpop.xlane.xlu0 %2080
  %2082 = vmax.xlane.f32.xlu0 %v2048
  %v2083 = vpop.xlane.xlu0 %2082
  %2084 = vmax.xlane.f32.xlu0 %v2050
  %v2085 = vpop.xlane.xlu0 %2084
  %2086 = vmax.xlane.f32.xlu0 %v2053
  %v2087 = vpop.xlane.xlu0 %2086
  %2088 = vmax.xlane.f32.xlu0 %v2055
  %v2089 = vpop.xlane.xlu0 %2088
  %2090 = vmax.xlane.f32.xlu0 %v2058
  %v2091 = vpop.xlane.xlu0 %2090
  %2092 = vmax.xlane.f32.xlu0 %v2060
  %v2093 = vpop.xlane.xlu0 %2092
  %v2094 = vsub.f32 %v2023, %v2063
  %v2095 = vsub.f32 %v2025, %v2065
  %v2096 = vsub.f32 %v2028, %v2067
  %v2097 = vsub.f32 %v2030, %v2069
  %v2098 = vsub.f32 %v2033, %v2071
  %v2099 = vsub.f32 %v2035, %v2073
  %v2100 = vsub.f32 %v2038, %v2075
  %v2101 = vsub.f32 %v2040, %v2077
  %v2102 = vsub.f32 %v2043, %v2079
  %v2103 = vsub.f32 %v2045, %v2081
  %v2104 = vsub.f32 %v2048, %v2083
  %v2105 = vsub.f32 %v2050, %v2085
  %v2106 = vsub.f32 %v2053, %v2087
  %v2107 = vsub.f32 %v2055, %v2089
  %v2108 = vsub.f32 %v2058, %v2091
  %v2109 = vsub.f32 %v2060, %v2093
  %v2110 = vmul.f32 %v2094, 1.442695
  %v2111 = vpow.pop %v2110
  %v2112 = vmul.f32 %v2095, 1.442695
  %v2113 = vpow.pop %v2112
  %v2114 = vmul.f32 %v2096, 1.442695
  %v2115 = vpow.pop %v2114
  %v2116 = vmul.f32 %v2097, 1.442695
  %v2117 = vpow.pop %v2116
  %v2118 = vmul.f32 %v2098, 1.442695
  %v2119 = vpow.pop %v2118
  %v2120 = vmul.f32 %v2099, 1.442695
  %v2121 = vpow.pop %v2120
  %v2122 = vmul.f32 %v2100, 1.442695
  %v2123 = vpow.pop %v2122
  %v2124 = vmul.f32 %v2101, 1.442695
  %v2125 = vpow.pop %v2124
  %v2126 = vmul.f32 %v2102, 1.442695
  %v2127 = vpow.pop %v2126
  %v2128 = vmul.f32 %v2103, 1.442695
  %v2129 = vpow.pop %v2128
  %v2130 = vmul.f32 %v2104, 1.442695
  %v2131 = vpow.pop %v2130
  %v2132 = vmul.f32 %v2105, 1.442695
  %v2133 = vpow.pop %v2132
  %v2134 = vmul.f32 %v2106, 1.442695
  %v2135 = vpow.pop %v2134
  %v2136 = vmul.f32 %v2107, 1.442695
  %v2137 = vpow.pop %v2136
  %v2138 = vmul.f32 %v2108, 1.442695
  %v2139 = vpow.pop %v2138
  %v2140 = vmul.f32 %v2109, 1.442695
  %v2141 = vpow.pop %v2140
  %2142 = vadd.xlane.f32.xlu0 %v2111
  %v2143 = vpop.xlane.xlu0 %2142
  %2144 = vadd.xlane.f32.xlu0 %v2113
  %v2145 = vpop.xlane.xlu0 %2144
  %2146 = vadd.xlane.f32.xlu0 %v2115
  %v2147 = vpop.xlane.xlu0 %2146
  %2148 = vadd.xlane.f32.xlu0 %v2117
  %v2149 = vpop.xlane.xlu0 %2148
  %2150 = vadd.xlane.f32.xlu0 %v2119
  %v2151 = vpop.xlane.xlu0 %2150
  %2152 = vadd.xlane.f32.xlu0 %v2121
  %v2153 = vpop.xlane.xlu0 %2152
  %2154 = vadd.xlane.f32.xlu0 %v2123
  %v2155 = vpop.xlane.xlu0 %2154
  %2156 = vadd.xlane.f32.xlu0 %v2125
  %v2157 = vpop.xlane.xlu0 %2156
  %2158 = vadd.xlane.f32.xlu0 %v2127
  %v2159 = vpop.xlane.xlu0 %2158
  %2160 = vadd.xlane.f32.xlu0 %v2129
  %v2161 = vpop.xlane.xlu0 %2160
  %2162 = vadd.xlane.f32.xlu0 %v2131
  %v2163 = vpop.xlane.xlu0 %2162
  %2164 = vadd.xlane.f32.xlu0 %v2133
  %v2165 = vpop.xlane.xlu0 %2164
  %2166 = vadd.xlane.f32.xlu0 %v2135
  %v2167 = vpop.xlane.xlu0 %2166
  %2168 = vadd.xlane.f32.xlu0 %v2137
  %v2169 = vpop.xlane.xlu0 %2168
  %2170 = vadd.xlane.f32.xlu0 %v2139
  %v2171 = vpop.xlane.xlu0 %2170
  %2172 = vadd.xlane.f32.xlu0 %v2141
  %v2173 = vpop.xlane.xlu0 %2172
  %v2174 = vrcp.pop %v2143
  %v2175 = vrcp.pop %v2145
  %v2176 = vrcp.pop %v2147
  %v2177 = vrcp.pop %v2149
  %v2178 = vrcp.pop %v2151
  %v2179 = vrcp.pop %v2153
  %v2180 = vrcp.pop %v2155
  %v2181 = vrcp.pop %v2157
  %v2182 = vrcp.pop %v2159
  %v2183 = vrcp.pop %v2161
  %v2184 = vrcp.pop %v2163
  %v2185 = vrcp.pop %v2165
  %v2186 = vrcp.pop %v2167
  %v2187 = vrcp.pop %v2169
  %v2188 = vrcp.pop %v2171
  %v2189 = vrcp.pop %v2173
  %v2190 = vmul.f32 %v2111, %v2174
  %v2191 = vmul.f32 %v2113, %v2175
  %v2192 = vmul.f32 %v2115, %v2176
  %v2193 = vmul.f32 %v2117, %v2177
  %v2194 = vmul.f32 %v2119, %v2178
  %v2195 = vmul.f32 %v2121, %v2179
  %v2196 = vmul.f32 %v2123, %v2180
  %v2197 = vmul.f32 %v2125, %v2181
  %v2198 = vmul.f32 %v2127, %v2182
  %v2199 = vmul.f32 %v2129, %v2183
  %v2200 = vmul.f32 %v2131, %v2184
  %v2201 = vmul.f32 %v2133, %v2185
  %v2202 = vmul.f32 %v2135, %v2186
  %v2203 = vmul.f32 %v2137, %v2187
  %v2204 = vmul.f32 %v2139, %v2188
  %v2205 = vmul.f32 %v2141, %v2189
  %s2206 = scalar_lea.vmem %s4, 12
  %v2207 = vld [vmem:[%s2206] sm:$0xf]
  %2208 = vrot.lane.b32.xlu0 %v577, 40
  %v2209 = vpop.permute.xlu0 %2208
  %2210 = vrot.lane.b32.xlu0 %v578, 40
  %v2211 = vpop.permute.xlu0 %2210
  %2212 = vrot.lane.b32.xlu0 %v579, 40
  %v2213 = vpop.permute.xlu0 %2212
  %2214 = vrot.lane.b32.xlu0 %v580, 40
  %v2215 = vpop.permute.xlu0 %2214
  %2216 = vrot.lane.b32.xlu0 %v581, 40
  %v2217 = vpop.permute.xlu0 %2216
  %2218 = vrot.lane.b32.xlu0 %v582, 40
  %v2219 = vpop.permute.xlu0 %2218
  %2220 = vrot.lane.b32.xlu0 %v583, 40
  %v2221 = vpop.permute.xlu0 %2220
  %2222 = vrot.lane.b32.xlu0 %v584, 40
  %v2223 = vpop.permute.xlu0 %2222
  %v2225 = vsel %vm601, %v2209, 0
  %v2228 = vsel %vm601, %v2211, 0
  %v2231 = vsel %vm601, %v2213, 0
  %v2234 = vsel %vm601, %v2215, 0
  %v2237 = vsel %vm601, %v2217, 0
  %v2240 = vsel %vm601, %v2219, 0
  %v2243 = vsel %vm601, %v2221, 0
  %v2246 = vsel %vm601, %v2223, 0
  %v2249 = vsel %vm884, %v2207, 0
  %2251 = vmatpush.bf16.msra.mxu0 0
  %2252 = vmatpush.bf16.msra.mxu0 0
  %2253 = vmatpush.bf16.msra.mxu0 0
  %2254 = vmatpush.bf16.msra.mxu0 0
  %2255 = vmatpush.bf16.msra.mxu0 0
  %2256 = vmatpush.bf16.msra.mxu0 0
  %2257 = vmatpush.bf16.msra.mxu0 0
  %2258 = vmatpush.bf16.msra.mxu0 %v2249
  %2259 = vmatmul.bf16.gmra.mxu0 %v2225
  %v2260 = vpop.f32.mrf.mxu0
  %v2261 = vadd.f32 0.0, %v2260
  %v2262 = vpop.f32.mrf.mxu0
  %v2263 = vadd.f32 0.0, %v2262
  %2264 = vmatmul.bf16.gmra.mxu0 %v2228
  %v2265 = vpop.f32.mrf.mxu0
  %v2266 = vadd.f32 0.0, %v2265
  %v2267 = vpop.f32.mrf.mxu0
  %v2268 = vadd.f32 0.0, %v2267
  %2269 = vmatmul.bf16.gmra.mxu0 %v2231
  %v2270 = vpop.f32.mrf.mxu0
  %v2271 = vadd.f32 0.0, %v2270
  %v2272 = vpop.f32.mrf.mxu0
  %v2273 = vadd.f32 0.0, %v2272
  %2274 = vmatmul.bf16.gmra.mxu0 %v2234
  %v2275 = vpop.f32.mrf.mxu0
  %v2276 = vadd.f32 0.0, %v2275
  %v2277 = vpop.f32.mrf.mxu0
  %v2278 = vadd.f32 0.0, %v2277
  %2279 = vmatmul.bf16.gmra.mxu0 %v2237
  %v2280 = vpop.f32.mrf.mxu0
  %v2281 = vadd.f32 0.0, %v2280
  %v2282 = vpop.f32.mrf.mxu0
  %v2283 = vadd.f32 0.0, %v2282
  %2284 = vmatmul.bf16.gmra.mxu0 %v2240
  %v2285 = vpop.f32.mrf.mxu0
  %v2286 = vadd.f32 0.0, %v2285
  %v2287 = vpop.f32.mrf.mxu0
  %v2288 = vadd.f32 0.0, %v2287
  %2289 = vmatmul.bf16.gmra.mxu0 %v2243
  %v2290 = vpop.f32.mrf.mxu0
  %v2291 = vadd.f32 0.0, %v2290
  %v2292 = vpop.f32.mrf.mxu0
  %v2293 = vadd.f32 0.0, %v2292
  %2294 = vmatmul.bf16.gmra.mxu0 %v2246
  %v2295 = vpop.f32.mrf.mxu0
  %v2296 = vadd.f32 0.0, %v2295
  %v2297 = vpop.f32.mrf.mxu0
  %v2298 = vadd.f32 0.0, %v2297
  %2299 = vdwg.mxu0
  %v2300 = vpack.c.bf16 %v2191, %v2190
  %v2301 = vpack.c.bf16 %v2193, %v2192
  %v2302 = vpack.c.bf16 %v2195, %v2194
  %v2303 = vpack.c.bf16 %v2197, %v2196
  %v2304 = vpack.c.bf16 %v2199, %v2198
  %v2305 = vpack.c.bf16 %v2201, %v2200
  %v2306 = vpack.c.bf16 %v2203, %v2202
  %v2307 = vpack.c.bf16 %v2205, %v2204
  %v2308 = vpack.c.bf16 %v2263, %v2261
  %v2309 = vpack.c.bf16 %v2268, %v2266
  %v2310 = vpack.c.bf16 %v2273, %v2271
  %v2311 = vpack.c.bf16 %v2278, %v2276
  %v2312 = vpack.c.bf16 %v2283, %v2281
  %v2313 = vpack.c.bf16 %v2288, %v2286
  %v2314 = vpack.c.bf16 %v2293, %v2291
  %v2315 = vpack.c.bf16 %v2298, %v2296
  %2316 = vmatpush.bf16.msra.mxu0 %v2315
  %2317 = vmatpush.bf16.msra.mxu0 %v2314
  %2318 = vmatpush.bf16.msra.mxu0 %v2313
  %2319 = vmatpush.bf16.msra.mxu0 %v2312
  %2320 = vmatpush.bf16.msra.mxu0 %v2311
  %2321 = vmatpush.bf16.msra.mxu0 %v2310
  %2322 = vmatpush.bf16.msra.mxu0 %v2309
  %2323 = vmatpush.bf16.msra.mxu0 %v2308
  %2324 = vmatmul.bf16.gmra.mxu0 %v2300
  %v2325 = vpop.f32.mrf.mxu0
  %v2326 = vadd.f32 0.0, %v2325
  %v2327 = vpop.f32.mrf.mxu0
  %v2328 = vadd.f32 0.0, %v2327
  %2329 = vmatmul.bf16.gmra.mxu0 %v2301
  %v2330 = vpop.f32.mrf.mxu0
  %v2331 = vadd.f32 0.0, %v2330
  %v2332 = vpop.f32.mrf.mxu0
  %v2333 = vadd.f32 0.0, %v2332
  %2334 = vmatmul.bf16.gmra.mxu0 %v2302
  %v2335 = vpop.f32.mrf.mxu0
  %v2336 = vadd.f32 0.0, %v2335
  %v2337 = vpop.f32.mrf.mxu0
  %v2338 = vadd.f32 0.0, %v2337
  %2339 = vmatmul.bf16.gmra.mxu0 %v2303
  %v2340 = vpop.f32.mrf.mxu0
  %v2341 = vadd.f32 0.0, %v2340
  %v2342 = vpop.f32.mrf.mxu0
  %v2343 = vadd.f32 0.0, %v2342
  %2344 = vmatmul.bf16.gmra.mxu0 %v2304
  %v2345 = vpop.f32.mrf.mxu0
  %v2346 = vadd.f32 0.0, %v2345
  %v2347 = vpop.f32.mrf.mxu0
  %v2348 = vadd.f32 0.0, %v2347
  %2349 = vmatmul.bf16.gmra.mxu0 %v2305
  %v2350 = vpop.f32.mrf.mxu0
  %v2351 = vadd.f32 0.0, %v2350
  %v2352 = vpop.f32.mrf.mxu0
  %v2353 = vadd.f32 0.0, %v2352
  %2354 = vmatmul.bf16.gmra.mxu0 %v2306
  %v2355 = vpop.f32.mrf.mxu0
  %v2356 = vadd.f32 0.0, %v2355
  %v2357 = vpop.f32.mrf.mxu0
  %v2358 = vadd.f32 0.0, %v2357
  %2359 = vmatmul.bf16.gmra.mxu0 %v2307
  %v2360 = vpop.f32.mrf.mxu0
  %v2361 = vadd.f32 0.0, %v2360
  %v2362 = vpop.f32.mrf.mxu0
  %v2363 = vadd.f32 0.0, %v2362
  %2364 = vdwg.mxu0
  %v2365 = vadd.f32 %v1900, %v2326
  %v2366 = vadd.f32 %v1901, %v2328
  %v2367 = vadd.f32 %v1902, %v2331
  %v2368 = vadd.f32 %v1903, %v2333
  %v2369 = vadd.f32 %v1904, %v2336
  %v2370 = vadd.f32 %v1905, %v2338
  %v2371 = vadd.f32 %v1906, %v2341
  %v2372 = vadd.f32 %v1907, %v2343
  %v2373 = vadd.f32 %v1908, %v2346
  %v2374 = vadd.f32 %v1909, %v2348
  %v2375 = vadd.f32 %v1910, %v2351
  %v2376 = vadd.f32 %v1911, %v2353
  %v2377 = vadd.f32 %v1912, %v2356
  %v2378 = vadd.f32 %v1913, %v2358
  %v2379 = vadd.f32 %v1914, %v2361
  %v2380 = vadd.f32 %v1915, %v2363
  %v2381 = vadd.f32 %v36, %v2365
  %v2382 = vadd.f32 %v37, %v2366
  %v2383 = vadd.f32 %v38, %v2367
  %v2384 = vadd.f32 %v39, %v2368
  %v2385 = vadd.f32 %v40, %v2369
  %v2386 = vadd.f32 %v41, %v2370
  %v2387 = vadd.f32 %v42, %v2371
  %v2388 = vadd.f32 %v43, %v2372
  %v2389 = vadd.f32 %v44, %v2373
  %v2390 = vadd.f32 %v45, %v2374
  %v2391 = vadd.f32 %v46, %v2375
  %v2392 = vadd.f32 %v47, %v2376
  %v2393 = vadd.f32 %v48, %v2377
  %v2394 = vadd.f32 %v49, %v2378
  %v2395 = vadd.f32 %v50, %v2379
  %v2396 = vadd.f32 %v51, %v2380
  %v2397 = vld [vmem:[%s5] sm:$0x1]
  %v2399 = vperm.slane %v2397, 0
  %v2401 = vadd.f32 %v2381, %v2399
  %v2402 = vadd.f32 %v2382, %v2399
  %v2403 = vadd.f32 %v2383, %v2399
  %v2404 = vadd.f32 %v2384, %v2399
  %v2405 = vadd.f32 %v2385, %v2399
  %v2406 = vadd.f32 %v2386, %v2399
  %v2407 = vadd.f32 %v2387, %v2399
  %v2408 = vadd.f32 %v2388, %v2399
  %v2409 = vadd.f32 %v2389, %v2399
  %v2410 = vadd.f32 %v2390, %v2399
  %v2411 = vadd.f32 %v2391, %v2399
  %v2412 = vadd.f32 %v2392, %v2399
  %v2413 = vadd.f32 %v2393, %v2399
  %v2414 = vadd.f32 %v2394, %v2399
  %v2415 = vadd.f32 %v2395, %v2399
  %v2416 = vadd.f32 %v2396, %v2399
  %v2417 = vsel %vm52, %v2401, 0.0
  %2418 = vadd.xlane.f32.xlu0 %v2417
  %v2419 = vpop.xlane.xlu0 %2418
  %v2420 = vsel %vm52, %v2402, 0.0
  %2421 = vadd.xlane.f32.xlu0 %v2420
  %v2422 = vpop.xlane.xlu0 %2421
  %v2423 = vsel %vm52, %v2403, 0.0
  %2424 = vadd.xlane.f32.xlu0 %v2423
  %v2425 = vpop.xlane.xlu0 %2424
  %v2426 = vsel %vm52, %v2404, 0.0
  %2427 = vadd.xlane.f32.xlu0 %v2426
  %v2428 = vpop.xlane.xlu0 %2427
  %v2429 = vsel %vm52, %v2405, 0.0
  %2430 = vadd.xlane.f32.xlu0 %v2429
  %v2431 = vpop.xlane.xlu0 %2430
  %v2432 = vsel %vm52, %v2406, 0.0
  %2433 = vadd.xlane.f32.xlu0 %v2432
  %v2434 = vpop.xlane.xlu0 %2433
  %v2435 = vsel %vm52, %v2407, 0.0
  %2436 = vadd.xlane.f32.xlu0 %v2435
  %v2437 = vpop.xlane.xlu0 %2436
  %v2438 = vsel %vm52, %v2408, 0.0
  %2439 = vadd.xlane.f32.xlu0 %v2438
  %v2440 = vpop.xlane.xlu0 %2439
  %v2441 = vsel %vm52, %v2409, 0.0
  %2442 = vadd.xlane.f32.xlu0 %v2441
  %v2443 = vpop.xlane.xlu0 %2442
  %v2444 = vsel %vm52, %v2410, 0.0
  %2445 = vadd.xlane.f32.xlu0 %v2444
  %v2446 = vpop.xlane.xlu0 %2445
  %v2447 = vsel %vm52, %v2411, 0.0
  %2448 = vadd.xlane.f32.xlu0 %v2447
  %v2449 = vpop.xlane.xlu0 %2448
  %v2450 = vsel %vm52, %v2412, 0.0
  %2451 = vadd.xlane.f32.xlu0 %v2450
  %v2452 = vpop.xlane.xlu0 %2451
  %v2453 = vsel %vm52, %v2413, 0.0
  %2454 = vadd.xlane.f32.xlu0 %v2453
  %v2455 = vpop.xlane.xlu0 %2454
  %v2456 = vsel %vm52, %v2414, 0.0
  %2457 = vadd.xlane.f32.xlu0 %v2456
  %v2458 = vpop.xlane.xlu0 %2457
  %v2459 = vsel %vm52, %v2415, 0.0
  %2460 = vadd.xlane.f32.xlu0 %v2459
  %v2461 = vpop.xlane.xlu0 %2460
  %v2462 = vsel %vm52, %v2416, 0.0
  %2463 = vadd.xlane.f32.xlu0 %v2462
  %v2464 = vpop.xlane.xlu0 %2463
  %v2465 = vmul.f32 %v2419, %v107
  %v2466 = vmul.f32 %v2422, %v107
  %v2467 = vmul.f32 %v2425, %v107
  %v2468 = vmul.f32 %v2428, %v107
  %v2469 = vmul.f32 %v2431, %v107
  %v2470 = vmul.f32 %v2434, %v107
  %v2471 = vmul.f32 %v2437, %v107
  %v2472 = vmul.f32 %v2440, %v107
  %v2473 = vmul.f32 %v2443, %v107
  %v2474 = vmul.f32 %v2446, %v107
  %v2475 = vmul.f32 %v2449, %v107
  %v2476 = vmul.f32 %v2452, %v107
  %v2477 = vmul.f32 %v2455, %v107
  %v2478 = vmul.f32 %v2458, %v107
  %v2479 = vmul.f32 %v2461, %v107
  %v2480 = vmul.f32 %v2464, %v107
  %v2481 = vsub.f32 %v2401, %v2465
  %v2482 = vsub.f32 %v2402, %v2466
  %v2483 = vsub.f32 %v2403, %v2467
  %v2484 = vsub.f32 %v2404, %v2468
  %v2485 = vsub.f32 %v2405, %v2469
  %v2486 = vsub.f32 %v2406, %v2470
  %v2487 = vsub.f32 %v2407, %v2471
  %v2488 = vsub.f32 %v2408, %v2472
  %v2489 = vsub.f32 %v2409, %v2473
  %v2490 = vsub.f32 %v2410, %v2474
  %v2491 = vsub.f32 %v2411, %v2475
  %v2492 = vsub.f32 %v2412, %v2476
  %v2493 = vsub.f32 %v2413, %v2477
  %v2494 = vsub.f32 %v2414, %v2478
  %v2495 = vsub.f32 %v2415, %v2479
  %v2496 = vsub.f32 %v2416, %v2480
  %v2497 = vmul.f32 %v2481, %v2481
  %v2498 = vmul.f32 %v2482, %v2482
  %v2499 = vmul.f32 %v2483, %v2483
  %v2500 = vmul.f32 %v2484, %v2484
  %v2501 = vmul.f32 %v2485, %v2485
  %v2502 = vmul.f32 %v2486, %v2486
  %v2503 = vmul.f32 %v2487, %v2487
  %v2504 = vmul.f32 %v2488, %v2488
  %v2505 = vmul.f32 %v2489, %v2489
  %v2506 = vmul.f32 %v2490, %v2490
  %v2507 = vmul.f32 %v2491, %v2491
  %v2508 = vmul.f32 %v2492, %v2492
  %v2509 = vmul.f32 %v2493, %v2493
  %v2510 = vmul.f32 %v2494, %v2494
  %v2511 = vmul.f32 %v2495, %v2495
  %v2512 = vmul.f32 %v2496, %v2496
  %v2513 = vsel %vm52, %v2497, 0.0
  %2514 = vadd.xlane.f32.xlu0 %v2513
  %v2515 = vpop.xlane.xlu0 %2514
  %v2516 = vsel %vm52, %v2498, 0.0
  %2517 = vadd.xlane.f32.xlu0 %v2516
  %v2518 = vpop.xlane.xlu0 %2517
  %v2519 = vsel %vm52, %v2499, 0.0
  %2520 = vadd.xlane.f32.xlu0 %v2519
  %v2521 = vpop.xlane.xlu0 %2520
  %v2522 = vsel %vm52, %v2500, 0.0
  %2523 = vadd.xlane.f32.xlu0 %v2522
  %v2524 = vpop.xlane.xlu0 %2523
  %v2525 = vsel %vm52, %v2501, 0.0
  %2526 = vadd.xlane.f32.xlu0 %v2525
  %v2527 = vpop.xlane.xlu0 %2526
  %v2528 = vsel %vm52, %v2502, 0.0
  %2529 = vadd.xlane.f32.xlu0 %v2528
  %v2530 = vpop.xlane.xlu0 %2529
  %v2531 = vsel %vm52, %v2503, 0.0
  %2532 = vadd.xlane.f32.xlu0 %v2531
  %v2533 = vpop.xlane.xlu0 %2532
  %v2534 = vsel %vm52, %v2504, 0.0
  %2535 = vadd.xlane.f32.xlu0 %v2534
  %v2536 = vpop.xlane.xlu0 %2535
  %v2537 = vsel %vm52, %v2505, 0.0
  %2538 = vadd.xlane.f32.xlu0 %v2537
  %v2539 = vpop.xlane.xlu0 %2538
  %v2540 = vsel %vm52, %v2506, 0.0
  %2541 = vadd.xlane.f32.xlu0 %v2540
  %v2542 = vpop.xlane.xlu0 %2541
  %v2543 = vsel %vm52, %v2507, 0.0
  %2544 = vadd.xlane.f32.xlu0 %v2543
  %v2545 = vpop.xlane.xlu0 %2544
  %v2546 = vsel %vm52, %v2508, 0.0
  %2547 = vadd.xlane.f32.xlu0 %v2546
  %v2548 = vpop.xlane.xlu0 %2547
  %v2549 = vsel %vm52, %v2509, 0.0
  %2550 = vadd.xlane.f32.xlu0 %v2549
  %v2551 = vpop.xlane.xlu0 %2550
  %v2552 = vsel %vm52, %v2510, 0.0
  %2553 = vadd.xlane.f32.xlu0 %v2552
  %v2554 = vpop.xlane.xlu0 %2553
  %v2555 = vsel %vm52, %v2511, 0.0
  %2556 = vadd.xlane.f32.xlu0 %v2555
  %v2557 = vpop.xlane.xlu0 %2556
  %v2558 = vsel %vm52, %v2512, 0.0
  %2559 = vadd.xlane.f32.xlu0 %v2558
  %v2560 = vpop.xlane.xlu0 %2559
  %v2561 = vmul.f32 %v2515, %v107
  %v2562 = vmul.f32 %v2518, %v107
  %v2563 = vmul.f32 %v2521, %v107
  %v2564 = vmul.f32 %v2524, %v107
  %v2565 = vmul.f32 %v2527, %v107
  %v2566 = vmul.f32 %v2530, %v107
  %v2567 = vmul.f32 %v2533, %v107
  %v2568 = vmul.f32 %v2536, %v107
  %v2569 = vmul.f32 %v2539, %v107
  %v2570 = vmul.f32 %v2542, %v107
  %v2571 = vmul.f32 %v2545, %v107
  %v2572 = vmul.f32 %v2548, %v107
  %v2573 = vmul.f32 %v2551, %v107
  %v2574 = vmul.f32 %v2554, %v107
  %v2575 = vmul.f32 %v2557, %v107
  %v2576 = vmul.f32 %v2560, %v107
  %v2577 = vadd.f32 %v2561, 1e-05
  %v2578 = vadd.f32 %v2562, 1e-05
  %v2579 = vadd.f32 %v2563, 1e-05
  %v2580 = vadd.f32 %v2564, 1e-05
  %v2581 = vadd.f32 %v2565, 1e-05
  %v2582 = vadd.f32 %v2566, 1e-05
  %v2583 = vadd.f32 %v2567, 1e-05
  %v2584 = vadd.f32 %v2568, 1e-05
  %v2585 = vadd.f32 %v2569, 1e-05
  %v2586 = vadd.f32 %v2570, 1e-05
  %v2587 = vadd.f32 %v2571, 1e-05
  %v2588 = vadd.f32 %v2572, 1e-05
  %v2589 = vadd.f32 %v2573, 1e-05
  %v2590 = vadd.f32 %v2574, 1e-05
  %v2591 = vadd.f32 %v2575, 1e-05
  %v2592 = vadd.f32 %v2576, 1e-05
  %v2593 = vrsqrt.pop %v2577
  %v2594 = vmul.f32 %v2593, %v2577
  %v2595 = vmul.f32 %v2594, %v2593
  %v2596 = vmul.f32 0.5, %v2595
  %v2597 = vsub.f32 1.5, %v2596
  %v2598 = vmul.f32 %v2593, %v2597
  %vm2599 = vweird.f32 %v2577
  %vm2600 = vweird.f32 %v2593
  %vm2601 = vmor %vm2599, %vm2600
  %v2602 = vsel %vm2601, %v2593, %v2598
  %v2603 = vrsqrt.pop %v2578
  %v2604 = vmul.f32 %v2603, %v2578
  %v2605 = vmul.f32 %v2604, %v2603
  %v2606 = vmul.f32 0.5, %v2605
  %v2607 = vsub.f32 1.5, %v2606
  %v2608 = vmul.f32 %v2603, %v2607
  %vm2609 = vweird.f32 %v2578
  %vm2610 = vweird.f32 %v2603
  %vm2611 = vmor %vm2609, %vm2610
  %v2612 = vsel %vm2611, %v2603, %v2608
  %v2613 = vrsqrt.pop %v2579
  %v2614 = vmul.f32 %v2613, %v2579
  %v2615 = vmul.f32 %v2614, %v2613
  %v2616 = vmul.f32 0.5, %v2615
  %v2617 = vsub.f32 1.5, %v2616
  %v2618 = vmul.f32 %v2613, %v2617
  %vm2619 = vweird.f32 %v2579
  %vm2620 = vweird.f32 %v2613
  %vm2621 = vmor %vm2619, %vm2620
  %v2622 = vsel %vm2621, %v2613, %v2618
  %v2623 = vrsqrt.pop %v2580
  %v2624 = vmul.f32 %v2623, %v2580
  %v2625 = vmul.f32 %v2624, %v2623
  %v2626 = vmul.f32 0.5, %v2625
  %v2627 = vsub.f32 1.5, %v2626
  %v2628 = vmul.f32 %v2623, %v2627
  %vm2629 = vweird.f32 %v2580
  %vm2630 = vweird.f32 %v2623
  %vm2631 = vmor %vm2629, %vm2630
  %v2632 = vsel %vm2631, %v2623, %v2628
  %v2633 = vrsqrt.pop %v2581
  %v2634 = vmul.f32 %v2633, %v2581
  %v2635 = vmul.f32 %v2634, %v2633
  %v2636 = vmul.f32 0.5, %v2635
  %v2637 = vsub.f32 1.5, %v2636
  %v2638 = vmul.f32 %v2633, %v2637
  %vm2639 = vweird.f32 %v2581
  %vm2640 = vweird.f32 %v2633
  %vm2641 = vmor %vm2639, %vm2640
  %v2642 = vsel %vm2641, %v2633, %v2638
  %v2643 = vrsqrt.pop %v2582
  %v2644 = vmul.f32 %v2643, %v2582
  %v2645 = vmul.f32 %v2644, %v2643
  %v2646 = vmul.f32 0.5, %v2645
  %v2647 = vsub.f32 1.5, %v2646
  %v2648 = vmul.f32 %v2643, %v2647
  %vm2649 = vweird.f32 %v2582
  %vm2650 = vweird.f32 %v2643
  %vm2651 = vmor %vm2649, %vm2650
  %v2652 = vsel %vm2651, %v2643, %v2648
  %v2653 = vrsqrt.pop %v2583
  %v2654 = vmul.f32 %v2653, %v2583
  %v2655 = vmul.f32 %v2654, %v2653
  %v2656 = vmul.f32 0.5, %v2655
  %v2657 = vsub.f32 1.5, %v2656
  %v2658 = vmul.f32 %v2653, %v2657
  %vm2659 = vweird.f32 %v2583
  %vm2660 = vweird.f32 %v2653
  %vm2661 = vmor %vm2659, %vm2660
  %v2662 = vsel %vm2661, %v2653, %v2658
  %v2663 = vrsqrt.pop %v2584
  %v2664 = vmul.f32 %v2663, %v2584
  %v2665 = vmul.f32 %v2664, %v2663
  %v2666 = vmul.f32 0.5, %v2665
  %v2667 = vsub.f32 1.5, %v2666
  %v2668 = vmul.f32 %v2663, %v2667
  %vm2669 = vweird.f32 %v2584
  %vm2670 = vweird.f32 %v2663
  %vm2671 = vmor %vm2669, %vm2670
  %v2672 = vsel %vm2671, %v2663, %v2668
  %v2673 = vrsqrt.pop %v2585
  %v2674 = vmul.f32 %v2673, %v2585
  %v2675 = vmul.f32 %v2674, %v2673
  %v2676 = vmul.f32 0.5, %v2675
  %v2677 = vsub.f32 1.5, %v2676
  %v2678 = vmul.f32 %v2673, %v2677
  %vm2679 = vweird.f32 %v2585
  %vm2680 = vweird.f32 %v2673
  %vm2681 = vmor %vm2679, %vm2680
  %v2682 = vsel %vm2681, %v2673, %v2678
  %v2683 = vrsqrt.pop %v2586
  %v2684 = vmul.f32 %v2683, %v2586
  %v2685 = vmul.f32 %v2684, %v2683
  %v2686 = vmul.f32 0.5, %v2685
  %v2687 = vsub.f32 1.5, %v2686
  %v2688 = vmul.f32 %v2683, %v2687
  %vm2689 = vweird.f32 %v2586
  %vm2690 = vweird.f32 %v2683
  %vm2691 = vmor %vm2689, %vm2690
  %v2692 = vsel %vm2691, %v2683, %v2688
  %v2693 = vrsqrt.pop %v2587
  %v2694 = vmul.f32 %v2693, %v2587
  %v2695 = vmul.f32 %v2694, %v2693
  %v2696 = vmul.f32 0.5, %v2695
  %v2697 = vsub.f32 1.5, %v2696
  %v2698 = vmul.f32 %v2693, %v2697
  %vm2699 = vweird.f32 %v2587
  %vm2700 = vweird.f32 %v2693
  %vm2701 = vmor %vm2699, %vm2700
  %v2702 = vsel %vm2701, %v2693, %v2698
  %v2703 = vrsqrt.pop %v2588
  %v2704 = vmul.f32 %v2703, %v2588
  %v2705 = vmul.f32 %v2704, %v2703
  %v2706 = vmul.f32 0.5, %v2705
  %v2707 = vsub.f32 1.5, %v2706
  %v2708 = vmul.f32 %v2703, %v2707
  %vm2709 = vweird.f32 %v2588
  %vm2710 = vweird.f32 %v2703
  %vm2711 = vmor %vm2709, %vm2710
  %v2712 = vsel %vm2711, %v2703, %v2708
  %v2713 = vrsqrt.pop %v2589
  %v2714 = vmul.f32 %v2713, %v2589
  %v2715 = vmul.f32 %v2714, %v2713
  %v2716 = vmul.f32 0.5, %v2715
  %v2717 = vsub.f32 1.5, %v2716
  %v2718 = vmul.f32 %v2713, %v2717
  %vm2719 = vweird.f32 %v2589
  %vm2720 = vweird.f32 %v2713
  %vm2721 = vmor %vm2719, %vm2720
  %v2722 = vsel %vm2721, %v2713, %v2718
  %v2723 = vrsqrt.pop %v2590
  %v2724 = vmul.f32 %v2723, %v2590
  %v2725 = vmul.f32 %v2724, %v2723
  %v2726 = vmul.f32 0.5, %v2725
  %v2727 = vsub.f32 1.5, %v2726
  %v2728 = vmul.f32 %v2723, %v2727
  %vm2729 = vweird.f32 %v2590
  %vm2730 = vweird.f32 %v2723
  %vm2731 = vmor %vm2729, %vm2730
  %v2732 = vsel %vm2731, %v2723, %v2728
  %v2733 = vrsqrt.pop %v2591
  %v2734 = vmul.f32 %v2733, %v2591
  %v2735 = vmul.f32 %v2734, %v2733
  %v2736 = vmul.f32 0.5, %v2735
  %v2737 = vsub.f32 1.5, %v2736
  %v2738 = vmul.f32 %v2733, %v2737
  %vm2739 = vweird.f32 %v2591
  %vm2740 = vweird.f32 %v2733
  %vm2741 = vmor %vm2739, %vm2740
  %v2742 = vsel %vm2741, %v2733, %v2738
  %v2743 = vrsqrt.pop %v2592
  %v2744 = vmul.f32 %v2743, %v2592
  %v2745 = vmul.f32 %v2744, %v2743
  %v2746 = vmul.f32 0.5, %v2745
  %v2747 = vsub.f32 1.5, %v2746
  %v2748 = vmul.f32 %v2743, %v2747
  %vm2749 = vweird.f32 %v2592
  %vm2750 = vweird.f32 %v2743
  %vm2751 = vmor %vm2749, %vm2750
  %v2752 = vsel %vm2751, %v2743, %v2748
  %v2753 = vmul.f32 %v2481, %v2602
  %v2754 = vmul.f32 %v2482, %v2612
  %v2755 = vmul.f32 %v2483, %v2622
  %v2756 = vmul.f32 %v2484, %v2632
  %v2757 = vmul.f32 %v2485, %v2642
  %v2758 = vmul.f32 %v2486, %v2652
  %v2759 = vmul.f32 %v2487, %v2662
  %v2760 = vmul.f32 %v2488, %v2672
  %v2761 = vmul.f32 %v2489, %v2682
  %v2762 = vmul.f32 %v2490, %v2692
  %v2763 = vmul.f32 %v2491, %v2702
  %v2764 = vmul.f32 %v2492, %v2712
  %v2765 = vmul.f32 %v2493, %v2722
  %v2766 = vmul.f32 %v2494, %v2732
  %v2767 = vmul.f32 %v2495, %v2742
  %v2768 = vmul.f32 %v2496, %v2752
  %v2769 = vpack.c.bf16 %v2754, %v2753
  %v2770 = vpack.c.bf16 %v2756, %v2755
  %v2771 = vpack.c.bf16 %v2758, %v2757
  %v2772 = vpack.c.bf16 %v2760, %v2759
  %v2773 = vpack.c.bf16 %v2762, %v2761
  %v2774 = vpack.c.bf16 %v2764, %v2763
  %v2775 = vpack.c.bf16 %v2766, %v2765
  %v2776 = vpack.c.bf16 %v2768, %v2767
  %v2777 = vld [vmem:[%s6] sm:$0xf]
  %v2778 = vld [vmem:[%s6 + $0x4] sm:$0xf]
  %v2779 = vld [vmem:[%s6 + $0x8] sm:$0xf]
  %v2780 = vld [vmem:[%s6 + $0xc] sm:$0xf]
  %v2781 = vld [vmem:[%s7] sm:$0x1]
  %v2783 = vperm.slane %v2781, 0
  %v2789 = vunpack.c.l.b16 %v2777
  %v2790 = vunpack.c.l.b16 %v2778
  %v2791 = vunpack.c.l.b16 %v2779
  %v2792 = vunpack.c.l.b16 %v2780
  %v2793 = vpack.c.b16 %v2790, %v2789
  %v2794 = vpack.c.b16 %v2792, %v2791
  %v2798 = vsel %vm52, %v2769, 0
  %v2801 = vsel %vm52, %v2770, 0
  %v2804 = vsel %vm52, %v2771, 0
  %v2807 = vsel %vm52, %v2772, 0
  %v2810 = vsel %vm52, %v2773, 0
  %v2813 = vsel %vm52, %v2774, 0
  %v2816 = vsel %vm52, %v2775, 0
  %v2819 = vsel %vm52, %v2776, 0
  %2821 = vmatpush.bf16.msra.mxu0 0
  %2822 = vmatpush.bf16.msra.mxu0 0
  %2823 = vmatpush.bf16.msra.mxu0 0
  %2824 = vmatpush.bf16.msra.mxu0 0
  %2825 = vmatpush.bf16.msra.mxu0 0
  %2826 = vmatpush.bf16.msra.mxu0 0
  %2827 = vmatpush.bf16.msra.mxu0 %v2794
  %2828 = vmatpush.bf16.msra.mxu0 %v2793
  %2829 = vmatmul.bf16.gmra.mxu0 %v2798
  %v2830 = vpop.f32.mrf.mxu0
  %v2831 = vadd.f32 %v2783, %v2830
  %v2832 = vpop.f32.mrf.mxu0
  %v2833 = vadd.f32 %v2783, %v2832
  %2834 = vmatmul.bf16.gmra.mxu0 %v2801
  %v2835 = vpop.f32.mrf.mxu0
  %v2836 = vadd.f32 %v2783, %v2835
  %v2837 = vpop.f32.mrf.mxu0
  %v2838 = vadd.f32 %v2783, %v2837
  %2839 = vmatmul.bf16.gmra.mxu0 %v2804
  %v2840 = vpop.f32.mrf.mxu0
  %v2841 = vadd.f32 %v2783, %v2840
  %v2842 = vpop.f32.mrf.mxu0
  %v2843 = vadd.f32 %v2783, %v2842
  %2844 = vmatmul.bf16.gmra.mxu0 %v2807
  %v2845 = vpop.f32.mrf.mxu0
  %v2846 = vadd.f32 %v2783, %v2845
  %v2847 = vpop.f32.mrf.mxu0
  %v2848 = vadd.f32 %v2783, %v2847
  %2849 = vmatmul.bf16.gmra.mxu0 %v2810
  %v2850 = vpop.f32.mrf.mxu0
  %v2851 = vadd.f32 %v2783, %v2850
  %v2852 = vpop.f32.mrf.mxu0
  %v2853 = vadd.f32 %v2783, %v2852
  %2854 = vmatmul.bf16.gmra.mxu0 %v2813
  %v2855 = vpop.f32.mrf.mxu0
  %v2856 = vadd.f32 %v2783, %v2855
  %v2857 = vpop.f32.mrf.mxu0
  %v2858 = vadd.f32 %v2783, %v2857
  %2859 = vmatmul.bf16.gmra.mxu0 %v2816
  %v2860 = vpop.f32.mrf.mxu0
  %v2861 = vadd.f32 %v2783, %v2860
  %v2862 = vpop.f32.mrf.mxu0
  %v2863 = vadd.f32 %v2783, %v2862
  %2864 = vmatmul.bf16.gmra.mxu0 %v2819
  %v2865 = vpop.f32.mrf.mxu0
  %v2866 = vadd.f32 %v2783, %v2865
  %v2867 = vpop.f32.mrf.mxu0
  %v2868 = vadd.f32 %v2783, %v2867
  %2869 = vdwg.mxu0
  %v2870 = vmul.f32 %v2831, %v2831
  %v2871 = vmul.f32 %v2833, %v2833
  %v2872 = vmul.f32 %v2836, %v2836
  %v2873 = vmul.f32 %v2838, %v2838
  %v2874 = vmul.f32 %v2841, %v2841
  %v2875 = vmul.f32 %v2843, %v2843
  %v2876 = vmul.f32 %v2846, %v2846
  %v2877 = vmul.f32 %v2848, %v2848
  %v2878 = vmul.f32 %v2851, %v2851
  %v2879 = vmul.f32 %v2853, %v2853
  %v2880 = vmul.f32 %v2856, %v2856
  %v2881 = vmul.f32 %v2858, %v2858
  %v2882 = vmul.f32 %v2861, %v2861
  %v2883 = vmul.f32 %v2863, %v2863
  %v2884 = vmul.f32 %v2866, %v2866
  %v2885 = vmul.f32 %v2868, %v2868
  %v2886 = vmul.f32 %v2831, %v2870
  %v2887 = vmul.f32 %v2833, %v2871
  %v2888 = vmul.f32 %v2836, %v2872
  %v2889 = vmul.f32 %v2838, %v2873
  %v2890 = vmul.f32 %v2841, %v2874
  %v2891 = vmul.f32 %v2843, %v2875
  %v2892 = vmul.f32 %v2846, %v2876
  %v2893 = vmul.f32 %v2848, %v2877
  %v2894 = vmul.f32 %v2851, %v2878
  %v2895 = vmul.f32 %v2853, %v2879
  %v2896 = vmul.f32 %v2856, %v2880
  %v2897 = vmul.f32 %v2858, %v2881
  %v2898 = vmul.f32 %v2861, %v2882
  %v2899 = vmul.f32 %v2863, %v2883
  %v2900 = vmul.f32 %v2866, %v2884
  %v2901 = vmul.f32 %v2868, %v2885
  %v2902 = vmul.f32 %v2886, 0.044715
  %v2903 = vmul.f32 %v2887, 0.044715
  %v2904 = vmul.f32 %v2888, 0.044715
  %v2905 = vmul.f32 %v2889, 0.044715
  %v2906 = vmul.f32 %v2890, 0.044715
  %v2907 = vmul.f32 %v2891, 0.044715
  %v2908 = vmul.f32 %v2892, 0.044715
  %v2909 = vmul.f32 %v2893, 0.044715
  %v2910 = vmul.f32 %v2894, 0.044715
  %v2911 = vmul.f32 %v2895, 0.044715
  %v2912 = vmul.f32 %v2896, 0.044715
  %v2913 = vmul.f32 %v2897, 0.044715
  %v2914 = vmul.f32 %v2898, 0.044715
  %v2915 = vmul.f32 %v2899, 0.044715
  %v2916 = vmul.f32 %v2900, 0.044715
  %v2917 = vmul.f32 %v2901, 0.044715
  %v2918 = vadd.f32 %v2831, %v2902
  %v2919 = vadd.f32 %v2833, %v2903
  %v2920 = vadd.f32 %v2836, %v2904
  %v2921 = vadd.f32 %v2838, %v2905
  %v2922 = vadd.f32 %v2841, %v2906
  %v2923 = vadd.f32 %v2843, %v2907
  %v2924 = vadd.f32 %v2846, %v2908
  %v2925 = vadd.f32 %v2848, %v2909
  %v2926 = vadd.f32 %v2851, %v2910
  %v2927 = vadd.f32 %v2853, %v2911
  %v2928 = vadd.f32 %v2856, %v2912
  %v2929 = vadd.f32 %v2858, %v2913
  %v2930 = vadd.f32 %v2861, %v2914
  %v2931 = vadd.f32 %v2863, %v2915
  %v2932 = vadd.f32 %v2866, %v2916
  %v2933 = vadd.f32 %v2868, %v2917
  %v2934 = vmul.f32 %v2918, 0.7978846
  %v2935 = vmul.f32 %v2919, 0.7978846
  %v2936 = vmul.f32 %v2920, 0.7978846
  %v2937 = vmul.f32 %v2921, 0.7978846
  %v2938 = vmul.f32 %v2922, 0.7978846
  %v2939 = vmul.f32 %v2923, 0.7978846
  %v2940 = vmul.f32 %v2924, 0.7978846
  %v2941 = vmul.f32 %v2925, 0.7978846
  %v2942 = vmul.f32 %v2926, 0.7978846
  %v2943 = vmul.f32 %v2927, 0.7978846
  %v2944 = vmul.f32 %v2928, 0.7978846
  %v2945 = vmul.f32 %v2929, 0.7978846
  %v2946 = vmul.f32 %v2930, 0.7978846
  %v2947 = vmul.f32 %v2931, 0.7978846
  %v2948 = vmul.f32 %v2932, 0.7978846
  %v2949 = vmul.f32 %v2933, 0.7978846
  %v2950 = vtanh.pop %v2934
  %v2951 = vtanh.pop %v2935
  %v2952 = vtanh.pop %v2936
  %v2953 = vtanh.pop %v2937
  %v2954 = vtanh.pop %v2938
  %v2955 = vtanh.pop %v2939
  %v2956 = vtanh.pop %v2940
  %v2957 = vtanh.pop %v2941
  %v2958 = vtanh.pop %v2942
  %v2959 = vtanh.pop %v2943
  %v2960 = vtanh.pop %v2944
  %v2961 = vtanh.pop %v2945
  %v2962 = vtanh.pop %v2946
  %v2963 = vtanh.pop %v2947
  %v2964 = vtanh.pop %v2948
  %v2965 = vtanh.pop %v2949
  %v2966 = vadd.f32 %v2950, 1.0
  %v2967 = vadd.f32 %v2951, 1.0
  %v2968 = vadd.f32 %v2952, 1.0
  %v2969 = vadd.f32 %v2953, 1.0
  %v2970 = vadd.f32 %v2954, 1.0
  %v2971 = vadd.f32 %v2955, 1.0
  %v2972 = vadd.f32 %v2956, 1.0
  %v2973 = vadd.f32 %v2957, 1.0
  %v2974 = vadd.f32 %v2958, 1.0
  %v2975 = vadd.f32 %v2959, 1.0
  %v2976 = vadd.f32 %v2960, 1.0
  %v2977 = vadd.f32 %v2961, 1.0
  %v2978 = vadd.f32 %v2962, 1.0
  %v2979 = vadd.f32 %v2963, 1.0
  %v2980 = vadd.f32 %v2964, 1.0
  %v2981 = vadd.f32 %v2965, 1.0
  %v2982 = vmul.f32 %v2966, 0.5
  %v2983 = vmul.f32 %v2967, 0.5
  %v2984 = vmul.f32 %v2968, 0.5
  %v2985 = vmul.f32 %v2969, 0.5
  %v2986 = vmul.f32 %v2970, 0.5
  %v2987 = vmul.f32 %v2971, 0.5
  %v2988 = vmul.f32 %v2972, 0.5
  %v2989 = vmul.f32 %v2973, 0.5
  %v2990 = vmul.f32 %v2974, 0.5
  %v2991 = vmul.f32 %v2975, 0.5
  %v2992 = vmul.f32 %v2976, 0.5
  %v2993 = vmul.f32 %v2977, 0.5
  %v2994 = vmul.f32 %v2978, 0.5
  %v2995 = vmul.f32 %v2979, 0.5
  %v2996 = vmul.f32 %v2980, 0.5
  %v2997 = vmul.f32 %v2981, 0.5
  %v2998 = vmul.f32 %v2831, %v2982
  %v2999 = vmul.f32 %v2833, %v2983
  %v3000 = vmul.f32 %v2836, %v2984
  %v3001 = vmul.f32 %v2838, %v2985
  %v3002 = vmul.f32 %v2841, %v2986
  %v3003 = vmul.f32 %v2843, %v2987
  %v3004 = vmul.f32 %v2846, %v2988
  %v3005 = vmul.f32 %v2848, %v2989
  %v3006 = vmul.f32 %v2851, %v2990
  %v3007 = vmul.f32 %v2853, %v2991
  %v3008 = vmul.f32 %v2856, %v2992
  %v3009 = vmul.f32 %v2858, %v2993
  %v3010 = vmul.f32 %v2861, %v2994
  %v3011 = vmul.f32 %v2863, %v2995
  %v3012 = vmul.f32 %v2866, %v2996
  %v3013 = vmul.f32 %v2868, %v2997
  %v3014 = vpack.c.bf16 %v2999, %v2998
  %v3015 = vpack.c.bf16 %v3001, %v3000
  %v3016 = vpack.c.bf16 %v3003, %v3002
  %v3017 = vpack.c.bf16 %v3005, %v3004
  %v3018 = vpack.c.bf16 %v3007, %v3006
  %v3019 = vpack.c.bf16 %v3009, %v3008
  %v3020 = vpack.c.bf16 %v3011, %v3010
  %v3021 = vpack.c.bf16 %v3013, %v3012
  %v3022 = vld [vmem:[%s8] sm:$0xf]
  %v3023 = vld [vmem:[%s8 + $0x4] sm:$0xf]
  %v3024 = vld [vmem:[%s8 + $0x8] sm:$0xf]
  %v3025 = vld [vmem:[%s8 + $0xc] sm:$0xf]
  %v3026 = vld [vmem:[%s8 + $0x10] sm:$0xf]
  %v3027 = vld [vmem:[%s8 + $0x14] sm:$0xf]
  %v3028 = vld [vmem:[%s8 + $0x18] sm:$0xf]
  %v3029 = vld [vmem:[%s8 + $0x1c] sm:$0xf]
  %v3030 = vld [vmem:[%s8 + $0x20] sm:$0xf]
  %v3031 = vld [vmem:[%s8 + $0x24] sm:$0xf]
  %v3032 = vld [vmem:[%s8 + $0x28] sm:$0xf]
  %v3033 = vld [vmem:[%s8 + $0x2c] sm:$0xf]
  %v3034 = vld [vmem:[%s8 + $0x30] sm:$0xf]
  %v3035 = vld [vmem:[%s8 + $0x34] sm:$0xf]
  %v3036 = vld [vmem:[%s8 + $0x38] sm:$0xf]
  %v3037 = vld [vmem:[%s8 + $0x3c] sm:$0xf]
  %v3038 = vld [vmem:[%s9] sm:$0x1]
  %v3040 = vperm.slane %v3038, 0
  %v3058 = vunpack.c.l.b16 %v3022
  %v3059 = vunpack.c.l.b16 %v3023
  %v3060 = vunpack.c.l.b16 %v3024
  %v3061 = vunpack.c.l.b16 %v3025
  %v3062 = vunpack.c.l.b16 %v3026
  %v3063 = vunpack.c.l.b16 %v3027
  %v3064 = vunpack.c.l.b16 %v3028
  %v3065 = vunpack.c.l.b16 %v3029
  %v3066 = vunpack.c.l.b16 %v3030
  %v3067 = vunpack.c.l.b16 %v3031
  %v3068 = vunpack.c.l.b16 %v3032
  %v3069 = vunpack.c.l.b16 %v3033
  %v3070 = vunpack.c.l.b16 %v3034
  %v3071 = vunpack.c.l.b16 %v3035
  %v3072 = vunpack.c.l.b16 %v3036
  %v3073 = vunpack.c.l.b16 %v3037
  %v3074 = vpack.c.b16 %v3059, %v3058
  %v3075 = vpack.c.b16 %v3061, %v3060
  %v3076 = vpack.c.b16 %v3063, %v3062
  %v3077 = vpack.c.b16 %v3065, %v3064
  %v3078 = vpack.c.b16 %v3067, %v3066
  %v3079 = vpack.c.b16 %v3069, %v3068
  %v3080 = vpack.c.b16 %v3071, %v3070
  %v3081 = vpack.c.b16 %v3073, %v3072
  %3090 = vmatpush.bf16.msra.mxu0 %v3081
  %3091 = vmatpush.bf16.msra.mxu0 %v3080
  %3092 = vmatpush.bf16.msra.mxu0 %v3079
  %3093 = vmatpush.bf16.msra.mxu0 %v3078
  %3094 = vmatpush.bf16.msra.mxu0 %v3077
  %3095 = vmatpush.bf16.msra.mxu0 %v3076
  %3096 = vmatpush.bf16.msra.mxu0 %v3075
  %3097 = vmatpush.bf16.msra.mxu0 %v3074
  %3098 = vmatmul.bf16.gmra.mxu0 %v3014
  %v3099 = vpop.f32.mrf.mxu0
  %v3100 = vadd.f32 %v3040, %v3099
  %v3101 = vpop.f32.mrf.mxu0
  %v3102 = vadd.f32 %v3040, %v3101
  %3103 = vmatmul.bf16.gmra.mxu0 %v3015
  %v3104 = vpop.f32.mrf.mxu0
  %v3105 = vadd.f32 %v3040, %v3104
  %v3106 = vpop.f32.mrf.mxu0
  %v3107 = vadd.f32 %v3040, %v3106
  %3108 = vmatmul.bf16.gmra.mxu0 %v3016
  %v3109 = vpop.f32.mrf.mxu0
  %v3110 = vadd.f32 %v3040, %v3109
  %v3111 = vpop.f32.mrf.mxu0
  %v3112 = vadd.f32 %v3040, %v3111
  %3113 = vmatmul.bf16.gmra.mxu0 %v3017
  %v3114 = vpop.f32.mrf.mxu0
  %v3115 = vadd.f32 %v3040, %v3114
  %v3116 = vpop.f32.mrf.mxu0
  %v3117 = vadd.f32 %v3040, %v3116
  %3118 = vmatmul.bf16.gmra.mxu0 %v3018
  %v3119 = vpop.f32.mrf.mxu0
  %v3120 = vadd.f32 %v3040, %v3119
  %v3121 = vpop.f32.mrf.mxu0
  %v3122 = vadd.f32 %v3040, %v3121
  %3123 = vmatmul.bf16.gmra.mxu0 %v3019
  %v3124 = vpop.f32.mrf.mxu0
  %v3125 = vadd.f32 %v3040, %v3124
  %v3126 = vpop.f32.mrf.mxu0
  %v3127 = vadd.f32 %v3040, %v3126
  %3128 = vmatmul.bf16.gmra.mxu0 %v3020
  %v3129 = vpop.f32.mrf.mxu0
  %v3130 = vadd.f32 %v3040, %v3129
  %v3131 = vpop.f32.mrf.mxu0
  %v3132 = vadd.f32 %v3040, %v3131
  %3133 = vmatmul.bf16.gmra.mxu0 %v3021
  %v3134 = vpop.f32.mrf.mxu0
  %v3135 = vadd.f32 %v3040, %v3134
  %v3136 = vpop.f32.mrf.mxu0
  %v3137 = vadd.f32 %v3040, %v3136
  %3138 = vdwg.mxu0
  %v3139 = vadd.f32 %v2401, %v3100
  %v3140 = vadd.f32 %v2402, %v3102
  %v3141 = vadd.f32 %v2403, %v3105
  %v3142 = vadd.f32 %v2404, %v3107
  %v3143 = vadd.f32 %v2405, %v3110
  %v3144 = vadd.f32 %v2406, %v3112
  %v3145 = vadd.f32 %v2407, %v3115
  %v3146 = vadd.f32 %v2408, %v3117
  %v3147 = vadd.f32 %v2409, %v3120
  %v3148 = vadd.f32 %v2410, %v3122
  %v3149 = vadd.f32 %v2411, %v3125
  %v3150 = vadd.f32 %v2412, %v3127
  %v3151 = vadd.f32 %v2413, %v3130
  %v3152 = vadd.f32 %v2414, %v3132
  %v3153 = vadd.f32 %v2415, %v3135
  %v3154 = vadd.f32 %v2416, %v3137
  %3155 = vst.msk [vmem:[%s10] sm:$0xff] %vm52, %v3139
  %3156 = vst.msk [vmem:[%s10 + $0x8] sm:$0xff] %vm52, %v3140
  %3157 = vst.msk [vmem:[%s10 + $0x10] sm:$0xff] %vm52, %v3141
  %3158 = vst.msk [vmem:[%s10 + $0x18] sm:$0xff] %vm52, %v3142
  %3159 = vst.msk [vmem:[%s10 + $0x20] sm:$0xff] %vm52, %v3143
  %3160 = vst.msk [vmem:[%s10 + $0x28] sm:$0xff] %vm52, %v3144
  %3161 = vst.msk [vmem:[%s10 + $0x30] sm:$0xff] %vm52, %v3145
  %3162 = vst.msk [vmem:[%s10 + $0x38] sm:$0xff] %vm52, %v3146
  %3163 = vst.msk [vmem:[%s10 + $0x40] sm:$0xff] %vm52, %v3147
  %3164 = vst.msk [vmem:[%s10 + $0x48] sm:$0xff] %vm52, %v3148
  %3165 = vst.msk [vmem:[%s10 + $0x50] sm:$0xff] %vm52, %v3149
  %3166 = vst.msk [vmem:[%s10 + $0x58] sm:$0xff] %vm52, %v3150
  %3167 = vst.msk [vmem:[%s10 + $0x60] sm:$0xff] %vm52, %v3151
  %3168 = vst.msk [vmem:[%s10 + $0x68] sm:$0xff] %vm52, %v3152
  %3169 = vst.msk [vmem:[%s10 + $0x70] sm:$0xff] %vm52, %v3153
  %3170 = vst.msk [vmem:[%s10 + $0x78] sm:$0xff] %vm52, %v3154
  // Predicated region
  $region42: #{swin_block_forward.1} parent=0 // pred_check
    _
  $region43: #{swin_block_forward.1} parent=0 // pred_check_branch
    %3172 = sbr.rel (0) target = $region45
  $region44: #{swin_block_forward.1} parent=0 // pred_region
    _
  $region45: #{swin_block_forward.1} parent=0 // pred_fallthru
    _
  // Predicated region
  $region46: #{swin_block_forward.1} parent=0 // pred_check
    _
  $region47: #{swin_block_forward.1} parent=0 // pred_check_branch
    %3174 = sbr.rel (0) target = $region49
  $region48: #{swin_block_forward.1} parent=0 // pred_region
    _
  $region49: #{swin_block_forward.1} parent=0 // pred_fallthru
    _

</llo_original>
